<compile_context>
chip_gen: v6e
topology: v6e:2x2x1
jax: 0.10.0
libtpu: 0.0.40
codegen_flags: <defaults>
</compile_context>

<pallas_src>
import numpy as np
import jax
import jax.numpy as jnp
from jax.experimental import pallas as pl
from jax.experimental.pallas import tpu as pltpu

EPS = 1e-5  # nn.InstanceNorm3d default eps


def _round_up(x, m):
    return (x + m - 1) // m * m


# ----------------------------- Pallas kernel ---------------------------------
def _make_fused_kernel(Cin, Cout, D, H, W, Mpad, K1, K1p, K2, K2p):
    S = D * H * W
    HW = H * W
    L = S + 2 * Mpad
    # Flat offsets of the 27 taps, (kd, kh, kw) lexicographic -- must match both
    # the mask-row order and _weight_to_matmul's column order.
    taps = [(kd - 1) * HW + (kh - 1) * W + (kw - 1)
            for kd in range(3) for kh in range(3) for kw in range(3)]

    def kernel(mask_ref, x_ref, w1_ref, w2_ref, o_ref, p_ref, xs_ref, hs_ref):
        # ---- stage-in: raw volume -> zero-margined bf16 staging buffer ----------
        xs_ref[:, 0:Mpad] = jnp.zeros((Cin, Mpad), jnp.bfloat16)
        xs_ref[:, Mpad + S:L] = jnp.zeros((Cin, Mpad), jnp.bfloat16)
        xs_ref[:, Mpad:Mpad + S] = x_ref[...].astype(jnp.bfloat16)
        hs_ref[:, 0:Mpad] = jnp.zeros((Cout, Mpad), jnp.bfloat16)
        hs_ref[:, Mpad + S:L] = jnp.zeros((Cout, Mpad), jnp.bfloat16)

        def build_patches(src_ref, cin):
            # One bf16 multiply per tap against a precomputed {0,1} boundary-mask
            # row (out-of-volume neighbours read the zero margins * 0).
            for t, off in enumerate(taps):
                shifted = src_ref[:, Mpad + off: Mpad + off + S]       # (cin, S) bf16
                p_ref[t * cin:(t + 1) * cin, :] = shifted * mask_ref[t:t + 1, :]

        def in_relu(y):
            # InstanceNorm3d (affine=False, biased variance) + ReLU, single sweep.
            # (Conv bias omitted: exactly cancelled by the mean subtraction.)
            inv_s = jnp.float32(1.0 / S)
            s1 = jnp.sum(y, axis=1, keepdims=True)
            s2 = jnp.sum(y * y, axis=1, keepdims=True)
            mean = s1 * inv_s
            var = jnp.maximum(s2 * inv_s - mean * mean, 0.0)
            return jnp.maximum((y - mean) * jax.lax.rsqrt(var + EPS), 0.0)

        # ---- stage 1: conv1 (bf16 MXU, f32 acc) + IN + ReLU (stays in VMEM) -----
        if K1p > K1:  # zero-pad rows so the zero weight columns see exact zeros
            p_ref[K1:K1p, :] = jnp.zeros((K1p - K1, S), jnp.bfloat16)
        build_patches(xs_ref, Cin)
        y1 = jnp.dot(w1_ref[...], p_ref[0:K1p, :],
                     preferred_element_type=jnp.float32)                # (Cout, S)
        y1 = in_relu(y1)
        hs_ref[:, Mpad:Mpad + S] = y1.astype(jnp.bfloat16)

        # ---- stage 2: conv2 (bf16 MXU, f32 acc) + IN + ReLU ----------------------
        if K2p > K2:
            p_ref[K2:K2p, :] = jnp.zeros((K2p - K2, S), jnp.bfloat16)
        build_patches(hs_ref, Cout)
        y2 = jnp.dot(w2_ref[...], p_ref[0:K2p, :],
                     preferred_element_type=jnp.float32)                # (Cout, S)
        o_ref[...] = in_relu(y2).astype(o_ref.dtype)

    return kernel


# ------------------------------ JAX glue --------------------------------------
def _weight_to_matmul(w, k_pad):
    """PyTorch Conv3d weight (Cout, Cin, 3, 3, 3) -> bf16 (Cout, k_pad);
    column index = ((kd*3+kh)*3+kw)*Cin + ci (matches the in-kernel patch rows)."""
    cout, cin = w.shape[0], w.shape[1]
    m = jnp.transpose(w, (0, 2, 3, 4, 1)).reshape(cout, 27 * cin)
    m = jnp.pad(m, ((0, 0), (0, k_pad - 27 * cin)))
    return m.astype(jnp.bfloat16)


def _boundary_masks(D, H, W):
    """(27, S) {0,1} float masks, tap order (kd, kh, kw) lexicographic."""
    S = D * H * W
    s = np.arange(S)
    d, h, w = s // (H * W), (s // W) % H, s % W
    rows = []
    for kd in range(3):
        for kh in range(3):
            for kw in range(3):
                m = np.ones(S, dtype=bool)
                if kd == 0: m &= d >= 1
                if kd == 2: m &= d <= D - 2
                if kh == 0: m &= h >= 1
                if kh == 2: m &= h <= H - 2
                if kw == 0: m &= w >= 1
                if kw == 2: m &= w <= W - 2
                rows.append(m)
    return np.stack(rows).astype(np.float32)


@jax.jit
def double_conv_block(x_ncdhw, w1, b1, w2, b2):
    """Pallas DoubleConvBlock.forward (NCDHW in, NCDHW out).

    b1/b2 accepted for interface parity but unused: with InstanceNorm3d
    (affine=False) the per-channel conv bias is exactly cancelled by centering.
    """
    del b1, b2
    N, Cin, D, H, W = x_ncdhw.shape
    Cout = w1.shape[0]
    S = D * H * W
    HW = H * W
    Mpad = _round_up(HW + W + 1, 128)      # margin >= max |tap offset|, lane aligned
    L = S + 2 * Mpad
    K1, K2 = 27 * Cin, 27 * Cout
    K1p, K2p = _round_up(K1, 16), _round_up(K2, 16)   # bf16 sublane packing
    Kmax = max(K1p, K2p)

    x_flat = x_ncdhw.reshape(N, Cin, S)               # no HBM-side pad copy
    w1_mat = _weight_to_matmul(w1, K1p)               # (Cout, K1p) bf16
    w2_mat = _weight_to_matmul(w2, K2p)               # (Cout, K2p) bf16
    mask = jnp.asarray(_boundary_masks(D, H, W), dtype=jnp.bfloat16)   # (27, S)

    kernel = _make_fused_kernel(Cin, Cout, D, H, W, Mpad, K1, K1p, K2, K2p)

    # VMEM budget: double-buffered blocks + persistent scratch + headroom,
    # capped just below the chip's physical VMEM (64 MiB v7x / 128 MiB v5e, v6e).
    block_bytes = (2 * 27 * S + 4 * Cin * S + 2 * Cout * (K1p + K2p) + 4 * Cout * S)
    scratch_bytes = 2 * (Kmax * S + Cin * L + Cout * L)
    needed = 2 * block_bytes + scratch_bytes + (8 << 20)
    try:
        phys = int(pltpu.get_tpu_info().vmem_capacity_bytes)
    except Exception:
        phys = 64 << 20
    vmem_limit = int(min(max(needed, 32 << 20), phys - (8 << 20)))

    out = pl.pallas_call(
        kernel,
        out_shape=jax.ShapeDtypeStruct((N, Cout, S), jnp.float32),
        grid=(N,),
        in_specs=[
            pl.BlockSpec((27, S), lambda n: (0, 0)),             # boundary masks (const)
            pl.BlockSpec((None, Cin, S), lambda n: (n, 0, 0)),   # one sample's raw volume
            pl.BlockSpec((Cout, K1p), lambda n: (0, 0)),         # conv1 weights (const)
            pl.BlockSpec((Cout, K2p), lambda n: (0, 0)),         # conv2 weights (const)
        ],
        out_specs=pl.BlockSpec((None, Cout, S), lambda n: (n, 0, 0)),
        scratch_shapes=[
            pltpu.VMEM((Kmax, S), jnp.bfloat16),   # shared patch matrix (both stages)
            pltpu.VMEM((Cin, L), jnp.bfloat16),    # margined input staging
            pltpu.VMEM((Cout, L), jnp.bfloat16),   # margined stage-1 activation
        ],
        compiler_params=pltpu.CompilerParams(
            dimension_semantics=("parallel",),
            vmem_limit_bytes=vmem_limit),
    )(mask, x_flat, w1_mat, w2_mat)

    # (N, Cout, S) is already channels-major: reshape straight to NCDHW.
    return out.reshape(N, Cout, D, H, W)


# --------------------------- pure-JAX reference --------------------------------
def _ref_stage(x_ncdhw, w, b):
    y = jax.lax.conv_general_dilated(
        x_ncdhw, w, window_strides=(1, 1, 1),
        padding=((1, 1), (1, 1), (1, 1)),
        dimension_numbers=("NCDHW", "OIDHW", "NCDHW"))
    y = y + b[None, :, None, None, None]
    mean = jnp.mean(y, axis=(2, 3, 4), keepdims=True)
    var = jnp.var(y, axis=(2, 3, 4), keepdims=True)   # biased, like InstanceNorm3d
    y = (y - mean) / jnp.sqrt(var + EPS)
    return jnp.maximum(y, 0.0)


def ref_double_conv(x, w1, b1, w2, b2):
    return _ref_stage(_ref_stage(x, w1, b1), w2, b2)


# ----------------------------------- main --------------------------------------
if __name__ == "__main__":
    key = jax.random.PRNGKey(0)
    N, Cin, Cout, D, H, W = 2, 4, 8, 8, 8, 8
    k_x, k_w1, k_b1, k_w2, k_b2 = jax.random.split(key, 5)

    x = jax.random.normal(k_x, (N, Cin, D, H, W), jnp.float32)

    def init_conv(kw_key, kb_key, cin, cout):
        # Deterministic synthetic init mirroring PyTorch Conv3d default shapes/ranges.
        fan_in = cin * 3 * 3 * 3
        bound = 1.0 / (fan_in ** 0.5)
        w = jax.random.uniform(kw_key, (cout, cin, 3, 3, 3), jnp.float32, -bound, bound)
        b = jax.random.uniform(kb_key, (cout,), jnp.float32, -bound, bound)
        return w, b

    w1, b1 = init_conv(k_w1, k_b1, Cin, Cout)
    w2, b2 = init_conv(k_w2, k_b2, Cout, Cout)

    out = double_conv_block(x, w1, b1, w2, b2)
    out = jax.block_until_ready(out)
    assert out.shape == (N, Cout, D, H, W)

    ref = jax.block_until_ready(ref_double_conv(x, w1, b1, w2, b2))
    err = jnp.abs(out - ref)
    max_err = float(jnp.max(err))
    mean_err = float(jnp.mean(err))
    # bf16 MXU datapath: tolerance relaxed from the old 1e-3 (f32) check.
    assert max_err < 1e-1, f"max abs err {max_err}"
    assert mean_err < 2e-2, f"mean abs err {mean_err}"

    print("KERNEL_OK")
</pallas_src>

<mosaic_0001>
module attributes {stable_mosaic.version = 11 : i64} {
  func.func @kernel(%arg0: i32, %arg1: memref<27x512xbf16, #tpu.memory_space<vmem>>, %arg2: memref<1x4x512xf32, #tpu.memory_space<vmem>>, %arg3: memref<8x112xbf16, #tpu.memory_space<vmem>>, %arg4: memref<8x224xbf16, #tpu.memory_space<vmem>>, %arg5: memref<1x8x512xf32, #tpu.memory_space<vmem>>, %arg6: memref<224x512xbf16, #tpu.memory_space<vmem>>, %arg7: memref<4x768xbf16, #tpu.memory_space<vmem>>, %arg8: memref<8x768xbf16, #tpu.memory_space<vmem>>) attributes {dimension_semantics = [#tpu.dimension_semantics<parallel>], iteration_bounds = array<i64: 2>, scalar_prefetch = 0 : i64, scratch_operands = 3 : i64, tpu.core_type = #tpu.core_type<tc>, window_params = [{pipeline_mode = #tpu.pipeline_mode<synchronous>, transform_indices = @transform_0, window_bounds = array<i64: 27, 512>}, {transform_indices = @transform_1, window_bounds = array<i64: 1, 4, 512>}, {pipeline_mode = #tpu.pipeline_mode<synchronous>, transform_indices = @transform_2, window_bounds = array<i64: 8, 112>}, {pipeline_mode = #tpu.pipeline_mode<synchronous>, transform_indices = @transform_3, window_bounds = array<i64: 8, 224>}, {transform_indices = @transform_4, window_bounds = array<i64: 1, 8, 512>}]} {
    %cst = arith.constant 0.000000e+00 : bf16
    %0 = vector.broadcast %cst : bf16 to vector<4x128xbf16>
    %c0 = arith.constant 0 : index
    %c0_0 = arith.constant 0 : index
    %1 = vector.load %arg7[%c0, %c0_0] : memref<4x768xbf16, #tpu.memory_space<vmem>>, vector<4x128xbf16>
    tpu.vector_store %arg7[%c0, %c0_0], %0 {strides = array<i32>} : memref<4x768xbf16, #tpu.memory_space<vmem>>, vector<4x128xbf16>,
    %cst_1 = arith.constant 0.000000e+00 : bf16
    %2 = vector.broadcast %cst_1 : bf16 to vector<4x128xbf16>
    %c0_2 = arith.constant 0 : index
    %c640 = arith.constant 640 : index
    %3 = vector.load %arg7[%c0_2, %c640] : memref<4x768xbf16, #tpu.memory_space<vmem>>, vector<4x128xbf16>
    tpu.vector_store %arg7[%c0_2, %c640], %2 {strides = array<i32>} : memref<4x768xbf16, #tpu.memory_space<vmem>>, vector<4x128xbf16>,
    %c0_3 = arith.constant 0 : index
    %c0_4 = arith.constant 0 : index
    %c0_5 = arith.constant 0 : index
    %4 = vector.load %arg2[%c0_3, %c0_4, %c0_5] : memref<1x4x512xf32, #tpu.memory_space<vmem>>, vector<1x4x512xf32>
    %5 = vector.shape_cast %4 : vector<1x4x512xf32> to vector<4x512xf32>
    %6 = arith.truncf %5 : vector<4x512xf32> to vector<4x512xbf16>
    %c0_6 = arith.constant 0 : index
    %c128 = arith.constant 128 : index
    %7 = vector.load %arg7[%c0_6, %c128] : memref<4x768xbf16, #tpu.memory_space<vmem>>, vector<4x512xbf16>
    tpu.vector_store %arg7[%c0_6, %c128], %6 {strides = array<i32>} : memref<4x768xbf16, #tpu.memory_space<vmem>>, vector<4x512xbf16>,
    %cst_7 = arith.constant 0.000000e+00 : bf16
    %8 = vector.broadcast %cst_7 : bf16 to vector<8x128xbf16>
    %c0_8 = arith.constant 0 : index
    %c0_9 = arith.constant 0 : index
    %9 = vector.load %arg8[%c0_8, %c0_9] : memref<8x768xbf16, #tpu.memory_space<vmem>>, vector<8x128xbf16>
    tpu.vector_store %arg8[%c0_8, %c0_9], %8 {strides = array<i32>} : memref<8x768xbf16, #tpu.memory_space<vmem>>, vector<8x128xbf16>,
    %cst_10 = arith.constant 0.000000e+00 : bf16
    %10 = vector.broadcast %cst_10 : bf16 to vector<8x128xbf16>
    %c0_11 = arith.constant 0 : index
    %c640_12 = arith.constant 640 : index
    %11 = vector.load %arg8[%c0_11, %c640_12] : memref<8x768xbf16, #tpu.memory_space<vmem>>, vector<8x128xbf16>
    tpu.vector_store %arg8[%c0_11, %c640_12], %10 {strides = array<i32>} : memref<8x768xbf16, #tpu.memory_space<vmem>>, vector<8x128xbf16>,
    %cst_13 = arith.constant 0.000000e+00 : bf16
    %12 = vector.broadcast %cst_13 : bf16 to vector<4x512xbf16>
    %c108 = arith.constant 108 : index
    %c0_14 = arith.constant 0 : index
    %13 = vector.load %arg6[%c108, %c0_14] : memref<224x512xbf16, #tpu.memory_space<vmem>>, vector<4x512xbf16>
    tpu.vector_store %arg6[%c108, %c0_14], %12 {strides = array<i32>} : memref<224x512xbf16, #tpu.memory_space<vmem>>, vector<4x512xbf16>,
    %c0_15 = arith.constant 0 : index
    %c55 = arith.constant 55 : index
    %14 = vector.load %arg7[%c0_15, %c55] : memref<4x768xbf16, #tpu.memory_space<vmem>>, vector<4x512xbf16>
    %c0_16 = arith.constant 0 : index
    %c0_17 = arith.constant 0 : index
    %15 = vector.load %arg1[%c0_16, %c0_17] : memref<27x512xbf16, #tpu.memory_space<vmem>>, vector<1x512xbf16>
    %16 = vector.broadcast %15 : vector<1x512xbf16> to vector<4x512xbf16>
    %17 = arith.mulf %14, %16 : vector<4x512xbf16>
    %c0_18 = arith.constant 0 : index
    %c0_19 = arith.constant 0 : index
    %18 = vector.load %arg6[%c0_18, %c0_19] : memref<224x512xbf16, #tpu.memory_space<vmem>>, vector<4x512xbf16>
    tpu.vector_store %arg6[%c0_18, %c0_19], %17 {strides = array<i32>} : memref<224x512xbf16, #tpu.memory_space<vmem>>, vector<4x512xbf16>,
    %c0_20 = arith.constant 0 : index
    %c56 = arith.constant 56 : index
    %19 = vector.load %arg7[%c0_20, %c56] : memref<4x768xbf16, #tpu.memory_space<vmem>>, vector<4x512xbf16>
    %c1 = arith.constant 1 : index
    %c0_21 = arith.constant 0 : index
    %20 = vector.load %arg1[%c1, %c0_21] : memref<27x512xbf16, #tpu.memory_space<vmem>>, vector<1x512xbf16>
    %21 = vector.broadcast %20 : vector<1x512xbf16> to vector<4x512xbf16>
    %22 = arith.mulf %19, %21 : vector<4x512xbf16>
    %c4 = arith.constant 4 : index
    %c0_22 = arith.constant 0 : index
    %23 = vector.load %arg6[%c4, %c0_22] : memref<224x512xbf16, #tpu.memory_space<vmem>>, vector<4x512xbf16>
    tpu.vector_store %arg6[%c4, %c0_22], %22 {strides = array<i32>} : memref<224x512xbf16, #tpu.memory_space<vmem>>, vector<4x512xbf16>,
    %c0_23 = arith.constant 0 : index
    %c57 = arith.constant 57 : index
    %24 = vector.load %arg7[%c0_23, %c57] : memref<4x768xbf16, #tpu.memory_space<vmem>>, vector<4x512xbf16>
    %c2 = arith.constant 2 : index
    %c0_24 = arith.constant 0 : index
    %25 = vector.load %arg1[%c2, %c0_24] : memref<27x512xbf16, #tpu.memory_space<vmem>>, vector<1x512xbf16>
    %26 = vector.broadcast %25 : vector<1x512xbf16> to vector<4x512xbf16>
    %27 = arith.mulf %24, %26 : vector<4x512xbf16>
    %c8 = arith.constant 8 : index
    %c0_25 = arith.constant 0 : index
    %28 = vector.load %arg6[%c8, %c0_25] : memref<224x512xbf16, #tpu.memory_space<vmem>>, vector<4x512xbf16>
    tpu.vector_store %arg6[%c8, %c0_25], %27 {strides = array<i32>} : memref<224x512xbf16, #tpu.memory_space<vmem>>, vector<4x512xbf16>,
    %c0_26 = arith.constant 0 : index
    %c63 = arith.constant 63 : index
    %29 = vector.load %arg7[%c0_26, %c63] : memref<4x768xbf16, #tpu.memory_space<vmem>>, vector<4x512xbf16>
    %c3 = arith.constant 3 : index
    %c0_27 = arith.constant 0 : index
    %30 = vector.load %arg1[%c3, %c0_27] : memref<27x512xbf16, #tpu.memory_space<vmem>>, vector<1x512xbf16>
    %31 = vector.broadcast %30 : vector<1x512xbf16> to vector<4x512xbf16>
    %32 = arith.mulf %29, %31 : vector<4x512xbf16>
    %c12 = arith.constant 12 : index
    %c0_28 = arith.constant 0 : index
    %33 = vector.load %arg6[%c12, %c0_28] : memref<224x512xbf16, #tpu.memory_space<vmem>>, vector<4x512xbf16>
    tpu.vector_store %arg6[%c12, %c0_28], %32 {strides = array<i32>} : memref<224x512xbf16, #tpu.memory_space<vmem>>, vector<4x512xbf16>,
    %c0_29 = arith.constant 0 : index
    %c64 = arith.constant 64 : index
    %34 = vector.load %arg7[%c0_29, %c64] : memref<4x768xbf16, #tpu.memory_space<vmem>>, vector<4x512xbf16>
    %c4_30 = arith.constant 4 : index
    %c0_31 = arith.constant 0 : index
    %35 = vector.load %arg1[%c4_30, %c0_31] : memref<27x512xbf16, #tpu.memory_space<vmem>>, vector<1x512xbf16>
    %36 = vector.broadcast %35 : vector<1x512xbf16> to vector<4x512xbf16>
    %37 = arith.mulf %34, %36 : vector<4x512xbf16>
    %c16 = arith.constant 16 : index
    %c0_32 = arith.constant 0 : index
    %38 = vector.load %arg6[%c16, %c0_32] : memref<224x512xbf16, #tpu.memory_space<vmem>>, vector<4x512xbf16>
    tpu.vector_store %arg6[%c16, %c0_32], %37 {strides = array<i32>} : memref<224x512xbf16, #tpu.memory_space<vmem>>, vector<4x512xbf16>,
    %c0_33 = arith.constant 0 : index
    %c65 = arith.constant 65 : index
    %39 = vector.load %arg7[%c0_33, %c65] : memref<4x768xbf16, #tpu.memory_space<vmem>>, vector<4x512xbf16>
    %c5 = arith.constant 5 : index
    %c0_34 = arith.constant 0 : index
    %40 = vector.load %arg1[%c5, %c0_34] : memref<27x512xbf16, #tpu.memory_space<vmem>>, vector<1x512xbf16>
    %41 = vector.broadcast %40 : vector<1x512xbf16> to vector<4x512xbf16>
    %42 = arith.mulf %39, %41 : vector<4x512xbf16>
    %c20 = arith.constant 20 : index
    %c0_35 = arith.constant 0 : index
    %43 = vector.load %arg6[%c20, %c0_35] : memref<224x512xbf16, #tpu.memory_space<vmem>>, vector<4x512xbf16>
    tpu.vector_store %arg6[%c20, %c0_35], %42 {strides = array<i32>} : memref<224x512xbf16, #tpu.memory_space<vmem>>, vector<4x512xbf16>,
    %c0_36 = arith.constant 0 : index
    %c71 = arith.constant 71 : index
    %44 = vector.load %arg7[%c0_36, %c71] : memref<4x768xbf16, #tpu.memory_space<vmem>>, vector<4x512xbf16>
    %c6 = arith.constant 6 : index
    %c0_37 = arith.constant 0 : index
    %45 = vector.load %arg1[%c6, %c0_37] : memref<27x512xbf16, #tpu.memory_space<vmem>>, vector<1x512xbf16>
    %46 = vector.broadcast %45 : vector<1x512xbf16> to vector<4x512xbf16>
    %47 = arith.mulf %44, %46 : vector<4x512xbf16>
    %c24 = arith.constant 24 : index
    %c0_38 = arith.constant 0 : index
    %48 = vector.load %arg6[%c24, %c0_38] : memref<224x512xbf16, #tpu.memory_space<vmem>>, vector<4x512xbf16>
    tpu.vector_store %arg6[%c24, %c0_38], %47 {strides = array<i32>} : memref<224x512xbf16, #tpu.memory_space<vmem>>, vector<4x512xbf16>,
    %c0_39 = arith.constant 0 : index
    %c72 = arith.constant 72 : index
    %49 = vector.load %arg7[%c0_39, %c72] : memref<4x768xbf16, #tpu.memory_space<vmem>>, vector<4x512xbf16>
    %c7 = arith.constant 7 : index
    %c0_40 = arith.constant 0 : index
    %50 = vector.load %arg1[%c7, %c0_40] : memref<27x512xbf16, #tpu.memory_space<vmem>>, vector<1x512xbf16>
    %51 = vector.broadcast %50 : vector<1x512xbf16> to vector<4x512xbf16>
    %52 = arith.mulf %49, %51 : vector<4x512xbf16>
    %c28 = arith.constant 28 : index
    %c0_41 = arith.constant 0 : index
    %53 = vector.load %arg6[%c28, %c0_41] : memref<224x512xbf16, #tpu.memory_space<vmem>>, vector<4x512xbf16>
    tpu.vector_store %arg6[%c28, %c0_41], %52 {strides = array<i32>} : memref<224x512xbf16, #tpu.memory_space<vmem>>, vector<4x512xbf16>,
    %c0_42 = arith.constant 0 : index
    %c73 = arith.constant 73 : index
    %54 = vector.load %arg7[%c0_42, %c73] : memref<4x768xbf16, #tpu.memory_space<vmem>>, vector<4x512xbf16>
    %c8_43 = arith.constant 8 : index
    %c0_44 = arith.constant 0 : index
    %55 = vector.load %arg1[%c8_43, %c0_44] : memref<27x512xbf16, #tpu.memory_space<vmem>>, vector<1x512xbf16>
    %56 = vector.broadcast %55 : vector<1x512xbf16> to vector<4x512xbf16>
    %57 = arith.mulf %54, %56 : vector<4x512xbf16>
    %c32 = arith.constant 32 : index
    %c0_45 = arith.constant 0 : index
    %58 = vector.load %arg6[%c32, %c0_45] : memref<224x512xbf16, #tpu.memory_space<vmem>>, vector<4x512xbf16>
    tpu.vector_store %arg6[%c32, %c0_45], %57 {strides = array<i32>} : memref<224x512xbf16, #tpu.memory_space<vmem>>, vector<4x512xbf16>,
    %c0_46 = arith.constant 0 : index
    %c119 = arith.constant 119 : index
    %59 = vector.load %arg7[%c0_46, %c119] : memref<4x768xbf16, #tpu.memory_space<vmem>>, vector<4x512xbf16>
    %c9 = arith.constant 9 : index
    %c0_47 = arith.constant 0 : index
    %60 = vector.load %arg1[%c9, %c0_47] : memref<27x512xbf16, #tpu.memory_space<vmem>>, vector<1x512xbf16>
    %61 = vector.broadcast %60 : vector<1x512xbf16> to vector<4x512xbf16>
    %62 = arith.mulf %59, %61 : vector<4x512xbf16>
    %c36 = arith.constant 36 : index
    %c0_48 = arith.constant 0 : index
    %63 = vector.load %arg6[%c36, %c0_48] : memref<224x512xbf16, #tpu.memory_space<vmem>>, vector<4x512xbf16>
    tpu.vector_store %arg6[%c36, %c0_48], %62 {strides = array<i32>} : memref<224x512xbf16, #tpu.memory_space<vmem>>, vector<4x512xbf16>,
    %c0_49 = arith.constant 0 : index
    %c120 = arith.constant 120 : index
    %64 = vector.load %arg7[%c0_49, %c120] : memref<4x768xbf16, #tpu.memory_space<vmem>>, vector<4x512xbf16>
    %c10 = arith.constant 10 : index
    %c0_50 = arith.constant 0 : index
    %65 = vector.load %arg1[%c10, %c0_50] : memref<27x512xbf16, #tpu.memory_space<vmem>>, vector<1x512xbf16>
    %66 = vector.broadcast %65 : vector<1x512xbf16> to vector<4x512xbf16>
    %67 = arith.mulf %64, %66 : vector<4x512xbf16>
    %c40 = arith.constant 40 : index
    %c0_51 = arith.constant 0 : index
    %68 = vector.load %arg6[%c40, %c0_51] : memref<224x512xbf16, #tpu.memory_space<vmem>>, vector<4x512xbf16>
    tpu.vector_store %arg6[%c40, %c0_51], %67 {strides = array<i32>} : memref<224x512xbf16, #tpu.memory_space<vmem>>, vector<4x512xbf16>,
    %c0_52 = arith.constant 0 : index
    %c121 = arith.constant 121 : index
    %69 = vector.load %arg7[%c0_52, %c121] : memref<4x768xbf16, #tpu.memory_space<vmem>>, vector<4x512xbf16>
    %c11 = arith.constant 11 : index
    %c0_53 = arith.constant 0 : index
    %70 = vector.load %arg1[%c11, %c0_53] : memref<27x512xbf16, #tpu.memory_space<vmem>>, vector<1x512xbf16>
    %71 = vector.broadcast %70 : vector<1x512xbf16> to vector<4x512xbf16>
    %72 = arith.mulf %69, %71 : vector<4x512xbf16>
    %c44 = arith.constant 44 : index
    %c0_54 = arith.constant 0 : index
    %73 = vector.load %arg6[%c44, %c0_54] : memref<224x512xbf16, #tpu.memory_space<vmem>>, vector<4x512xbf16>
    tpu.vector_store %arg6[%c44, %c0_54], %72 {strides = array<i32>} : memref<224x512xbf16, #tpu.memory_space<vmem>>, vector<4x512xbf16>,
    %c0_55 = arith.constant 0 : index
    %c127 = arith.constant 127 : index
    %74 = vector.load %arg7[%c0_55, %c127] : memref<4x768xbf16, #tpu.memory_space<vmem>>, vector<4x512xbf16>
    %c12_56 = arith.constant 12 : index
    %c0_57 = arith.constant 0 : index
    %75 = vector.load %arg1[%c12_56, %c0_57] : memref<27x512xbf16, #tpu.memory_space<vmem>>, vector<1x512xbf16>
    %76 = vector.broadcast %75 : vector<1x512xbf16> to vector<4x512xbf16>
    %77 = arith.mulf %74, %76 : vector<4x512xbf16>
    %c48 = arith.constant 48 : index
    %c0_58 = arith.constant 0 : index
    %78 = vector.load %arg6[%c48, %c0_58] : memref<224x512xbf16, #tpu.memory_space<vmem>>, vector<4x512xbf16>
    tpu.vector_store %arg6[%c48, %c0_58], %77 {strides = array<i32>} : memref<224x512xbf16, #tpu.memory_space<vmem>>, vector<4x512xbf16>,
    %c0_59 = arith.constant 0 : index
    %c128_60 = arith.constant 128 : index
    %79 = vector.load %arg7[%c0_59, %c128_60] : memref<4x768xbf16, #tpu.memory_space<vmem>>, vector<4x512xbf16>
    %c13 = arith.constant 13 : index
    %c0_61 = arith.constant 0 : index
    %80 = vector.load %arg1[%c13, %c0_61] : memref<27x512xbf16, #tpu.memory_space<vmem>>, vector<1x512xbf16>
    %81 = vector.broadcast %80 : vector<1x512xbf16> to vector<4x512xbf16>
    %82 = arith.mulf %79, %81 : vector<4x512xbf16>
    %c52 = arith.constant 52 : index
    %c0_62 = arith.constant 0 : index
    %83 = vector.load %arg6[%c52, %c0_62] : memref<224x512xbf16, #tpu.memory_space<vmem>>, vector<4x512xbf16>
    tpu.vector_store %arg6[%c52, %c0_62], %82 {strides = array<i32>} : memref<224x512xbf16, #tpu.memory_space<vmem>>, vector<4x512xbf16>,
    %c0_63 = arith.constant 0 : index
    %c129 = arith.constant 129 : index
    %84 = vector.load %arg7[%c0_63, %c129] : memref<4x768xbf16, #tpu.memory_space<vmem>>, vector<4x512xbf16>
    %c14 = arith.constant 14 : index
    %c0_64 = arith.constant 0 : index
    %85 = vector.load %arg1[%c14, %c0_64] : memref<27x512xbf16, #tpu.memory_space<vmem>>, vector<1x512xbf16>
    %86 = vector.broadcast %85 : vector<1x512xbf16> to vector<4x512xbf16>
    %87 = arith.mulf %84, %86 : vector<4x512xbf16>
    %c56_65 = arith.constant 56 : index
    %c0_66 = arith.constant 0 : index
    %88 = vector.load %arg6[%c56_65, %c0_66] : memref<224x512xbf16, #tpu.memory_space<vmem>>, vector<4x512xbf16>
    tpu.vector_store %arg6[%c56_65, %c0_66], %87 {strides = array<i32>} : memref<224x512xbf16, #tpu.memory_space<vmem>>, vector<4x512xbf16>,
    %c0_67 = arith.constant 0 : index
    %c135 = arith.constant 135 : index
    %89 = vector.load %arg7[%c0_67, %c135] : memref<4x768xbf16, #tpu.memory_space<vmem>>, vector<4x512xbf16>
    %c15 = arith.constant 15 : index
    %c0_68 = arith.constant 0 : index
    %90 = vector.load %arg1[%c15, %c0_68] : memref<27x512xbf16, #tpu.memory_space<vmem>>, vector<1x512xbf16>
    %91 = vector.broadcast %90 : vector<1x512xbf16> to vector<4x512xbf16>
    %92 = arith.mulf %89, %91 : vector<4x512xbf16>
    %c60 = arith.constant 60 : index
    %c0_69 = arith.constant 0 : index
    %93 = vector.load %arg6[%c60, %c0_69] : memref<224x512xbf16, #tpu.memory_space<vmem>>, vector<4x512xbf16>
    tpu.vector_store %arg6[%c60, %c0_69], %92 {strides = array<i32>} : memref<224x512xbf16, #tpu.memory_space<vmem>>, vector<4x512xbf16>,
    %c0_70 = arith.constant 0 : index
    %c136 = arith.constant 136 : index
    %94 = vector.load %arg7[%c0_70, %c136] : memref<4x768xbf16, #tpu.memory_space<vmem>>, vector<4x512xbf16>
    %c16_71 = arith.constant 16 : index
    %c0_72 = arith.constant 0 : index
    %95 = vector.load %arg1[%c16_71, %c0_72] : memref<27x512xbf16, #tpu.memory_space<vmem>>, vector<1x512xbf16>
    %96 = vector.broadcast %95 : vector<1x512xbf16> to vector<4x512xbf16>
    %97 = arith.mulf %94, %96 : vector<4x512xbf16>
    %c64_73 = arith.constant 64 : index
    %c0_74 = arith.constant 0 : index
    %98 = vector.load %arg6[%c64_73, %c0_74] : memref<224x512xbf16, #tpu.memory_space<vmem>>, vector<4x512xbf16>
    tpu.vector_store %arg6[%c64_73, %c0_74], %97 {strides = array<i32>} : memref<224x512xbf16, #tpu.memory_space<vmem>>, vector<4x512xbf16>,
    %c0_75 = arith.constant 0 : index
    %c137 = arith.constant 137 : index
    %99 = vector.load %arg7[%c0_75, %c137] : memref<4x768xbf16, #tpu.memory_space<vmem>>, vector<4x512xbf16>
    %c17 = arith.constant 17 : index
    %c0_76 = arith.constant 0 : index
    %100 = vector.load %arg1[%c17, %c0_76] : memref<27x512xbf16, #tpu.memory_space<vmem>>, vector<1x512xbf16>
    %101 = vector.broadcast %100 : vector<1x512xbf16> to vector<4x512xbf16>
    %102 = arith.mulf %99, %101 : vector<4x512xbf16>
    %c68 = arith.constant 68 : index
    %c0_77 = arith.constant 0 : index
    %103 = vector.load %arg6[%c68, %c0_77] : memref<224x512xbf16, #tpu.memory_space<vmem>>, vector<4x512xbf16>
    tpu.vector_store %arg6[%c68, %c0_77], %102 {strides = array<i32>} : memref<224x512xbf16, #tpu.memory_space<vmem>>, vector<4x512xbf16>,
    %c0_78 = arith.constant 0 : index
    %c183 = arith.constant 183 : index
    %104 = vector.load %arg7[%c0_78, %c183] : memref<4x768xbf16, #tpu.memory_space<vmem>>, vector<4x512xbf16>
    %c18 = arith.constant 18 : index
    %c0_79 = arith.constant 0 : index
    %105 = vector.load %arg1[%c18, %c0_79] : memref<27x512xbf16, #tpu.memory_space<vmem>>, vector<1x512xbf16>
    %106 = vector.broadcast %105 : vector<1x512xbf16> to vector<4x512xbf16>
    %107 = arith.mulf %104, %106 : vector<4x512xbf16>
    %c72_80 = arith.constant 72 : index
    %c0_81 = arith.constant 0 : index
    %108 = vector.load %arg6[%c72_80, %c0_81] : memref<224x512xbf16, #tpu.memory_space<vmem>>, vector<4x512xbf16>
    tpu.vector_store %arg6[%c72_80, %c0_81], %107 {strides = array<i32>} : memref<224x512xbf16, #tpu.memory_space<vmem>>, vector<4x512xbf16>,
    %c0_82 = arith.constant 0 : index
    %c184 = arith.constant 184 : index
    %109 = vector.load %arg7[%c0_82, %c184] : memref<4x768xbf16, #tpu.memory_space<vmem>>, vector<4x512xbf16>
    %c19 = arith.constant 19 : index
    %c0_83 = arith.constant 0 : index
    %110 = vector.load %arg1[%c19, %c0_83] : memref<27x512xbf16, #tpu.memory_space<vmem>>, vector<1x512xbf16>
    %111 = vector.broadcast %110 : vector<1x512xbf16> to vector<4x512xbf16>
    %112 = arith.mulf %109, %111 : vector<4x512xbf16>
    %c76 = arith.constant 76 : index
    %c0_84 = arith.constant 0 : index
    %113 = vector.load %arg6[%c76, %c0_84] : memref<224x512xbf16, #tpu.memory_space<vmem>>, vector<4x512xbf16>
    tpu.vector_store %arg6[%c76, %c0_84], %112 {strides = array<i32>} : memref<224x512xbf16, #tpu.memory_space<vmem>>, vector<4x512xbf16>,
    %c0_85 = arith.constant 0 : index
    %c185 = arith.constant 185 : index
    %114 = vector.load %arg7[%c0_85, %c185] : memref<4x768xbf16, #tpu.memory_space<vmem>>, vector<4x512xbf16>
    %c20_86 = arith.constant 20 : index
    %c0_87 = arith.constant 0 : index
    %115 = vector.load %arg1[%c20_86, %c0_87] : memref<27x512xbf16, #tpu.memory_space<vmem>>, vector<1x512xbf16>
    %116 = vector.broadcast %115 : vector<1x512xbf16> to vector<4x512xbf16>
    %117 = arith.mulf %114, %116 : vector<4x512xbf16>
    %c80 = arith.constant 80 : index
    %c0_88 = arith.constant 0 : index
    %118 = vector.load %arg6[%c80, %c0_88] : memref<224x512xbf16, #tpu.memory_space<vmem>>, vector<4x512xbf16>
    tpu.vector_store %arg6[%c80, %c0_88], %117 {strides = array<i32>} : memref<224x512xbf16, #tpu.memory_space<vmem>>, vector<4x512xbf16>,
    %c0_89 = arith.constant 0 : index
    %c191 = arith.constant 191 : index
    %119 = vector.load %arg7[%c0_89, %c191] : memref<4x768xbf16, #tpu.memory_space<vmem>>, vector<4x512xbf16>
    %c21 = arith.constant 21 : index
    %c0_90 = arith.constant 0 : index
    %120 = vector.load %arg1[%c21, %c0_90] : memref<27x512xbf16, #tpu.memory_space<vmem>>, vector<1x512xbf16>
    %121 = vector.broadcast %120 : vector<1x512xbf16> to vector<4x512xbf16>
    %122 = arith.mulf %119, %121 : vector<4x512xbf16>
    %c84 = arith.constant 84 : index
    %c0_91 = arith.constant 0 : index
    %123 = vector.load %arg6[%c84, %c0_91] : memref<224x512xbf16, #tpu.memory_space<vmem>>, vector<4x512xbf16>
    tpu.vector_store %arg6[%c84, %c0_91], %122 {strides = array<i32>} : memref<224x512xbf16, #tpu.memory_space<vmem>>, vector<4x512xbf16>,
    %c0_92 = arith.constant 0 : index
    %c192 = arith.constant 192 : index
    %124 = vector.load %arg7[%c0_92, %c192] : memref<4x768xbf16, #tpu.memory_space<vmem>>, vector<4x512xbf16>
    %c22 = arith.constant 22 : index
    %c0_93 = arith.constant 0 : index
    %125 = vector.load %arg1[%c22, %c0_93] : memref<27x512xbf16, #tpu.memory_space<vmem>>, vector<1x512xbf16>
    %126 = vector.broadcast %125 : vector<1x512xbf16> to vector<4x512xbf16>
    %127 = arith.mulf %124, %126 : vector<4x512xbf16>
    %c88 = arith.constant 88 : index
    %c0_94 = arith.constant 0 : index
    %128 = vector.load %arg6[%c88, %c0_94] : memref<224x512xbf16, #tpu.memory_space<vmem>>, vector<4x512xbf16>
    tpu.vector_store %arg6[%c88, %c0_94], %127 {strides = array<i32>} : memref<224x512xbf16, #tpu.memory_space<vmem>>, vector<4x512xbf16>,
    %c0_95 = arith.constant 0 : index
    %c193 = arith.constant 193 : index
    %129 = vector.load %arg7[%c0_95, %c193] : memref<4x768xbf16, #tpu.memory_space<vmem>>, vector<4x512xbf16>
    %c23 = arith.constant 23 : index
    %c0_96 = arith.constant 0 : index
    %130 = vector.load %arg1[%c23, %c0_96] : memref<27x512xbf16, #tpu.memory_space<vmem>>, vector<1x512xbf16>
    %131 = vector.broadcast %130 : vector<1x512xbf16> to vector<4x512xbf16>
    %132 = arith.mulf %129, %131 : vector<4x512xbf16>
    %c92 = arith.constant 92 : index
    %c0_97 = arith.constant 0 : index
    %133 = vector.load %arg6[%c92, %c0_97] : memref<224x512xbf16, #tpu.memory_space<vmem>>, vector<4x512xbf16>
    tpu.vector_store %arg6[%c92, %c0_97], %132 {strides = array<i32>} : memref<224x512xbf16, #tpu.memory_space<vmem>>, vector<4x512xbf16>,
    %c0_98 = arith.constant 0 : index
    %c199 = arith.constant 199 : index
    %134 = vector.load %arg7[%c0_98, %c199] : memref<4x768xbf16, #tpu.memory_space<vmem>>, vector<4x512xbf16>
    %c24_99 = arith.constant 24 : index
    %c0_100 = arith.constant 0 : index
    %135 = vector.load %arg1[%c24_99, %c0_100] : memref<27x512xbf16, #tpu.memory_space<vmem>>, vector<1x512xbf16>
    %136 = vector.broadcast %135 : vector<1x512xbf16> to vector<4x512xbf16>
    %137 = arith.mulf %134, %136 : vector<4x512xbf16>
    %c96 = arith.constant 96 : index
    %c0_101 = arith.constant 0 : index
    %138 = vector.load %arg6[%c96, %c0_101] : memref<224x512xbf16, #tpu.memory_space<vmem>>, vector<4x512xbf16>
    tpu.vector_store %arg6[%c96, %c0_101], %137 {strides = array<i32>} : memref<224x512xbf16, #tpu.memory_space<vmem>>, vector<4x512xbf16>,
    %c0_102 = arith.constant 0 : index
    %c200 = arith.constant 200 : index
    %139 = vector.load %arg7[%c0_102, %c200] : memref<4x768xbf16, #tpu.memory_space<vmem>>, vector<4x512xbf16>
    %c25 = arith.constant 25 : index
    %c0_103 = arith.constant 0 : index
    %140 = vector.load %arg1[%c25, %c0_103] : memref<27x512xbf16, #tpu.memory_space<vmem>>, vector<1x512xbf16>
    %141 = vector.broadcast %140 : vector<1x512xbf16> to vector<4x512xbf16>
    %142 = arith.mulf %139, %141 : vector<4x512xbf16>
    %c100 = arith.constant 100 : index
    %c0_104 = arith.constant 0 : index
    %143 = vector.load %arg6[%c100, %c0_104] : memref<224x512xbf16, #tpu.memory_space<vmem>>, vector<4x512xbf16>
    tpu.vector_store %arg6[%c100, %c0_104], %142 {strides = array<i32>} : memref<224x512xbf16, #tpu.memory_space<vmem>>, vector<4x512xbf16>,
    %c0_105 = arith.constant 0 : index
    %c201 = arith.constant 201 : index
    %144 = vector.load %arg7[%c0_105, %c201] : memref<4x768xbf16, #tpu.memory_space<vmem>>, vector<4x512xbf16>
    %c26 = arith.constant 26 : index
    %c0_106 = arith.constant 0 : index
    %145 = vector.load %arg1[%c26, %c0_106] : memref<27x512xbf16, #tpu.memory_space<vmem>>, vector<1x512xbf16>
    %146 = vector.broadcast %145 : vector<1x512xbf16> to vector<4x512xbf16>
    %147 = arith.mulf %144, %146 : vector<4x512xbf16>
    %c104 = arith.constant 104 : index
    %c0_107 = arith.constant 0 : index
    %148 = vector.load %arg6[%c104, %c0_107] : memref<224x512xbf16, #tpu.memory_space<vmem>>, vector<4x512xbf16>
    tpu.vector_store %arg6[%c104, %c0_107], %147 {strides = array<i32>} : memref<224x512xbf16, #tpu.memory_space<vmem>>, vector<4x512xbf16>,
    %c0_108 = arith.constant 0 : index
    %c0_109 = arith.constant 0 : index
    %149 = vector.load %arg3[%c0_108, %c0_109] : memref<8x112xbf16, #tpu.memory_space<vmem>>, vector<8x112xbf16>
    %c0_110 = arith.constant 0 : index
    %c0_111 = arith.constant 0 : index
    %150 = vector.load %arg6[%c0_110, %c0_111] : memref<224x512xbf16, #tpu.memory_space<vmem>>, vector<112x512xbf16>
    %cst_112 = arith.constant dense<0.000000e+00> : vector<8x512xf32>
    %151 = tpu.matmul %149, %150, %cst_112 {dimension_numbers = #tpu.dot_dimension_numbers<[1], [0], [0], [1], [0, 0, 1, 1], [], []>} : vector<8x112xbf16>, vector<112x512xbf16>, vector<8x512xf32> -> vector<8x512xf32>
    %cst_113 = arith.constant dense<0.000000e+00> : vector<8xf32>
    %152 = vector.multi_reduction <add>, %151, %cst_113 [1] : vector<8x512xf32> to vector<8xf32>
    %153 = vector.shape_cast %152 : vector<8xf32> to vector<8x1xf32>
    %154 = arith.mulf %151, %151 : vector<8x512xf32>
    %cst_114 = arith.constant dense<0.000000e+00> : vector<8xf32>
    %155 = vector.multi_reduction <add>, %154, %cst_114 [1] : vector<8x512xf32> to vector<8xf32>
    %156 = vector.shape_cast %155 : vector<8xf32> to vector<8x1xf32>
    %cst_115 = arith.constant 0.001953125 : f32
    %157 = vector.broadcast %cst_115 : f32 to vector<8x1xf32>
    %158 = arith.mulf %153, %157 : vector<8x1xf32>
    %cst_116 = arith.constant 0.001953125 : f32
    %159 = vector.broadcast %cst_116 : f32 to vector<8x1xf32>
    %160 = arith.mulf %156, %159 : vector<8x1xf32>
    %161 = arith.mulf %158, %158 : vector<8x1xf32>
    %162 = arith.subf %160, %161 : vector<8x1xf32>
    %cst_117 = arith.constant 0.000000e+00 : f32
    %163 = vector.broadcast %cst_117 : f32 to vector<8x1xf32>
    %164 = arith.maximumf %162, %163 : vector<8x1xf32>
    %165 = vector.broadcast %158 : vector<8x1xf32> to vector<8x512xf32>
    %166 = arith.subf %151, %165 : vector<8x512xf32>
    %cst_118 = arith.constant 9.99999974E-6 : f32
    %167 = vector.broadcast %cst_118 : f32 to vector<8x1xf32>
    %168 = arith.addf %164, %167 : vector<8x1xf32>
    %169 = math.rsqrt %168 : vector<8x1xf32>
    %170 = vector.broadcast %169 : vector<8x1xf32> to vector<8x512xf32>
    %171 = arith.mulf %166, %170 : vector<8x512xf32>
    %cst_119 = arith.constant 0.000000e+00 : f32
    %172 = vector.broadcast %cst_119 : f32 to vector<8x512xf32>
    %173 = arith.maximumf %171, %172 : vector<8x512xf32>
    %174 = arith.truncf %173 : vector<8x512xf32> to vector<8x512xbf16>
    %c0_120 = arith.constant 0 : index
    %c128_121 = arith.constant 128 : index
    %175 = vector.load %arg8[%c0_120, %c128_121] : memref<8x768xbf16, #tpu.memory_space<vmem>>, vector<8x512xbf16>
    tpu.vector_store %arg8[%c0_120, %c128_121], %174 {strides = array<i32>} : memref<8x768xbf16, #tpu.memory_space<vmem>>, vector<8x512xbf16>,
    %cst_122 = arith.constant 0.000000e+00 : bf16
    %176 = vector.broadcast %cst_122 : bf16 to vector<8x512xbf16>
    %c216 = arith.constant 216 : index
    %c0_123 = arith.constant 0 : index
    %177 = vector.load %arg6[%c216, %c0_123] : memref<224x512xbf16, #tpu.memory_space<vmem>>, vector<8x512xbf16>
    tpu.vector_store %arg6[%c216, %c0_123], %176 {strides = array<i32>} : memref<224x512xbf16, #tpu.memory_space<vmem>>, vector<8x512xbf16>,
    %c0_124 = arith.constant 0 : index
    %c55_125 = arith.constant 55 : index
    %178 = vector.load %arg8[%c0_124, %c55_125] : memref<8x768xbf16, #tpu.memory_space<vmem>>, vector<8x512xbf16>
    %c0_126 = arith.constant 0 : index
    %c0_127 = arith.constant 0 : index
    %179 = vector.load %arg1[%c0_126, %c0_127] : memref<27x512xbf16, #tpu.memory_space<vmem>>, vector<1x512xbf16>
    %180 = vector.broadcast %179 : vector<1x512xbf16> to vector<8x512xbf16>
    %181 = arith.mulf %178, %180 : vector<8x512xbf16>
    %c0_128 = arith.constant 0 : index
    %c0_129 = arith.constant 0 : index
    %182 = vector.load %arg6[%c0_128, %c0_129] : memref<224x512xbf16, #tpu.memory_space<vmem>>, vector<8x512xbf16>
    tpu.vector_store %arg6[%c0_128, %c0_129], %181 {strides = array<i32>} : memref<224x512xbf16, #tpu.memory_space<vmem>>, vector<8x512xbf16>,
    %c0_130 = arith.constant 0 : index
    %c56_131 = arith.constant 56 : index
    %183 = vector.load %arg8[%c0_130, %c56_131] : memref<8x768xbf16, #tpu.memory_space<vmem>>, vector<8x512xbf16>
    %c1_132 = arith.constant 1 : index
    %c0_133 = arith.constant 0 : index
    %184 = vector.load %arg1[%c1_132, %c0_133] : memref<27x512xbf16, #tpu.memory_space<vmem>>, vector<1x512xbf16>
    %185 = vector.broadcast %184 : vector<1x512xbf16> to vector<8x512xbf16>
    %186 = arith.mulf %183, %185 : vector<8x512xbf16>
    %c8_134 = arith.constant 8 : index
    %c0_135 = arith.constant 0 : index
    %187 = vector.load %arg6[%c8_134, %c0_135] : memref<224x512xbf16, #tpu.memory_space<vmem>>, vector<8x512xbf16>
    tpu.vector_store %arg6[%c8_134, %c0_135], %186 {strides = array<i32>} : memref<224x512xbf16, #tpu.memory_space<vmem>>, vector<8x512xbf16>,
    %c0_136 = arith.constant 0 : index
    %c57_137 = arith.constant 57 : index
    %188 = vector.load %arg8[%c0_136, %c57_137] : memref<8x768xbf16, #tpu.memory_space<vmem>>, vector<8x512xbf16>
    %c2_138 = arith.constant 2 : index
    %c0_139 = arith.constant 0 : index
    %189 = vector.load %arg1[%c2_138, %c0_139] : memref<27x512xbf16, #tpu.memory_space<vmem>>, vector<1x512xbf16>
    %190 = vector.broadcast %189 : vector<1x512xbf16> to vector<8x512xbf16>
    %191 = arith.mulf %188, %190 : vector<8x512xbf16>
    %c16_140 = arith.constant 16 : index
    %c0_141 = arith.constant 0 : index
    %192 = vector.load %arg6[%c16_140, %c0_141] : memref<224x512xbf16, #tpu.memory_space<vmem>>, vector<8x512xbf16>
    tpu.vector_store %arg6[%c16_140, %c0_141], %191 {strides = array<i32>} : memref<224x512xbf16, #tpu.memory_space<vmem>>, vector<8x512xbf16>,
    %c0_142 = arith.constant 0 : index
    %c63_143 = arith.constant 63 : index
    %193 = vector.load %arg8[%c0_142, %c63_143] : memref<8x768xbf16, #tpu.memory_space<vmem>>, vector<8x512xbf16>
    %c3_144 = arith.constant 3 : index
    %c0_145 = arith.constant 0 : index
    %194 = vector.load %arg1[%c3_144, %c0_145] : memref<27x512xbf16, #tpu.memory_space<vmem>>, vector<1x512xbf16>
    %195 = vector.broadcast %194 : vector<1x512xbf16> to vector<8x512xbf16>
    %196 = arith.mulf %193, %195 : vector<8x512xbf16>
    %c24_146 = arith.constant 24 : index
    %c0_147 = arith.constant 0 : index
    %197 = vector.load %arg6[%c24_146, %c0_147] : memref<224x512xbf16, #tpu.memory_space<vmem>>, vector<8x512xbf16>
    tpu.vector_store %arg6[%c24_146, %c0_147], %196 {strides = array<i32>} : memref<224x512xbf16, #tpu.memory_space<vmem>>, vector<8x512xbf16>,
    %c0_148 = arith.constant 0 : index
    %c64_149 = arith.constant 64 : index
    %198 = vector.load %arg8[%c0_148, %c64_149] : memref<8x768xbf16, #tpu.memory_space<vmem>>, vector<8x512xbf16>
    %c4_150 = arith.constant 4 : index
    %c0_151 = arith.constant 0 : index
    %199 = vector.load %arg1[%c4_150, %c0_151] : memref<27x512xbf16, #tpu.memory_space<vmem>>, vector<1x512xbf16>
    %200 = vector.broadcast %199 : vector<1x512xbf16> to vector<8x512xbf16>
    %201 = arith.mulf %198, %200 : vector<8x512xbf16>
    %c32_152 = arith.constant 32 : index
    %c0_153 = arith.constant 0 : index
    %202 = vector.load %arg6[%c32_152, %c0_153] : memref<224x512xbf16, #tpu.memory_space<vmem>>, vector<8x512xbf16>
    tpu.vector_store %arg6[%c32_152, %c0_153], %201 {strides = array<i32>} : memref<224x512xbf16, #tpu.memory_space<vmem>>, vector<8x512xbf16>,
    %c0_154 = arith.constant 0 : index
    %c65_155 = arith.constant 65 : index
    %203 = vector.load %arg8[%c0_154, %c65_155] : memref<8x768xbf16, #tpu.memory_space<vmem>>, vector<8x512xbf16>
    %c5_156 = arith.constant 5 : index
    %c0_157 = arith.constant 0 : index
    %204 = vector.load %arg1[%c5_156, %c0_157] : memref<27x512xbf16, #tpu.memory_space<vmem>>, vector<1x512xbf16>
    %205 = vector.broadcast %204 : vector<1x512xbf16> to vector<8x512xbf16>
    %206 = arith.mulf %203, %205 : vector<8x512xbf16>
    %c40_158 = arith.constant 40 : index
    %c0_159 = arith.constant 0 : index
    %207 = vector.load %arg6[%c40_158, %c0_159] : memref<224x512xbf16, #tpu.memory_space<vmem>>, vector<8x512xbf16>
    tpu.vector_store %arg6[%c40_158, %c0_159], %206 {strides = array<i32>} : memref<224x512xbf16, #tpu.memory_space<vmem>>, vector<8x512xbf16>,
    %c0_160 = arith.constant 0 : index
    %c71_161 = arith.constant 71 : index
    %208 = vector.load %arg8[%c0_160, %c71_161] : memref<8x768xbf16, #tpu.memory_space<vmem>>, vector<8x512xbf16>
    %c6_162 = arith.constant 6 : index
    %c0_163 = arith.constant 0 : index
    %209 = vector.load %arg1[%c6_162, %c0_163] : memref<27x512xbf16, #tpu.memory_space<vmem>>, vector<1x512xbf16>
    %210 = vector.broadcast %209 : vector<1x512xbf16> to vector<8x512xbf16>
    %211 = arith.mulf %208, %210 : vector<8x512xbf16>
    %c48_164 = arith.constant 48 : index
    %c0_165 = arith.constant 0 : index
    %212 = vector.load %arg6[%c48_164, %c0_165] : memref<224x512xbf16, #tpu.memory_space<vmem>>, vector<8x512xbf16>
    tpu.vector_store %arg6[%c48_164, %c0_165], %211 {strides = array<i32>} : memref<224x512xbf16, #tpu.memory_space<vmem>>, vector<8x512xbf16>,
    %c0_166 = arith.constant 0 : index
    %c72_167 = arith.constant 72 : index
    %213 = vector.load %arg8[%c0_166, %c72_167] : memref<8x768xbf16, #tpu.memory_space<vmem>>, vector<8x512xbf16>
    %c7_168 = arith.constant 7 : index
    %c0_169 = arith.constant 0 : index
    %214 = vector.load %arg1[%c7_168, %c0_169] : memref<27x512xbf16, #tpu.memory_space<vmem>>, vector<1x512xbf16>
    %215 = vector.broadcast %214 : vector<1x512xbf16> to vector<8x512xbf16>
    %216 = arith.mulf %213, %215 : vector<8x512xbf16>
    %c56_170 = arith.constant 56 : index
    %c0_171 = arith.constant 0 : index
    %217 = vector.load %arg6[%c56_170, %c0_171] : memref<224x512xbf16, #tpu.memory_space<vmem>>, vector<8x512xbf16>
    tpu.vector_store %arg6[%c56_170, %c0_171], %216 {strides = array<i32>} : memref<224x512xbf16, #tpu.memory_space<vmem>>, vector<8x512xbf16>,
    %c0_172 = arith.constant 0 : index
    %c73_173 = arith.constant 73 : index
    %218 = vector.load %arg8[%c0_172, %c73_173] : memref<8x768xbf16, #tpu.memory_space<vmem>>, vector<8x512xbf16>
    %c8_174 = arith.constant 8 : index
    %c0_175 = arith.constant 0 : index
    %219 = vector.load %arg1[%c8_174, %c0_175] : memref<27x512xbf16, #tpu.memory_space<vmem>>, vector<1x512xbf16>
    %220 = vector.broadcast %219 : vector<1x512xbf16> to vector<8x512xbf16>
    %221 = arith.mulf %218, %220 : vector<8x512xbf16>
    %c64_176 = arith.constant 64 : index
    %c0_177 = arith.constant 0 : index
    %222 = vector.load %arg6[%c64_176, %c0_177] : memref<224x512xbf16, #tpu.memory_space<vmem>>, vector<8x512xbf16>
    tpu.vector_store %arg6[%c64_176, %c0_177], %221 {strides = array<i32>} : memref<224x512xbf16, #tpu.memory_space<vmem>>, vector<8x512xbf16>,
    %c0_178 = arith.constant 0 : index
    %c119_179 = arith.constant 119 : index
    %223 = vector.load %arg8[%c0_178, %c119_179] : memref<8x768xbf16, #tpu.memory_space<vmem>>, vector<8x512xbf16>
    %c9_180 = arith.constant 9 : index
    %c0_181 = arith.constant 0 : index
    %224 = vector.load %arg1[%c9_180, %c0_181] : memref<27x512xbf16, #tpu.memory_space<vmem>>, vector<1x512xbf16>
    %225 = vector.broadcast %224 : vector<1x512xbf16> to vector<8x512xbf16>
    %226 = arith.mulf %223, %225 : vector<8x512xbf16>
    %c72_182 = arith.constant 72 : index
    %c0_183 = arith.constant 0 : index
    %227 = vector.load %arg6[%c72_182, %c0_183] : memref<224x512xbf16, #tpu.memory_space<vmem>>, vector<8x512xbf16>
    tpu.vector_store %arg6[%c72_182, %c0_183], %226 {strides = array<i32>} : memref<224x512xbf16, #tpu.memory_space<vmem>>, vector<8x512xbf16>,
    %c0_184 = arith.constant 0 : index
    %c120_185 = arith.constant 120 : index
    %228 = vector.load %arg8[%c0_184, %c120_185] : memref<8x768xbf16, #tpu.memory_space<vmem>>, vector<8x512xbf16>
    %c10_186 = arith.constant 10 : index
    %c0_187 = arith.constant 0 : index
    %229 = vector.load %arg1[%c10_186, %c0_187] : memref<27x512xbf16, #tpu.memory_space<vmem>>, vector<1x512xbf16>
    %230 = vector.broadcast %229 : vector<1x512xbf16> to vector<8x512xbf16>
    %231 = arith.mulf %228, %230 : vector<8x512xbf16>
    %c80_188 = arith.constant 80 : index
    %c0_189 = arith.constant 0 : index
    %232 = vector.load %arg6[%c80_188, %c0_189] : memref<224x512xbf16, #tpu.memory_space<vmem>>, vector<8x512xbf16>
    tpu.vector_store %arg6[%c80_188, %c0_189], %231 {strides = array<i32>} : memref<224x512xbf16, #tpu.memory_space<vmem>>, vector<8x512xbf16>,
    %c0_190 = arith.constant 0 : index
    %c121_191 = arith.constant 121 : index
    %233 = vector.load %arg8[%c0_190, %c121_191] : memref<8x768xbf16, #tpu.memory_space<vmem>>, vector<8x512xbf16>
    %c11_192 = arith.constant 11 : index
    %c0_193 = arith.constant 0 : index
    %234 = vector.load %arg1[%c11_192, %c0_193] : memref<27x512xbf16, #tpu.memory_space<vmem>>, vector<1x512xbf16>
    %235 = vector.broadcast %234 : vector<1x512xbf16> to vector<8x512xbf16>
    %236 = arith.mulf %233, %235 : vector<8x512xbf16>
    %c88_194 = arith.constant 88 : index
    %c0_195 = arith.constant 0 : index
    %237 = vector.load %arg6[%c88_194, %c0_195] : memref<224x512xbf16, #tpu.memory_space<vmem>>, vector<8x512xbf16>
    tpu.vector_store %arg6[%c88_194, %c0_195], %236 {strides = array<i32>} : memref<224x512xbf16, #tpu.memory_space<vmem>>, vector<8x512xbf16>,
    %c0_196 = arith.constant 0 : index
    %c127_197 = arith.constant 127 : index
    %238 = vector.load %arg8[%c0_196, %c127_197] : memref<8x768xbf16, #tpu.memory_space<vmem>>, vector<8x512xbf16>
    %c12_198 = arith.constant 12 : index
    %c0_199 = arith.constant 0 : index
    %239 = vector.load %arg1[%c12_198, %c0_199] : memref<27x512xbf16, #tpu.memory_space<vmem>>, vector<1x512xbf16>
    %240 = vector.broadcast %239 : vector<1x512xbf16> to vector<8x512xbf16>
    %241 = arith.mulf %238, %240 : vector<8x512xbf16>
    %c96_200 = arith.constant 96 : index
    %c0_201 = arith.constant 0 : index
    %242 = vector.load %arg6[%c96_200, %c0_201] : memref<224x512xbf16, #tpu.memory_space<vmem>>, vector<8x512xbf16>
    tpu.vector_store %arg6[%c96_200, %c0_201], %241 {strides = array<i32>} : memref<224x512xbf16, #tpu.memory_space<vmem>>, vector<8x512xbf16>,
    %c0_202 = arith.constant 0 : index
    %c128_203 = arith.constant 128 : index
    %243 = vector.load %arg8[%c0_202, %c128_203] : memref<8x768xbf16, #tpu.memory_space<vmem>>, vector<8x512xbf16>
    %c13_204 = arith.constant 13 : index
    %c0_205 = arith.constant 0 : index
    %244 = vector.load %arg1[%c13_204, %c0_205] : memref<27x512xbf16, #tpu.memory_space<vmem>>, vector<1x512xbf16>
    %245 = vector.broadcast %244 : vector<1x512xbf16> to vector<8x512xbf16>
    %246 = arith.mulf %243, %245 : vector<8x512xbf16>
    %c104_206 = arith.constant 104 : index
    %c0_207 = arith.constant 0 : index
    %247 = vector.load %arg6[%c104_206, %c0_207] : memref<224x512xbf16, #tpu.memory_space<vmem>>, vector<8x512xbf16>
    tpu.vector_store %arg6[%c104_206, %c0_207], %246 {strides = array<i32>} : memref<224x512xbf16, #tpu.memory_space<vmem>>, vector<8x512xbf16>,
    %c0_208 = arith.constant 0 : index
    %c129_209 = arith.constant 129 : index
    %248 = vector.load %arg8[%c0_208, %c129_209] : memref<8x768xbf16, #tpu.memory_space<vmem>>, vector<8x512xbf16>
    %c14_210 = arith.constant 14 : index
    %c0_211 = arith.constant 0 : index
    %249 = vector.load %arg1[%c14_210, %c0_211] : memref<27x512xbf16, #tpu.memory_space<vmem>>, vector<1x512xbf16>
    %250 = vector.broadcast %249 : vector<1x512xbf16> to vector<8x512xbf16>
    %251 = arith.mulf %248, %250 : vector<8x512xbf16>
    %c112 = arith.constant 112 : index
    %c0_212 = arith.constant 0 : index
    %252 = vector.load %arg6[%c112, %c0_212] : memref<224x512xbf16, #tpu.memory_space<vmem>>, vector<8x512xbf16>
    tpu.vector_store %arg6[%c112, %c0_212], %251 {strides = array<i32>} : memref<224x512xbf16, #tpu.memory_space<vmem>>, vector<8x512xbf16>,
    %c0_213 = arith.constant 0 : index
    %c135_214 = arith.constant 135 : index
    %253 = vector.load %arg8[%c0_213, %c135_214] : memref<8x768xbf16, #tpu.memory_space<vmem>>, vector<8x512xbf16>
    %c15_215 = arith.constant 15 : index
    %c0_216 = arith.constant 0 : index
    %254 = vector.load %arg1[%c15_215, %c0_216] : memref<27x512xbf16, #tpu.memory_space<vmem>>, vector<1x512xbf16>
    %255 = vector.broadcast %254 : vector<1x512xbf16> to vector<8x512xbf16>
    %256 = arith.mulf %253, %255 : vector<8x512xbf16>
    %c120_217 = arith.constant 120 : index
    %c0_218 = arith.constant 0 : index
    %257 = vector.load %arg6[%c120_217, %c0_218] : memref<224x512xbf16, #tpu.memory_space<vmem>>, vector<8x512xbf16>
    tpu.vector_store %arg6[%c120_217, %c0_218], %256 {strides = array<i32>} : memref<224x512xbf16, #tpu.memory_space<vmem>>, vector<8x512xbf16>,
    %c0_219 = arith.constant 0 : index
    %c136_220 = arith.constant 136 : index
    %258 = vector.load %arg8[%c0_219, %c136_220] : memref<8x768xbf16, #tpu.memory_space<vmem>>, vector<8x512xbf16>
    %c16_221 = arith.constant 16 : index
    %c0_222 = arith.constant 0 : index
    %259 = vector.load %arg1[%c16_221, %c0_222] : memref<27x512xbf16, #tpu.memory_space<vmem>>, vector<1x512xbf16>
    %260 = vector.broadcast %259 : vector<1x512xbf16> to vector<8x512xbf16>
    %261 = arith.mulf %258, %260 : vector<8x512xbf16>
    %c128_223 = arith.constant 128 : index
    %c0_224 = arith.constant 0 : index
    %262 = vector.load %arg6[%c128_223, %c0_224] : memref<224x512xbf16, #tpu.memory_space<vmem>>, vector<8x512xbf16>
    tpu.vector_store %arg6[%c128_223, %c0_224], %261 {strides = array<i32>} : memref<224x512xbf16, #tpu.memory_space<vmem>>, vector<8x512xbf16>,
    %c0_225 = arith.constant 0 : index
    %c137_226 = arith.constant 137 : index
    %263 = vector.load %arg8[%c0_225, %c137_226] : memref<8x768xbf16, #tpu.memory_space<vmem>>, vector<8x512xbf16>
    %c17_227 = arith.constant 17 : index
    %c0_228 = arith.constant 0 : index
    %264 = vector.load %arg1[%c17_227, %c0_228] : memref<27x512xbf16, #tpu.memory_space<vmem>>, vector<1x512xbf16>
    %265 = vector.broadcast %264 : vector<1x512xbf16> to vector<8x512xbf16>
    %266 = arith.mulf %263, %265 : vector<8x512xbf16>
    %c136_229 = arith.constant 136 : index
    %c0_230 = arith.constant 0 : index
    %267 = vector.load %arg6[%c136_229, %c0_230] : memref<224x512xbf16, #tpu.memory_space<vmem>>, vector<8x512xbf16>
    tpu.vector_store %arg6[%c136_229, %c0_230], %266 {strides = array<i32>} : memref<224x512xbf16, #tpu.memory_space<vmem>>, vector<8x512xbf16>,
    %c0_231 = arith.constant 0 : index
    %c183_232 = arith.constant 183 : index
    %268 = vector.load %arg8[%c0_231, %c183_232] : memref<8x768xbf16, #tpu.memory_space<vmem>>, vector<8x512xbf16>
    %c18_233 = arith.constant 18 : index
    %c0_234 = arith.constant 0 : index
    %269 = vector.load %arg1[%c18_233, %c0_234] : memref<27x512xbf16, #tpu.memory_space<vmem>>, vector<1x512xbf16>
    %270 = vector.broadcast %269 : vector<1x512xbf16> to vector<8x512xbf16>
    %271 = arith.mulf %268, %270 : vector<8x512xbf16>
    %c144 = arith.constant 144 : index
    %c0_235 = arith.constant 0 : index
    %272 = vector.load %arg6[%c144, %c0_235] : memref<224x512xbf16, #tpu.memory_space<vmem>>, vector<8x512xbf16>
    tpu.vector_store %arg6[%c144, %c0_235], %271 {strides = array<i32>} : memref<224x512xbf16, #tpu.memory_space<vmem>>, vector<8x512xbf16>,
    %c0_236 = arith.constant 0 : index
    %c184_237 = arith.constant 184 : index
    %273 = vector.load %arg8[%c0_236, %c184_237] : memref<8x768xbf16, #tpu.memory_space<vmem>>, vector<8x512xbf16>
    %c19_238 = arith.constant 19 : index
    %c0_239 = arith.constant 0 : index
    %274 = vector.load %arg1[%c19_238, %c0_239] : memref<27x512xbf16, #tpu.memory_space<vmem>>, vector<1x512xbf16>
    %275 = vector.broadcast %274 : vector<1x512xbf16> to vector<8x512xbf16>
    %276 = arith.mulf %273, %275 : vector<8x512xbf16>
    %c152 = arith.constant 152 : index
    %c0_240 = arith.constant 0 : index
    %277 = vector.load %arg6[%c152, %c0_240] : memref<224x512xbf16, #tpu.memory_space<vmem>>, vector<8x512xbf16>
    tpu.vector_store %arg6[%c152, %c0_240], %276 {strides = array<i32>} : memref<224x512xbf16, #tpu.memory_space<vmem>>, vector<8x512xbf16>,
    %c0_241 = arith.constant 0 : index
    %c185_242 = arith.constant 185 : index
    %278 = vector.load %arg8[%c0_241, %c185_242] : memref<8x768xbf16, #tpu.memory_space<vmem>>, vector<8x512xbf16>
    %c20_243 = arith.constant 20 : index
    %c0_244 = arith.constant 0 : index
    %279 = vector.load %arg1[%c20_243, %c0_244] : memref<27x512xbf16, #tpu.memory_space<vmem>>, vector<1x512xbf16>
    %280 = vector.broadcast %279 : vector<1x512xbf16> to vector<8x512xbf16>
    %281 = arith.mulf %278, %280 : vector<8x512xbf16>
    %c160 = arith.constant 160 : index
    %c0_245 = arith.constant 0 : index
    %282 = vector.load %arg6[%c160, %c0_245] : memref<224x512xbf16, #tpu.memory_space<vmem>>, vector<8x512xbf16>
    tpu.vector_store %arg6[%c160, %c0_245], %281 {strides = array<i32>} : memref<224x512xbf16, #tpu.memory_space<vmem>>, vector<8x512xbf16>,
    %c0_246 = arith.constant 0 : index
    %c191_247 = arith.constant 191 : index
    %283 = vector.load %arg8[%c0_246, %c191_247] : memref<8x768xbf16, #tpu.memory_space<vmem>>, vector<8x512xbf16>
    %c21_248 = arith.constant 21 : index
    %c0_249 = arith.constant 0 : index
    %284 = vector.load %arg1[%c21_248, %c0_249] : memref<27x512xbf16, #tpu.memory_space<vmem>>, vector<1x512xbf16>
    %285 = vector.broadcast %284 : vector<1x512xbf16> to vector<8x512xbf16>
    %286 = arith.mulf %283, %285 : vector<8x512xbf16>
    %c168 = arith.constant 168 : index
    %c0_250 = arith.constant 0 : index
    %287 = vector.load %arg6[%c168, %c0_250] : memref<224x512xbf16, #tpu.memory_space<vmem>>, vector<8x512xbf16>
    tpu.vector_store %arg6[%c168, %c0_250], %286 {strides = array<i32>} : memref<224x512xbf16, #tpu.memory_space<vmem>>, vector<8x512xbf16>,
    %c0_251 = arith.constant 0 : index
    %c192_252 = arith.constant 192 : index
    %288 = vector.load %arg8[%c0_251, %c192_252] : memref<8x768xbf16, #tpu.memory_space<vmem>>, vector<8x512xbf16>
    %c22_253 = arith.constant 22 : index
    %c0_254 = arith.constant 0 : index
    %289 = vector.load %arg1[%c22_253, %c0_254] : memref<27x512xbf16, #tpu.memory_space<vmem>>, vector<1x512xbf16>
    %290 = vector.broadcast %289 : vector<1x512xbf16> to vector<8x512xbf16>
    %291 = arith.mulf %288, %290 : vector<8x512xbf16>
    %c176 = arith.constant 176 : index
    %c0_255 = arith.constant 0 : index
    %292 = vector.load %arg6[%c176, %c0_255] : memref<224x512xbf16, #tpu.memory_space<vmem>>, vector<8x512xbf16>
    tpu.vector_store %arg6[%c176, %c0_255], %291 {strides = array<i32>} : memref<224x512xbf16, #tpu.memory_space<vmem>>, vector<8x512xbf16>,
    %c0_256 = arith.constant 0 : index
    %c193_257 = arith.constant 193 : index
    %293 = vector.load %arg8[%c0_256, %c193_257] : memref<8x768xbf16, #tpu.memory_space<vmem>>, vector<8x512xbf16>
    %c23_258 = arith.constant 23 : index
    %c0_259 = arith.constant 0 : index
    %294 = vector.load %arg1[%c23_258, %c0_259] : memref<27x512xbf16, #tpu.memory_space<vmem>>, vector<1x512xbf16>
    %295 = vector.broadcast %294 : vector<1x512xbf16> to vector<8x512xbf16>
    %296 = arith.mulf %293, %295 : vector<8x512xbf16>
    %c184_260 = arith.constant 184 : index
    %c0_261 = arith.constant 0 : index
    %297 = vector.load %arg6[%c184_260, %c0_261] : memref<224x512xbf16, #tpu.memory_space<vmem>>, vector<8x512xbf16>
    tpu.vector_store %arg6[%c184_260, %c0_261], %296 {strides = array<i32>} : memref<224x512xbf16, #tpu.memory_space<vmem>>, vector<8x512xbf16>,
    %c0_262 = arith.constant 0 : index
    %c199_263 = arith.constant 199 : index
    %298 = vector.load %arg8[%c0_262, %c199_263] : memref<8x768xbf16, #tpu.memory_space<vmem>>, vector<8x512xbf16>
    %c24_264 = arith.constant 24 : index
    %c0_265 = arith.constant 0 : index
    %299 = vector.load %arg1[%c24_264, %c0_265] : memref<27x512xbf16, #tpu.memory_space<vmem>>, vector<1x512xbf16>
    %300 = vector.broadcast %299 : vector<1x512xbf16> to vector<8x512xbf16>
    %301 = arith.mulf %298, %300 : vector<8x512xbf16>
    %c192_266 = arith.constant 192 : index
    %c0_267 = arith.constant 0 : index
    %302 = vector.load %arg6[%c192_266, %c0_267] : memref<224x512xbf16, #tpu.memory_space<vmem>>, vector<8x512xbf16>
    tpu.vector_store %arg6[%c192_266, %c0_267], %301 {strides = array<i32>} : memref<224x512xbf16, #tpu.memory_space<vmem>>, vector<8x512xbf16>,
    %c0_268 = arith.constant 0 : index
    %c200_269 = arith.constant 200 : index
    %303 = vector.load %arg8[%c0_268, %c200_269] : memref<8x768xbf16, #tpu.memory_space<vmem>>, vector<8x512xbf16>
    %c25_270 = arith.constant 25 : index
    %c0_271 = arith.constant 0 : index
    %304 = vector.load %arg1[%c25_270, %c0_271] : memref<27x512xbf16, #tpu.memory_space<vmem>>, vector<1x512xbf16>
    %305 = vector.broadcast %304 : vector<1x512xbf16> to vector<8x512xbf16>
    %306 = arith.mulf %303, %305 : vector<8x512xbf16>
    %c200_272 = arith.constant 200 : index
    %c0_273 = arith.constant 0 : index
    %307 = vector.load %arg6[%c200_272, %c0_273] : memref<224x512xbf16, #tpu.memory_space<vmem>>, vector<8x512xbf16>
    tpu.vector_store %arg6[%c200_272, %c0_273], %306 {strides = array<i32>} : memref<224x512xbf16, #tpu.memory_space<vmem>>, vector<8x512xbf16>,
    %c0_274 = arith.constant 0 : index
    %c201_275 = arith.constant 201 : index
    %308 = vector.load %arg8[%c0_274, %c201_275] : memref<8x768xbf16, #tpu.memory_space<vmem>>, vector<8x512xbf16>
    %c26_276 = arith.constant 26 : index
    %c0_277 = arith.constant 0 : index
    %309 = vector.load %arg1[%c26_276, %c0_277] : memref<27x512xbf16, #tpu.memory_space<vmem>>, vector<1x512xbf16>
    %310 = vector.broadcast %309 : vector<1x512xbf16> to vector<8x512xbf16>
    %311 = arith.mulf %308, %310 : vector<8x512xbf16>
    %c208 = arith.constant 208 : index
    %c0_278 = arith.constant 0 : index
    %312 = vector.load %arg6[%c208, %c0_278] : memref<224x512xbf16, #tpu.memory_space<vmem>>, vector<8x512xbf16>
    tpu.vector_store %arg6[%c208, %c0_278], %311 {strides = array<i32>} : memref<224x512xbf16, #tpu.memory_space<vmem>>, vector<8x512xbf16>,
    %c0_279 = arith.constant 0 : index
    %c0_280 = arith.constant 0 : index
    %313 = vector.load %arg4[%c0_279, %c0_280] : memref<8x224xbf16, #tpu.memory_space<vmem>>, vector<8x224xbf16>
    %c0_281 = arith.constant 0 : index
    %c0_282 = arith.constant 0 : index
    %314 = vector.load %arg6[%c0_281, %c0_282] : memref<224x512xbf16, #tpu.memory_space<vmem>>, vector<224x512xbf16>
    %cst_283 = arith.constant dense<0.000000e+00> : vector<8x512xf32>
    %315 = tpu.matmul %313, %314, %cst_283 {dimension_numbers = #tpu.dot_dimension_numbers<[1], [0], [0], [1], [0, 0, 1, 1], [], []>} : vector<8x224xbf16>, vector<224x512xbf16>, vector<8x512xf32> -> vector<8x512xf32>
    %cst_284 = arith.constant dense<0.000000e+00> : vector<8xf32>
    %316 = vector.multi_reduction <add>, %315, %cst_284 [1] : vector<8x512xf32> to vector<8xf32>
    %317 = vector.shape_cast %316 : vector<8xf32> to vector<8x1xf32>
    %318 = arith.mulf %315, %315 : vector<8x512xf32>
    %cst_285 = arith.constant dense<0.000000e+00> : vector<8xf32>
    %319 = vector.multi_reduction <add>, %318, %cst_285 [1] : vector<8x512xf32> to vector<8xf32>
    %320 = vector.shape_cast %319 : vector<8xf32> to vector<8x1xf32>
    %cst_286 = arith.constant 0.001953125 : f32
    %321 = vector.broadcast %cst_286 : f32 to vector<8x1xf32>
    %322 = arith.mulf %317, %321 : vector<8x1xf32>
    %cst_287 = arith.constant 0.001953125 : f32
    %323 = vector.broadcast %cst_287 : f32 to vector<8x1xf32>
    %324 = arith.mulf %320, %323 : vector<8x1xf32>
    %325 = arith.mulf %322, %322 : vector<8x1xf32>
    %326 = arith.subf %324, %325 : vector<8x1xf32>
    %cst_288 = arith.constant 0.000000e+00 : f32
    %327 = vector.broadcast %cst_288 : f32 to vector<8x1xf32>
    %328 = arith.maximumf %326, %327 : vector<8x1xf32>
    %329 = vector.broadcast %322 : vector<8x1xf32> to vector<8x512xf32>
    %330 = arith.subf %315, %329 : vector<8x512xf32>
    %cst_289 = arith.constant 9.99999974E-6 : f32
    %331 = vector.broadcast %cst_289 : f32 to vector<8x1xf32>
    %332 = arith.addf %328, %331 : vector<8x1xf32>
    %333 = math.rsqrt %332 : vector<8x1xf32>
    %334 = vector.broadcast %333 : vector<8x1xf32> to vector<8x512xf32>
    %335 = arith.mulf %330, %334 : vector<8x512xf32>
    %cst_290 = arith.constant 0.000000e+00 : f32
    %336 = vector.broadcast %cst_290 : f32 to vector<8x512xf32>
    %337 = arith.maximumf %335, %336 : vector<8x512xf32>
    %c0_291 = arith.constant 0 : index
    %c0_292 = arith.constant 0 : index
    %c0_293 = arith.constant 0 : index
    %338 = vector.load %arg5[%c0_291, %c0_292, %c0_293] : memref<1x8x512xf32, #tpu.memory_space<vmem>>, vector<1x8x512xf32>
    %339 = vector.shape_cast %338 : vector<1x8x512xf32> to vector<8x512xf32>
    %340 = vector.shape_cast %337 : vector<8x512xf32> to vector<1x8x512xf32>
    tpu.vector_store %arg5[%c0_291, %c0_292, %c0_293], %340 {strides = array<i32>} : memref<1x8x512xf32, #tpu.memory_space<vmem>>, vector<1x8x512xf32>,
    return
  }
  func.func @transform_0(%arg0: i32) -> (i32, i32) {
    %c0_i32 = arith.constant 0 : i32
    %c0_i32_0 = arith.constant 0 : i32
    %c0_i32_1 = arith.constant 0 : i32
    return %c0_i32, %c0_i32_0 : i32, i32
  }
  func.func @transform_1(%arg0: i32) -> (i32, i32, i32) {
    %c0_i32 = arith.constant 0 : i32
    %c0_i32_0 = arith.constant 0 : i32
    %c0_i32_1 = arith.constant 0 : i32
    return %arg0, %c0_i32, %c0_i32_0 : i32, i32, i32
  }
  func.func @transform_2(%arg0: i32) -> (i32, i32) {
    %c0_i32 = arith.constant 0 : i32
    %c0_i32_0 = arith.constant 0 : i32
    %c0_i32_1 = arith.constant 0 : i32
    return %c0_i32, %c0_i32_0 : i32, i32
  }
  func.func @transform_3(%arg0: i32) -> (i32, i32) {
    %c0_i32 = arith.constant 0 : i32
    %c0_i32_0 = arith.constant 0 : i32
    %c0_i32_1 = arith.constant 0 : i32
    return %c0_i32, %c0_i32_0 : i32, i32
  }
  func.func @transform_4(%arg0: i32) -> (i32, i32, i32) {
    %c0_i32 = arith.constant 0 : i32
    %c0_i32_0 = arith.constant 0 : i32
    %c0_i32_1 = arith.constant 0 : i32
    return %arg0, %c0_i32, %c0_i32_0 : i32, i32, i32
  }
}

</mosaic_0001>

<llo_original>
// kernel: double_conv_block.1
$region0: #{double_conv_block.1}
  #allocation0 [shape = 'u32[]', space=smem, size = 0x4, offset = 0x4, fixed_abs, tag = 'smem constant byte address 0x4 - core index']
  #allocation1 [shape = 'u32[144,128]{1,0:T(1,128)}', space=vmem, size = 0x12000, scoped, tag = 'internal scratch']
  #allocation2 [shape = 'bf16[224,512]{1,0:T(8,128)(2,1)}', space=vmem, size = 0x38000, scoped, tag = 'scratch operand']
  #allocation3 [shape = 'bf16[4,768]{1,0:T(4,128)(2,1)}', space=vmem, size = 0x1800, scoped, tag = 'scratch operand']
  #allocation4 [shape = 'bf16[8,768]{1,0:T(8,128)(2,1)}', space=vmem, size = 0x3000, scoped, tag = 'scratch operand']
  %s0 = inlined_call_operand.vmem [shape: bf16[27,512], index: 0, kind: input, shape index: {}]
  %s1 = inlined_call_operand.vmem [shape: f32[2,4,512], index: 1, kind: input, shape index: {}]
  %s2 = inlined_call_operand.vmem [shape: bf16[8,112], index: 2, kind: input, shape index: {}]
  %s3 = inlined_call_operand.vmem [shape: bf16[8,224], index: 3, kind: input, shape index: {}]
  %s4 = inlined_call_operand.vmem [shape: f32[2,8,512], index: 4, kind: output, shape index: {}]
  %s5 = sld [smem:[#allocation0]]
  $region49: #{double_conv_block.1} parent=0
    _
  %s7 = ssub.s32 1, %s5
  %s8 = scalar_select 0, %s7, %s5
  loop: start=0, step=1, limit=4
  $region2: #{double_conv_block.1} parent=0 // loop_pre_header
    _
  $region3: #{double_conv_block.1} parent=0 // loop_header
    %s10 = sphi 0, %s14
    %p11 = scmp.ge.s32.totalorder %s10, 4
    %s18 = sphi 0, %s18
    %s20 = sphi 0, %s18
    %s21 = sphi 0, %s20
    %s35 = sphi 0, %s21
    %s41 = sphi 0, %s43
    %s44 = sphi 0, %s41
    %s45 = sphi 0, %s44
    %s61 = sphi 0, %s45
    %s65 = sphi 0, %s65
    %s67 = sphi 0, %s65
    %s68 = sphi 0, %s67
    %s82 = sphi 0, %s68
    %s86 = sphi 0, %s86
    %s88 = sphi 0, %s86
    %s89 = sphi 0, %s88
    %s103 = sphi 0, %s89
    %s109 = sphi 0, %s111
    %s112 = sphi 0, %s109
    %s113 = sphi 0, %s112
    %s129 = sphi 0, %s113
  $region4: #{double_conv_block.1} parent=0 // loop_header_branch
    %13 = sbr.rel (%p11) target = $region8
  $region5: #{double_conv_block.1} parent=0 // loop_body
    %s15 = ssub.s32 %s10, 1
    %s16 = ssub.s32 %s10, 2
    %s17 = sadd.s32 %s10, 1
    %s19 = sadd.s32 %s18, 1
    %p22 = scmp.eq.s32.totalorder %s10, 1
    %p23 = scmp.ne.s32.totalorder %s18, %s20
    %p24 = scmp.eq.s32.totalorder %s10, 0
    %p25 = por %p23, %p24
    %p26 = scmp.ne.s32.totalorder %s18, %s20
    %p27 = scmp.eq.s32.totalorder %s15, 1
    %p28 = por %p26, %p27
    %p29 = scmp.ne.s32.totalorder %s20, %s21
    %p30 = scmp.eq.s32.totalorder %s15, 0
    %p31 = por %p29, %p30
    %p32 = scmp.ne.s32.totalorder %s20, %s21
    %p33 = scmp.eq.s32.totalorder %s16, 1
    %p34 = por %p32, %p33
    %p36 = scmp.ne.s32.totalorder %s21, %s35
    %p37 = scmp.eq.s32.totalorder %s16, 0
    %p38 = por %p36, %p37
    %s39 = ssub.s32 %s10, %s17
    %p40 = scmp.eq.s32.totalorder %s39, 0
    %s42 = sadd.s32 %s41, 1
    %s43 = scalar_select %p40, %s41, %s42
    %p46 = pneg %p40
    %p47 = scmp.eq.s32.totalorder %s10, 1
    %p48 = por %p46, %p47
    %p49 = scmp.ne.s32.totalorder %s41, %s44
    %p50 = scmp.eq.s32.totalorder %s10, 0
    %p51 = por %p49, %p50
    %p52 = scmp.ne.s32.totalorder %s41, %s44
    %p53 = scmp.eq.s32.totalorder %s15, 1
    %p54 = por %p52, %p53
    %p55 = scmp.ne.s32.totalorder %s44, %s45
    %p56 = scmp.eq.s32.totalorder %s15, 0
    %p57 = por %p55, %p56
    %p58 = scmp.ne.s32.totalorder %s44, %s45
    %p59 = scmp.eq.s32.totalorder %s16, 1
    %p60 = por %p58, %p59
    %p62 = scmp.ne.s32.totalorder %s45, %s61
    %p63 = scmp.eq.s32.totalorder %s16, 0
    %p64 = por %p62, %p63
    %s66 = sadd.s32 %s65, 1
    %p69 = scmp.eq.s32.totalorder %s10, 1
    %p70 = scmp.ne.s32.totalorder %s65, %s67
    %p71 = scmp.eq.s32.totalorder %s10, 0
    %p72 = por %p70, %p71
    %p73 = scmp.ne.s32.totalorder %s65, %s67
    %p74 = scmp.eq.s32.totalorder %s15, 1
    %p75 = por %p73, %p74
    %p76 = scmp.ne.s32.totalorder %s67, %s68
    %p77 = scmp.eq.s32.totalorder %s15, 0
    %p78 = por %p76, %p77
    %p79 = scmp.ne.s32.totalorder %s67, %s68
    %p80 = scmp.eq.s32.totalorder %s16, 1
    %p81 = por %p79, %p80
    %p83 = scmp.ne.s32.totalorder %s68, %s82
    %p84 = scmp.eq.s32.totalorder %s16, 0
    %p85 = por %p83, %p84
    %s87 = sadd.s32 %s86, 1
    %p90 = scmp.eq.s32.totalorder %s10, 1
    %p91 = scmp.ne.s32.totalorder %s86, %s88
    %p92 = scmp.eq.s32.totalorder %s10, 0
    %p93 = por %p91, %p92
    %p94 = scmp.ne.s32.totalorder %s86, %s88
    %p95 = scmp.eq.s32.totalorder %s15, 1
    %p96 = por %p94, %p95
    %p97 = scmp.ne.s32.totalorder %s88, %s89
    %p98 = scmp.eq.s32.totalorder %s15, 0
    %p99 = por %p97, %p98
    %p100 = scmp.ne.s32.totalorder %s88, %s89
    %p101 = scmp.eq.s32.totalorder %s16, 1
    %p102 = por %p100, %p101
    %p104 = scmp.ne.s32.totalorder %s89, %s103
    %p105 = scmp.eq.s32.totalorder %s16, 0
    %p106 = por %p104, %p105
    %s107 = ssub.s32 %s10, %s17
    %p108 = scmp.eq.s32.totalorder %s107, 0
    %s110 = sadd.s32 %s109, 1
    %s111 = scalar_select %p108, %s109, %s110
    %p114 = pneg %p108
    %p115 = scmp.eq.s32.totalorder %s10, 1
    %p116 = por %p114, %p115
    %p117 = scmp.ne.s32.totalorder %s109, %s112
    %p118 = scmp.eq.s32.totalorder %s10, 0
    %p119 = por %p117, %p118
    %p120 = scmp.ne.s32.totalorder %s109, %s112
    %p121 = scmp.eq.s32.totalorder %s15, 1
    %p122 = por %p120, %p121
    %p123 = scmp.ne.s32.totalorder %s112, %s113
    %p124 = scmp.eq.s32.totalorder %s15, 0
    %p125 = por %p123, %p124
    %p126 = scmp.ne.s32.totalorder %s112, %s113
    %p127 = scmp.eq.s32.totalorder %s16, 1
    %p128 = por %p126, %p127
    %p130 = scmp.ne.s32.totalorder %s113, %s129
    %p131 = scmp.eq.s32.totalorder %s16, 0
    %p132 = por %p130, %p131
    %p133 = scmp.le.s32.totalorder 1, %s10
    %p134 = scmp.lt.s32.totalorder %s10, 3
    %p135 = pnand %p133, %p134
    %p136 = pneg %p135
    // Predicated region
    $region9: #{double_conv_block.1} parent=5 // pred_check
      _
    $region10: #{double_conv_block.1} parent=5 // pred_check_branch
      %138 = sbr.rel (%p135) target = $region12
    $region11: #{double_conv_block.1} parent=5 // pred_region
      %s139 = ssub.s32 %s10, 1
      // Predicated region
      $region13: #{double_conv_block.1} parent=11 // pred_check
        %p140 = pneg %p31
      $region14: #{double_conv_block.1} parent=11 // pred_check_branch
        %142 = sbr.rel (%p140) target = $region16
      $region15: #{double_conv_block.1} parent=11 // pred_region
        _
      $region16: #{double_conv_block.1} parent=11 // pred_fallthru
        _
      // Predicated region
      $region17: #{double_conv_block.1} parent=11 // pred_check
        %p143 = pneg %p78
      $region18: #{double_conv_block.1} parent=11 // pred_check_branch
        %145 = sbr.rel (%p143) target = $region20
      $region19: #{double_conv_block.1} parent=11 // pred_region
        _
      $region20: #{double_conv_block.1} parent=11 // pred_fallthru
        _
      // Predicated region
      $region21: #{double_conv_block.1} parent=11 // pred_check
        %p146 = pneg %p99
      $region22: #{double_conv_block.1} parent=11 // pred_check_branch
        %148 = sbr.rel (%p146) target = $region24
      $region23: #{double_conv_block.1} parent=11 // pred_region
        _
      $region24: #{double_conv_block.1} parent=11 // pred_fallthru
        _
    $region12: #{double_conv_block.1} parent=5 // pred_fallthru
      _
    %p149 = scmp.lt.s32.totalorder %s10, 2
    // Predicated region
    $region25: #{double_conv_block.1} parent=5 // pred_check
      %p150 = pneg %p149
    $region26: #{double_conv_block.1} parent=5 // pred_check_branch
      %152 = sbr.rel (%p150) target = $region28
    $region27: #{double_conv_block.1} parent=5 // pred_region
      // Predicated region
      $region29: #{double_conv_block.1} parent=27 // pred_check
        %p153 = pneg %p51
      $region30: #{double_conv_block.1} parent=27 // pred_check_branch
        %155 = sbr.rel (%p153) target = $region32
      $region31: #{double_conv_block.1} parent=27 // pred_region
        %p156 = scmp.lt.s32.totalorder %s10, 1
        %s157 = scalar_select %p156, %s10, 1
        %s158 = smul.addr %s157, 4
        %s159 = smul.addr %s158, 4
        %s160 = scalar_lea.vmem %s1, %s159
      $region32: #{double_conv_block.1} parent=27 // pred_fallthru
        _
    $region28: #{double_conv_block.1} parent=5 // pred_fallthru
      _
    %p161 = scmp.le.s32.totalorder 1, %s10
    %p162 = scmp.lt.s32.totalorder %s10, 3
    %p163 = pnand %p161, %p162
    %p164 = pneg %p163
    // Predicated region
    $region33: #{double_conv_block.1} parent=5 // pred_check
      _
    $region34: #{double_conv_block.1} parent=5 // pred_check_branch
      %166 = sbr.rel (%p163) target = $region36
    $region35: #{double_conv_block.1} parent=5 // pred_region
      %s167 = ssub.s32 %s10, 1
      %p168 = pneg %p31
      %p169 = pneg %p28
      %p170 = scmp.lt.s32.totalorder %s15, 1
      %s171 = scalar_select %p170, %s15, 1
      %s172 = smul.addr %s171, 4
      %s173 = smul.addr %s172, 4
      %s174 = scalar_lea.vmem %s1, %s173
      %p175 = pneg %p57
      %p176 = pneg %p54
      %p177 = pneg %p78
      %p178 = pneg %p75
      %p179 = pneg %p99
      %p180 = pneg %p96
      %p181 = pneg %p125
      %p182 = pneg %p122
      %p183 = scmp.lt.s32.totalorder %s15, 1
      %s184 = scalar_select %p183, %s15, 1
      %s185 = smul.addr %s184, 4
      %s186 = smul.addr %s185, 8
      %s187 = scalar_lea.vmem %s4, %s186
      %p188 = scmp.lt.s32.totalorder %s15, 1
      %s189 = scalar_select %p188, %s15, 1
      %s190 = smul.addr %s189, 4
      %s191 = smul.addr %s190, 4
      %s192 = scalar_lea.vmem %s1, %s191
      %p193 = scmp.lt.s32.totalorder %s15, 1
      %s194 = scalar_select %p193, %s15, 1
      %s195 = smul.addr %s194, 4
      %s196 = smul.addr %s195, 8
      %s197 = scalar_lea.vmem %s4, %s196
      %199 = vst [vmem:[#allocation3] sm:$0x3] 0
      %200 = vst [vmem:[#allocation3 + $0xa] sm:$0x3] 0
      %v201 = vld [vmem:[%s192] sm:$0xff]
      %v202 = vld [vmem:[%s192 + $0x8] sm:$0xff]
      %v205 = vcombine.high %v201, %v201
      %v206 = vcombine.high %v202, %v202
      %v209 = vpack.c.bf16 %v201, %v201
      %v210 = vpack.c.bf16 %v205, %v205
      %v211 = vpack.c.bf16 %v202, %v202
      %v212 = vpack.c.bf16 %v206, %v206
      %v217 = vcombine.low %v209, %v210
      %v218 = vcombine.low %v211, %v212
      %v220 = vunpack.c.l.s4 1983009808
      %v221 = vunpack.c.0.s8 %v220
      %v222 = vlaneseq
      %v223 = vshrl.u32 %v222, 7
      %v224 = vsub.s32 %v221, %v223
      %v225 = vrot.slane %v217, %v224
      %v227 = vunpack.c.l.s4 1983009808
      %v228 = vunpack.c.0.s8 %v227
      %v229 = vlaneseq
      %v230 = vshrl.u32 %v229, 7
      %v231 = vsub.s32 %v228, %v230
      %v232 = vrot.slane %v218, %v231
      %v233 = vcombine.low %v225, %v232
      %235 = vst [vmem:[#allocation3 + $0x2] sm:$0xff] %v233
      %236 = vst [vmem:[#allocation4] sm:$0xf] 0
      %237 = vst [vmem:[#allocation4 + $0x14] sm:$0xf] 0
      %238 = vst [vmem:[#allocation2 + $0xd0] sm:$0xcc] 0
      %239 = vst [vmem:[#allocation2 + $0xd8] sm:$0xcc] 0
      %v240 = vld [vmem:[#allocation3] sm:$0xff]
      %v241 = vld [vmem:[#allocation3 + $0x8] sm:$0x3]
      %v242 = vld [vmem:[%s0] sm:$0x11]
      %v243 = vld [vmem:[%s0 + $0x8] sm:$0x11]
      %v246 = vunpack.c.l.b16 %v242
      %v247 = vunpack.c.h.b16 %v242
      %v248 = vunpack.c.l.b16 %v243
      %v249 = vunpack.c.h.b16 %v243
      %v250 = vpack.c.b16 %v246, %v246
      %v251 = vpack.c.b16 %v247, %v247
      %v252 = vpack.c.b16 %v248, %v248
      %v253 = vpack.c.b16 %v249, %v249
      %v255 = vpack.i.b16 %v250, %v250
      %v257 = vlaneseq
      %v258 = vshrl.u32 %v257, 7
      %v259 = vsub.s32 0, %v258
      %v260 = vrot.slane %v255, %v259
      %v262 = vpack.i.b16 %v251, %v251
      %v264 = vlaneseq
      %v265 = vshrl.u32 %v264, 7
      %v266 = vsub.s32 0, %v265
      %v267 = vrot.slane %v262, %v266
      %v269 = vpack.i.b16 %v252, %v252
      %v271 = vlaneseq
      %v272 = vshrl.u32 %v271, 7
      %v273 = vsub.s32 0, %v272
      %v274 = vrot.slane %v269, %v273
      %v276 = vpack.i.b16 %v253, %v253
      %v278 = vlaneseq
      %v279 = vshrl.u32 %v278, 7
      %v280 = vsub.s32 0, %v279
      %v281 = vrot.slane %v276, %v280
      %v286 = vcombine.low %v260, %v267
      %v287 = vcombine.low %v274, %v281
      %v289 = vunpack.c.l.s4 1983009808
      %v290 = vunpack.c.0.s8 %v289
      %v291 = vlaneseq
      %v292 = vshrl.u32 %v291, 7
      %v293 = vsub.s32 %v290, %v292
      %v294 = vrot.slane %v286, %v293
      %v296 = vunpack.c.l.s4 1983009808
      %v297 = vunpack.c.0.s8 %v296
      %v298 = vlaneseq
      %v299 = vshrl.u32 %v298, 7
      %v300 = vsub.s32 %v297, %v299
      %v301 = vrot.slane %v287, %v300
      %v302 = vcombine.low %v294, %v301
      %303 = vrot.lane.b32.xlu0 %v302, 55
      %v304 = vpop.permute.xlu0 %303
      %v305 = vrot.slane %v304, 6
      %vm306 = vcmask 449536
      %v307 = vsel %vm306, %v305, %v304
      %v310 = vmul.bf16 %v240, %v307
      %v311 = vmul.bf16 %v241, %v305
      %v314 = vcombine.high %v310, %v310
      %v316 = vunpack.c.l.s4 1983009808
      %v317 = vunpack.c.0.s8 %v316
      %v318 = vlaneseq
      %v319 = vshrl.u32 %v318, 7
      %v320 = vsub.s32 %v317, %v319
      %v321 = vrot.slane %v310, %v320
      %v323 = vunpack.c.l.s4 1983009808
      %v324 = vunpack.c.0.s8 %v323
      %v325 = vlaneseq
      %v326 = vshrl.u32 %v325, 7
      %v327 = vsub.s32 %v324, %v326
      %v328 = vrot.slane %v314, %v327
      %v330 = vunpack.c.l.s4 1983009808
      %v331 = vunpack.c.0.s8 %v330
      %v332 = vlaneseq
      %v333 = vshrl.u32 %v332, 7
      %v334 = vsub.s32 %v331, %v333
      %v335 = vrot.slane %v311, %v334
      %336 = vrot.lane.b32.xlu0 %v321, 73
      %v337 = vpop.permute.xlu0 %336
      %338 = vrot.lane.b32.xlu0 %v328, 73
      %v339 = vpop.permute.xlu0 %338
      %340 = vrot.lane.b32.xlu0 %v335, 73
      %v341 = vpop.permute.xlu0 %340
      %v342 = vrot.slane %v337, 4
      %v343 = vrot.slane %v339, 4
      %v344 = vrot.slane %v341, 4
      %vm345 = vcmask 1043456
      %v346 = vsel %vm345, %v342, %v343
      %vm347 = vcmask 596992
      %v348 = vsel %vm347, %v337, %v346
      %v349 = vsel %vm345, %v343, %v344
      %v350 = vsel %vm347, %v339, %v349
      %353 = vst [vmem:[#allocation2] sm:$0x33] %v348
      %354 = vst [vmem:[#allocation2 + $0x8] sm:$0x33] %v350
      %v355 = vld [vmem:[#allocation3] sm:$0xff]
      %v356 = vld [vmem:[#allocation3 + $0x8] sm:$0x3]
      %v357 = vld [vmem:[%s0] sm:$0x11]
      %v358 = vld [vmem:[%s0 + $0x8] sm:$0x11]
      %v361 = vunpack.c.l.b16 %v357
      %v362 = vunpack.c.h.b16 %v357
      %v363 = vunpack.c.l.b16 %v358
      %v364 = vunpack.c.h.b16 %v358
      %v365 = vpack.c.b16 %v361, %v361
      %v366 = vpack.c.b16 %v362, %v362
      %v367 = vpack.c.b16 %v363, %v363
      %v368 = vpack.c.b16 %v364, %v364
      %v370 = vshrl.u32 %v365, 16
      %v371 = vpack.i.b16 %v370, %v370
      %v373 = vlaneseq
      %v374 = vshrl.u32 %v373, 7
      %v375 = vsub.s32 0, %v374
      %v376 = vrot.slane %v371, %v375
      %v378 = vshrl.u32 %v366, 16
      %v379 = vpack.i.b16 %v378, %v378
      %v381 = vlaneseq
      %v382 = vshrl.u32 %v381, 7
      %v383 = vsub.s32 0, %v382
      %v384 = vrot.slane %v379, %v383
      %v386 = vshrl.u32 %v367, 16
      %v387 = vpack.i.b16 %v386, %v386
      %v389 = vlaneseq
      %v390 = vshrl.u32 %v389, 7
      %v391 = vsub.s32 0, %v390
      %v392 = vrot.slane %v387, %v391
      %v394 = vshrl.u32 %v368, 16
      %v395 = vpack.i.b16 %v394, %v394
      %v397 = vlaneseq
      %v398 = vshrl.u32 %v397, 7
      %v399 = vsub.s32 0, %v398
      %v400 = vrot.slane %v395, %v399
      %v405 = vcombine.low %v376, %v384
      %v406 = vcombine.low %v392, %v400
      %v408 = vunpack.c.l.s4 1983009808
      %v409 = vunpack.c.0.s8 %v408
      %v410 = vlaneseq
      %v411 = vshrl.u32 %v410, 7
      %v412 = vsub.s32 %v409, %v411
      %v413 = vrot.slane %v405, %v412
      %v415 = vunpack.c.l.s4 1983009808
      %v416 = vunpack.c.0.s8 %v415
      %v417 = vlaneseq
      %v418 = vshrl.u32 %v417, 7
      %v419 = vsub.s32 %v416, %v418
      %v420 = vrot.slane %v406, %v419
      %v421 = vcombine.low %v413, %v420
      %422 = vrot.lane.b32.xlu0 %v421, 56
      %v423 = vpop.permute.xlu0 %422
      %v424 = vrot.slane %v423, 6
      %vm425 = vcmask 457728
      %v426 = vsel %vm425, %v424, %v423
      %v429 = vmul.bf16 %v355, %v426
      %v430 = vmul.bf16 %v356, %v424
      %v433 = vcombine.low %v429, %v429
      %v435 = vunpack.c.l.s4 1983009808
      %v436 = vunpack.c.0.s8 %v435
      %v437 = vlaneseq
      %v438 = vshrl.u32 %v437, 7
      %v439 = vsub.s32 %v436, %v438
      %v440 = vrot.slane %v433, %v439
      %v442 = vunpack.c.l.s4 1983009808
      %v443 = vunpack.c.0.s8 %v442
      %v444 = vlaneseq
      %v445 = vshrl.u32 %v444, 7
      %v446 = vsub.s32 %v443, %v445
      %v447 = vrot.slane %v429, %v446
      %v448 = vcombine.low %v430, %v430
      %v450 = vunpack.c.l.s4 1983009808
      %v451 = vunpack.c.0.s8 %v450
      %v452 = vlaneseq
      %v453 = vshrl.u32 %v452, 7
      %v454 = vsub.s32 %v451, %v453
      %v455 = vrot.slane %v448, %v454
      %456 = vrot.lane.b32.xlu0 %v440, 72
      %v457 = vpop.permute.xlu0 %456
      %458 = vrot.lane.b32.xlu0 %v447, 72
      %v459 = vpop.permute.xlu0 %458
      %460 = vrot.lane.b32.xlu0 %v455, 72
      %v461 = vpop.permute.xlu0 %460
      %v462 = vrot.slane %v457, 4
      %v463 = vrot.slane %v459, 4
      %v464 = vrot.slane %v461, 4
      %v465 = vsel %vm345, %v462, %v463
      %vm466 = vcmask 588800
      %v467 = vsel %vm466, %v457, %v465
      %v468 = vsel %vm345, %v463, %v464
      %v469 = vsel %vm466, %v459, %v468
      %472 = vst [vmem:[#allocation2] sm:$0xcc] %v467
      %473 = vst [vmem:[#allocation2 + $0x8] sm:$0xcc] %v469
      %v474 = vld [vmem:[#allocation3] sm:$0xff]
      %v475 = vld [vmem:[#allocation3 + $0x8] sm:$0x3]
      %v476 = vld [vmem:[%s0] sm:$0x22]
      %v477 = vld [vmem:[%s0 + $0x8] sm:$0x22]
      %v480 = vunpack.c.l.b16 %v476
      %v481 = vunpack.c.h.b16 %v476
      %v482 = vunpack.c.l.b16 %v477
      %v483 = vunpack.c.h.b16 %v477
      %v484 = vpack.c.b16 %v480, %v480
      %v485 = vpack.c.b16 %v481, %v481
      %v486 = vpack.c.b16 %v482, %v482
      %v487 = vpack.c.b16 %v483, %v483
      %v489 = vpack.i.b16 %v484, %v484
      %v491 = vlaneseq
      %v492 = vshrl.u32 %v491, 7
      %v493 = vsub.s32 1, %v492
      %v494 = vrot.slane %v489, %v493
      %v496 = vpack.i.b16 %v485, %v485
      %v498 = vlaneseq
      %v499 = vshrl.u32 %v498, 7
      %v500 = vsub.s32 1, %v499
      %v501 = vrot.slane %v496, %v500
      %v503 = vpack.i.b16 %v486, %v486
      %v505 = vlaneseq
      %v506 = vshrl.u32 %v505, 7
      %v507 = vsub.s32 1, %v506
      %v508 = vrot.slane %v503, %v507
      %v510 = vpack.i.b16 %v487, %v487
      %v512 = vlaneseq
      %v513 = vshrl.u32 %v512, 7
      %v514 = vsub.s32 1, %v513
      %v515 = vrot.slane %v510, %v514
      %v520 = vcombine.low %v494, %v501
      %v521 = vcombine.low %v508, %v515
      %v523 = vunpack.c.l.s4 1983009808
      %v524 = vunpack.c.0.s8 %v523
      %v525 = vlaneseq
      %v526 = vshrl.u32 %v525, 7
      %v527 = vsub.s32 %v524, %v526
      %v528 = vrot.slane %v520, %v527
      %v530 = vunpack.c.l.s4 1983009808
      %v531 = vunpack.c.0.s8 %v530
      %v532 = vlaneseq
      %v533 = vshrl.u32 %v532, 7
      %v534 = vsub.s32 %v531, %v533
      %v535 = vrot.slane %v521, %v534
      %v536 = vcombine.low %v528, %v535
      %537 = vrot.lane.b32.xlu0 %v536, 57
      %v538 = vpop.permute.xlu0 %537
      %v539 = vrot.slane %v538, 6
      %vm540 = vcmask 465920
      %v541 = vsel %vm540, %v539, %v538
      %v544 = vmul.bf16 %v474, %v541
      %v545 = vmul.bf16 %v475, %v539
      %v548 = vcombine.high %v544, %v544
      %v550 = vunpack.c.l.s4 1983009808
      %v551 = vunpack.c.0.s8 %v550
      %v552 = vlaneseq
      %v553 = vshrl.u32 %v552, 7
      %v554 = vsub.s32 %v551, %v553
      %v555 = vrot.slane %v544, %v554
      %v557 = vunpack.c.l.s4 1983009808
      %v558 = vunpack.c.0.s8 %v557
      %v559 = vlaneseq
      %v560 = vshrl.u32 %v559, 7
      %v561 = vsub.s32 %v558, %v560
      %v562 = vrot.slane %v548, %v561
      %v564 = vunpack.c.l.s4 1983009808
      %v565 = vunpack.c.0.s8 %v564
      %v566 = vlaneseq
      %v567 = vshrl.u32 %v566, 7
      %v568 = vsub.s32 %v565, %v567
      %v569 = vrot.slane %v545, %v568
      %570 = vrot.lane.b32.xlu0 %v555, 71
      %v571 = vpop.permute.xlu0 %570
      %572 = vrot.lane.b32.xlu0 %v562, 71
      %v573 = vpop.permute.xlu0 %572
      %574 = vrot.lane.b32.xlu0 %v569, 71
      %v575 = vpop.permute.xlu0 %574
      %v576 = vrot.slane %v571, 4
      %v577 = vrot.slane %v573, 4
      %v578 = vrot.slane %v575, 4
      %v579 = vsel %vm345, %v576, %v577
      %vm580 = vcmask 580608
      %v581 = vsel %vm580, %v571, %v579
      %v582 = vsel %vm345, %v577, %v578
      %v583 = vsel %vm580, %v573, %v582
      %586 = vst [vmem:[#allocation2 + $0x10] sm:$0x33] %v581
      %587 = vst [vmem:[#allocation2 + $0x18] sm:$0x33] %v583
      %v588 = vld [vmem:[#allocation3] sm:$0xff]
      %v589 = vld [vmem:[#allocation3 + $0x8] sm:$0x3]
      %v590 = vld [vmem:[%s0] sm:$0x22]
      %v591 = vld [vmem:[%s0 + $0x8] sm:$0x22]
      %v594 = vunpack.c.l.b16 %v590
      %v595 = vunpack.c.h.b16 %v590
      %v596 = vunpack.c.l.b16 %v591
      %v597 = vunpack.c.h.b16 %v591
      %v598 = vpack.c.b16 %v594, %v594
      %v599 = vpack.c.b16 %v595, %v595
      %v600 = vpack.c.b16 %v596, %v596
      %v601 = vpack.c.b16 %v597, %v597
      %v603 = vshrl.u32 %v598, 16
      %v604 = vpack.i.b16 %v603, %v603
      %v606 = vlaneseq
      %v607 = vshrl.u32 %v606, 7
      %v608 = vsub.s32 1, %v607
      %v609 = vrot.slane %v604, %v608
      %v611 = vshrl.u32 %v599, 16
      %v612 = vpack.i.b16 %v611, %v611
      %v614 = vlaneseq
      %v615 = vshrl.u32 %v614, 7
      %v616 = vsub.s32 1, %v615
      %v617 = vrot.slane %v612, %v616
      %v619 = vshrl.u32 %v600, 16
      %v620 = vpack.i.b16 %v619, %v619
      %v622 = vlaneseq
      %v623 = vshrl.u32 %v622, 7
      %v624 = vsub.s32 1, %v623
      %v625 = vrot.slane %v620, %v624
      %v627 = vshrl.u32 %v601, 16
      %v628 = vpack.i.b16 %v627, %v627
      %v630 = vlaneseq
      %v631 = vshrl.u32 %v630, 7
      %v632 = vsub.s32 1, %v631
      %v633 = vrot.slane %v628, %v632
      %v638 = vcombine.low %v609, %v617
      %v639 = vcombine.low %v625, %v633
      %v641 = vunpack.c.l.s4 1983009808
      %v642 = vunpack.c.0.s8 %v641
      %v643 = vlaneseq
      %v644 = vshrl.u32 %v643, 7
      %v645 = vsub.s32 %v642, %v644
      %v646 = vrot.slane %v638, %v645
      %v648 = vunpack.c.l.s4 1983009808
      %v649 = vunpack.c.0.s8 %v648
      %v650 = vlaneseq
      %v651 = vshrl.u32 %v650, 7
      %v652 = vsub.s32 %v649, %v651
      %v653 = vrot.slane %v639, %v652
      %v654 = vcombine.low %v646, %v653
      %655 = vrot.lane.b32.xlu0 %v654, 63
      %v656 = vpop.permute.xlu0 %655
      %v657 = vrot.slane %v656, 6
      %vm658 = vcmask 515072
      %v659 = vsel %vm658, %v657, %v656
      %v662 = vmul.bf16 %v588, %v659
      %v663 = vmul.bf16 %v589, %v657
      %v666 = vcombine.low %v662, %v662
      %v668 = vunpack.c.l.s4 1983009808
      %v669 = vunpack.c.0.s8 %v668
      %v670 = vlaneseq
      %v671 = vshrl.u32 %v670, 7
      %v672 = vsub.s32 %v669, %v671
      %v673 = vrot.slane %v666, %v672
      %v675 = vunpack.c.l.s4 1983009808
      %v676 = vunpack.c.0.s8 %v675
      %v677 = vlaneseq
      %v678 = vshrl.u32 %v677, 7
      %v679 = vsub.s32 %v676, %v678
      %v680 = vrot.slane %v662, %v679
      %v681 = vcombine.low %v663, %v663
      %v683 = vunpack.c.l.s4 1983009808
      %v684 = vunpack.c.0.s8 %v683
      %v685 = vlaneseq
      %v686 = vshrl.u32 %v685, 7
      %v687 = vsub.s32 %v684, %v686
      %v688 = vrot.slane %v681, %v687
      %689 = vrot.lane.b32.xlu0 %v673, 65
      %v690 = vpop.permute.xlu0 %689
      %691 = vrot.lane.b32.xlu0 %v680, 65
      %v692 = vpop.permute.xlu0 %691
      %693 = vrot.lane.b32.xlu0 %v688, 65
      %v694 = vpop.permute.xlu0 %693
      %v695 = vrot.slane %v690, 4
      %v696 = vrot.slane %v692, 4
      %v697 = vrot.slane %v694, 4
      %v698 = vsel %vm345, %v695, %v696
      %vm699 = vcmask 531456
      %v700 = vsel %vm699, %v690, %v698
      %v701 = vsel %vm345, %v696, %v697
      %v702 = vsel %vm699, %v692, %v701
      %705 = vst [vmem:[#allocation2 + $0x10] sm:$0xcc] %v700
      %706 = vst [vmem:[#allocation2 + $0x18] sm:$0xcc] %v702
      %v707 = vld [vmem:[#allocation3] sm:$0xff]
      %v708 = vld [vmem:[#allocation3 + $0x8] sm:$0x3]
      %v709 = vld [vmem:[%s0] sm:$0x44]
      %v710 = vld [vmem:[%s0 + $0x8] sm:$0x44]
      %v713 = vunpack.c.l.b16 %v709
      %v714 = vunpack.c.h.b16 %v709
      %v715 = vunpack.c.l.b16 %v710
      %v716 = vunpack.c.h.b16 %v710
      %v717 = vpack.c.b16 %v713, %v713
      %v718 = vpack.c.b16 %v714, %v714
      %v719 = vpack.c.b16 %v715, %v715
      %v720 = vpack.c.b16 %v716, %v716
      %v722 = vpack.i.b16 %v717, %v717
      %v724 = vlaneseq
      %v725 = vshrl.u32 %v724, 7
      %v726 = vsub.s32 2, %v725
      %v727 = vrot.slane %v722, %v726
      %v729 = vpack.i.b16 %v718, %v718
      %v731 = vlaneseq
      %v732 = vshrl.u32 %v731, 7
      %v733 = vsub.s32 2, %v732
      %v734 = vrot.slane %v729, %v733
      %v736 = vpack.i.b16 %v719, %v719
      %v738 = vlaneseq
      %v739 = vshrl.u32 %v738, 7
      %v740 = vsub.s32 2, %v739
      %v741 = vrot.slane %v736, %v740
      %v743 = vpack.i.b16 %v720, %v720
      %v745 = vlaneseq
      %v746 = vshrl.u32 %v745, 7
      %v747 = vsub.s32 2, %v746
      %v748 = vrot.slane %v743, %v747
      %v753 = vcombine.low %v727, %v734
      %v754 = vcombine.low %v741, %v748
      %v756 = vunpack.c.l.s4 1983009808
      %v757 = vunpack.c.0.s8 %v756
      %v758 = vlaneseq
      %v759 = vshrl.u32 %v758, 7
      %v760 = vsub.s32 %v757, %v759
      %v761 = vrot.slane %v753, %v760
      %v763 = vunpack.c.l.s4 1983009808
      %v764 = vunpack.c.0.s8 %v763
      %v765 = vlaneseq
      %v766 = vshrl.u32 %v765, 7
      %v767 = vsub.s32 %v764, %v766
      %v768 = vrot.slane %v754, %v767
      %v769 = vcombine.low %v761, %v768
      %770 = vrot.lane.b32.xlu0 %v769, 64
      %v771 = vpop.permute.xlu0 %770
      %v772 = vrot.slane %v771, 6
      %vm773 = vcmask 523264
      %v774 = vsel %vm773, %v772, %v771
      %v777 = vmul.bf16 %v707, %v774
      %v778 = vmul.bf16 %v708, %v772
      %v781 = vcombine.high %v777, %v777
      %v783 = vunpack.c.l.s4 1983009808
      %v784 = vunpack.c.0.s8 %v783
      %v785 = vlaneseq
      %v786 = vshrl.u32 %v785, 7
      %v787 = vsub.s32 %v784, %v786
      %v788 = vrot.slane %v777, %v787
      %v790 = vunpack.c.l.s4 1983009808
      %v791 = vunpack.c.0.s8 %v790
      %v792 = vlaneseq
      %v793 = vshrl.u32 %v792, 7
      %v794 = vsub.s32 %v791, %v793
      %v795 = vrot.slane %v781, %v794
      %v797 = vunpack.c.l.s4 1983009808
      %v798 = vunpack.c.0.s8 %v797
      %v799 = vlaneseq
      %v800 = vshrl.u32 %v799, 7
      %v801 = vsub.s32 %v798, %v800
      %v802 = vrot.slane %v778, %v801
      %803 = vrot.lane.b32.xlu0 %v788, 64
      %v804 = vpop.permute.xlu0 %803
      %805 = vrot.lane.b32.xlu0 %v795, 64
      %v806 = vpop.permute.xlu0 %805
      %807 = vrot.lane.b32.xlu0 %v802, 64
      %v808 = vpop.permute.xlu0 %807
      %v809 = vrot.slane %v804, 4
      %v810 = vrot.slane %v806, 4
      %v811 = vrot.slane %v808, 4
      %v812 = vsel %vm345, %v809, %v810
      %v813 = vsel %vm773, %v804, %v812
      %v814 = vsel %vm345, %v810, %v811
      %v815 = vsel %vm773, %v806, %v814
      %818 = vst [vmem:[#allocation2 + $0x20] sm:$0x33] %v813
      %819 = vst [vmem:[#allocation2 + $0x28] sm:$0x33] %v815
      %v820 = vld [vmem:[#allocation3] sm:$0xff]
      %v821 = vld [vmem:[#allocation3 + $0x8] sm:$0x3]
      %v822 = vld [vmem:[%s0] sm:$0x44]
      %v823 = vld [vmem:[%s0 + $0x8] sm:$0x44]
      %v826 = vunpack.c.l.b16 %v822
      %v827 = vunpack.c.h.b16 %v822
      %v828 = vunpack.c.l.b16 %v823
      %v829 = vunpack.c.h.b16 %v823
      %v830 = vpack.c.b16 %v826, %v826
      %v831 = vpack.c.b16 %v827, %v827
      %v832 = vpack.c.b16 %v828, %v828
      %v833 = vpack.c.b16 %v829, %v829
      %v835 = vshrl.u32 %v830, 16
      %v836 = vpack.i.b16 %v835, %v835
      %v838 = vlaneseq
      %v839 = vshrl.u32 %v838, 7
      %v840 = vsub.s32 2, %v839
      %v841 = vrot.slane %v836, %v840
      %v843 = vshrl.u32 %v831, 16
      %v844 = vpack.i.b16 %v843, %v843
      %v846 = vlaneseq
      %v847 = vshrl.u32 %v846, 7
      %v848 = vsub.s32 2, %v847
      %v849 = vrot.slane %v844, %v848
      %v851 = vshrl.u32 %v832, 16
      %v852 = vpack.i.b16 %v851, %v851
      %v854 = vlaneseq
      %v855 = vshrl.u32 %v854, 7
      %v856 = vsub.s32 2, %v855
      %v857 = vrot.slane %v852, %v856
      %v859 = vshrl.u32 %v833, 16
      %v860 = vpack.i.b16 %v859, %v859
      %v862 = vlaneseq
      %v863 = vshrl.u32 %v862, 7
      %v864 = vsub.s32 2, %v863
      %v865 = vrot.slane %v860, %v864
      %v870 = vcombine.low %v841, %v849
      %v871 = vcombine.low %v857, %v865
      %v873 = vunpack.c.l.s4 1983009808
      %v874 = vunpack.c.0.s8 %v873
      %v875 = vlaneseq
      %v876 = vshrl.u32 %v875, 7
      %v877 = vsub.s32 %v874, %v876
      %v878 = vrot.slane %v870, %v877
      %v880 = vunpack.c.l.s4 1983009808
      %v881 = vunpack.c.0.s8 %v880
      %v882 = vlaneseq
      %v883 = vshrl.u32 %v882, 7
      %v884 = vsub.s32 %v881, %v883
      %v885 = vrot.slane %v871, %v884
      %v886 = vcombine.low %v878, %v885
      %887 = vrot.lane.b32.xlu0 %v886, 65
      %v888 = vpop.permute.xlu0 %887
      %v889 = vrot.slane %v888, 6
      %v890 = vsel %vm699, %v889, %v888
      %v893 = vmul.bf16 %v820, %v890
      %v894 = vmul.bf16 %v821, %v889
      %v897 = vcombine.low %v893, %v893
      %v899 = vunpack.c.l.s4 1983009808
      %v900 = vunpack.c.0.s8 %v899
      %v901 = vlaneseq
      %v902 = vshrl.u32 %v901, 7
      %v903 = vsub.s32 %v900, %v902
      %v904 = vrot.slane %v897, %v903
      %v906 = vunpack.c.l.s4 1983009808
      %v907 = vunpack.c.0.s8 %v906
      %v908 = vlaneseq
      %v909 = vshrl.u32 %v908, 7
      %v910 = vsub.s32 %v907, %v909
      %v911 = vrot.slane %v893, %v910
      %v912 = vcombine.low %v894, %v894
      %v914 = vunpack.c.l.s4 1983009808
      %v915 = vunpack.c.0.s8 %v914
      %v916 = vlaneseq
      %v917 = vshrl.u32 %v916, 7
      %v918 = vsub.s32 %v915, %v917
      %v919 = vrot.slane %v912, %v918
      %920 = vrot.lane.b32.xlu0 %v904, 63
      %v921 = vpop.permute.xlu0 %920
      %922 = vrot.lane.b32.xlu0 %v911, 63
      %v923 = vpop.permute.xlu0 %922
      %924 = vrot.lane.b32.xlu0 %v919, 63
      %v925 = vpop.permute.xlu0 %924
      %v926 = vrot.slane %v921, 4
      %v927 = vrot.slane %v923, 4
      %v928 = vrot.slane %v925, 4
      %v929 = vsel %vm345, %v926, %v927
      %v930 = vsel %vm658, %v921, %v929
      %v931 = vsel %vm345, %v927, %v928
      %v932 = vsel %vm658, %v923, %v931
      %935 = vst [vmem:[#allocation2 + $0x20] sm:$0xcc] %v930
      %936 = vst [vmem:[#allocation2 + $0x28] sm:$0xcc] %v932
      %v937 = vld [vmem:[#allocation3] sm:$0xff]
      %v938 = vld [vmem:[#allocation3 + $0x8] sm:$0x3]
      %v939 = vld [vmem:[%s0] sm:$0x88]
      %v940 = vld [vmem:[%s0 + $0x8] sm:$0x88]
      %v943 = vunpack.c.l.b16 %v939
      %v944 = vunpack.c.h.b16 %v939
      %v945 = vunpack.c.l.b16 %v940
      %v946 = vunpack.c.h.b16 %v940
      %v947 = vpack.c.b16 %v943, %v943
      %v948 = vpack.c.b16 %v944, %v944
      %v949 = vpack.c.b16 %v945, %v945
      %v950 = vpack.c.b16 %v946, %v946
      %v952 = vpack.i.b16 %v947, %v947
      %v954 = vlaneseq
      %v955 = vshrl.u32 %v954, 7
      %v956 = vsub.s32 3, %v955
      %v957 = vrot.slane %v952, %v956
      %v959 = vpack.i.b16 %v948, %v948
      %v961 = vlaneseq
      %v962 = vshrl.u32 %v961, 7
      %v963 = vsub.s32 3, %v962
      %v964 = vrot.slane %v959, %v963
      %v966 = vpack.i.b16 %v949, %v949
      %v968 = vlaneseq
      %v969 = vshrl.u32 %v968, 7
      %v970 = vsub.s32 3, %v969
      %v971 = vrot.slane %v966, %v970
      %v973 = vpack.i.b16 %v950, %v950
      %v975 = vlaneseq
      %v976 = vshrl.u32 %v975, 7
      %v977 = vsub.s32 3, %v976
      %v978 = vrot.slane %v973, %v977
      %v983 = vcombine.low %v957, %v964
      %v984 = vcombine.low %v971, %v978
      %v986 = vunpack.c.l.s4 1983009808
      %v987 = vunpack.c.0.s8 %v986
      %v988 = vlaneseq
      %v989 = vshrl.u32 %v988, 7
      %v990 = vsub.s32 %v987, %v989
      %v991 = vrot.slane %v983, %v990
      %v993 = vunpack.c.l.s4 1983009808
      %v994 = vunpack.c.0.s8 %v993
      %v995 = vlaneseq
      %v996 = vshrl.u32 %v995, 7
      %v997 = vsub.s32 %v994, %v996
      %v998 = vrot.slane %v984, %v997
      %v999 = vcombine.low %v991, %v998
      %1000 = vrot.lane.b32.xlu0 %v999, 71
      %v1001 = vpop.permute.xlu0 %1000
      %v1002 = vrot.slane %v1001, 6
      %v1003 = vsel %vm580, %v1002, %v1001
      %v1006 = vmul.bf16 %v937, %v1003
      %v1007 = vmul.bf16 %v938, %v1002
      %v1010 = vcombine.high %v1006, %v1006
      %v1012 = vunpack.c.l.s4 1983009808
      %v1013 = vunpack.c.0.s8 %v1012
      %v1014 = vlaneseq
      %v1015 = vshrl.u32 %v1014, 7
      %v1016 = vsub.s32 %v1013, %v1015
      %v1017 = vrot.slane %v1006, %v1016
      %v1019 = vunpack.c.l.s4 1983009808
      %v1020 = vunpack.c.0.s8 %v1019
      %v1021 = vlaneseq
      %v1022 = vshrl.u32 %v1021, 7
      %v1023 = vsub.s32 %v1020, %v1022
      %v1024 = vrot.slane %v1010, %v1023
      %v1026 = vunpack.c.l.s4 1983009808
      %v1027 = vunpack.c.0.s8 %v1026
      %v1028 = vlaneseq
      %v1029 = vshrl.u32 %v1028, 7
      %v1030 = vsub.s32 %v1027, %v1029
      %v1031 = vrot.slane %v1007, %v1030
      %1032 = vrot.lane.b32.xlu0 %v1017, 57
      %v1033 = vpop.permute.xlu0 %1032
      %1034 = vrot.lane.b32.xlu0 %v1024, 57
      %v1035 = vpop.permute.xlu0 %1034
      %1036 = vrot.lane.b32.xlu0 %v1031, 57
      %v1037 = vpop.permute.xlu0 %1036
      %v1038 = vrot.slane %v1033, 4
      %v1039 = vrot.slane %v1035, 4
      %v1040 = vrot.slane %v1037, 4
      %v1041 = vsel %vm345, %v1038, %v1039
      %v1042 = vsel %vm540, %v1033, %v1041
      %v1043 = vsel %vm345, %v1039, %v1040
      %v1044 = vsel %vm540, %v1035, %v1043
      %1047 = vst [vmem:[#allocation2 + $0x30] sm:$0x33] %v1042
      %1048 = vst [vmem:[#allocation2 + $0x38] sm:$0x33] %v1044
      %v1049 = vld [vmem:[#allocation3] sm:$0xff]
      %v1050 = vld [vmem:[#allocation3 + $0x8] sm:$0x3]
      %v1051 = vld [vmem:[%s0] sm:$0x88]
      %v1052 = vld [vmem:[%s0 + $0x8] sm:$0x88]
      %v1055 = vunpack.c.l.b16 %v1051
      %v1056 = vunpack.c.h.b16 %v1051
      %v1057 = vunpack.c.l.b16 %v1052
      %v1058 = vunpack.c.h.b16 %v1052
      %v1059 = vpack.c.b16 %v1055, %v1055
      %v1060 = vpack.c.b16 %v1056, %v1056
      %v1061 = vpack.c.b16 %v1057, %v1057
      %v1062 = vpack.c.b16 %v1058, %v1058
      %v1064 = vshrl.u32 %v1059, 16
      %v1065 = vpack.i.b16 %v1064, %v1064
      %v1067 = vlaneseq
      %v1068 = vshrl.u32 %v1067, 7
      %v1069 = vsub.s32 3, %v1068
      %v1070 = vrot.slane %v1065, %v1069
      %v1072 = vshrl.u32 %v1060, 16
      %v1073 = vpack.i.b16 %v1072, %v1072
      %v1075 = vlaneseq
      %v1076 = vshrl.u32 %v1075, 7
      %v1077 = vsub.s32 3, %v1076
      %v1078 = vrot.slane %v1073, %v1077
      %v1080 = vshrl.u32 %v1061, 16
      %v1081 = vpack.i.b16 %v1080, %v1080
      %v1083 = vlaneseq
      %v1084 = vshrl.u32 %v1083, 7
      %v1085 = vsub.s32 3, %v1084
      %v1086 = vrot.slane %v1081, %v1085
      %v1088 = vshrl.u32 %v1062, 16
      %v1089 = vpack.i.b16 %v1088, %v1088
      %v1091 = vlaneseq
      %v1092 = vshrl.u32 %v1091, 7
      %v1093 = vsub.s32 3, %v1092
      %v1094 = vrot.slane %v1089, %v1093
      %v1099 = vcombine.low %v1070, %v1078
      %v1100 = vcombine.low %v1086, %v1094
      %v1102 = vunpack.c.l.s4 1983009808
      %v1103 = vunpack.c.0.s8 %v1102
      %v1104 = vlaneseq
      %v1105 = vshrl.u32 %v1104, 7
      %v1106 = vsub.s32 %v1103, %v1105
      %v1107 = vrot.slane %v1099, %v1106
      %v1109 = vunpack.c.l.s4 1983009808
      %v1110 = vunpack.c.0.s8 %v1109
      %v1111 = vlaneseq
      %v1112 = vshrl.u32 %v1111, 7
      %v1113 = vsub.s32 %v1110, %v1112
      %v1114 = vrot.slane %v1100, %v1113
      %v1115 = vcombine.low %v1107, %v1114
      %1116 = vrot.lane.b32.xlu0 %v1115, 72
      %v1117 = vpop.permute.xlu0 %1116
      %v1118 = vrot.slane %v1117, 6
      %v1119 = vsel %vm466, %v1118, %v1117
      %v1122 = vmul.bf16 %v1049, %v1119
      %v1123 = vmul.bf16 %v1050, %v1118
      %v1126 = vcombine.low %v1122, %v1122
      %v1128 = vunpack.c.l.s4 1983009808
      %v1129 = vunpack.c.0.s8 %v1128
      %v1130 = vlaneseq
      %v1131 = vshrl.u32 %v1130, 7
      %v1132 = vsub.s32 %v1129, %v1131
      %v1133 = vrot.slane %v1126, %v1132
      %v1135 = vunpack.c.l.s4 1983009808
      %v1136 = vunpack.c.0.s8 %v1135
      %v1137 = vlaneseq
      %v1138 = vshrl.u32 %v1137, 7
      %v1139 = vsub.s32 %v1136, %v1138
      %v1140 = vrot.slane %v1122, %v1139
      %v1141 = vcombine.low %v1123, %v1123
      %v1143 = vunpack.c.l.s4 1983009808
      %v1144 = vunpack.c.0.s8 %v1143
      %v1145 = vlaneseq
      %v1146 = vshrl.u32 %v1145, 7
      %v1147 = vsub.s32 %v1144, %v1146
      %v1148 = vrot.slane %v1141, %v1147
      %1149 = vrot.lane.b32.xlu0 %v1133, 56
      %v1150 = vpop.permute.xlu0 %1149
      %1151 = vrot.lane.b32.xlu0 %v1140, 56
      %v1152 = vpop.permute.xlu0 %1151
      %1153 = vrot.lane.b32.xlu0 %v1148, 56
      %v1154 = vpop.permute.xlu0 %1153
      %v1155 = vrot.slane %v1150, 4
      %v1156 = vrot.slane %v1152, 4
      %v1157 = vrot.slane %v1154, 4
      %v1158 = vsel %vm345, %v1155, %v1156
      %v1159 = vsel %vm425, %v1150, %v1158
      %v1160 = vsel %vm345, %v1156, %v1157
      %v1161 = vsel %vm425, %v1152, %v1160
      %1164 = vst [vmem:[#allocation2 + $0x30] sm:$0xcc] %v1159
      %1165 = vst [vmem:[#allocation2 + $0x38] sm:$0xcc] %v1161
      %v1166 = vld [vmem:[#allocation3] sm:$0xff]
      %v1167 = vld [vmem:[#allocation3 + $0x8] sm:$0x3]
      %v1168 = vld [vmem:[%s0 + $0x10] sm:$0x11]
      %v1169 = vld [vmem:[%s0 + $0x18] sm:$0x11]
      %v1172 = vunpack.c.l.b16 %v1168
      %v1173 = vunpack.c.h.b16 %v1168
      %v1174 = vunpack.c.l.b16 %v1169
      %v1175 = vunpack.c.h.b16 %v1169
      %v1176 = vpack.c.b16 %v1172, %v1172
      %v1177 = vpack.c.b16 %v1173, %v1173
      %v1178 = vpack.c.b16 %v1174, %v1174
      %v1179 = vpack.c.b16 %v1175, %v1175
      %v1181 = vpack.i.b16 %v1176, %v1176
      %v1183 = vlaneseq
      %v1184 = vshrl.u32 %v1183, 7
      %v1185 = vsub.s32 0, %v1184
      %v1186 = vrot.slane %v1181, %v1185
      %v1188 = vpack.i.b16 %v1177, %v1177
      %v1190 = vlaneseq
      %v1191 = vshrl.u32 %v1190, 7
      %v1192 = vsub.s32 0, %v1191
      %v1193 = vrot.slane %v1188, %v1192
      %v1195 = vpack.i.b16 %v1178, %v1178
      %v1197 = vlaneseq
      %v1198 = vshrl.u32 %v1197, 7
      %v1199 = vsub.s32 0, %v1198
      %v1200 = vrot.slane %v1195, %v1199
      %v1202 = vpack.i.b16 %v1179, %v1179
      %v1204 = vlaneseq
      %v1205 = vshrl.u32 %v1204, 7
      %v1206 = vsub.s32 0, %v1205
      %v1207 = vrot.slane %v1202, %v1206
      %v1212 = vcombine.low %v1186, %v1193
      %v1213 = vcombine.low %v1200, %v1207
      %v1215 = vunpack.c.l.s4 1983009808
      %v1216 = vunpack.c.0.s8 %v1215
      %v1217 = vlaneseq
      %v1218 = vshrl.u32 %v1217, 7
      %v1219 = vsub.s32 %v1216, %v1218
      %v1220 = vrot.slane %v1212, %v1219
      %v1222 = vunpack.c.l.s4 1983009808
      %v1223 = vunpack.c.0.s8 %v1222
      %v1224 = vlaneseq
      %v1225 = vshrl.u32 %v1224, 7
      %v1226 = vsub.s32 %v1223, %v1225
      %v1227 = vrot.slane %v1213, %v1226
      %v1228 = vcombine.low %v1220, %v1227
      %1229 = vrot.lane.b32.xlu0 %v1228, 73
      %v1230 = vpop.permute.xlu0 %1229
      %v1231 = vrot.slane %v1230, 6
      %v1232 = vsel %vm347, %v1231, %v1230
      %v1235 = vmul.bf16 %v1166, %v1232
      %v1236 = vmul.bf16 %v1167, %v1231
      %v1239 = vcombine.high %v1235, %v1235
      %v1241 = vunpack.c.l.s4 1983009808
      %v1242 = vunpack.c.0.s8 %v1241
      %v1243 = vlaneseq
      %v1244 = vshrl.u32 %v1243, 7
      %v1245 = vsub.s32 %v1242, %v1244
      %v1246 = vrot.slane %v1235, %v1245
      %v1248 = vunpack.c.l.s4 1983009808
      %v1249 = vunpack.c.0.s8 %v1248
      %v1250 = vlaneseq
      %v1251 = vshrl.u32 %v1250, 7
      %v1252 = vsub.s32 %v1249, %v1251
      %v1253 = vrot.slane %v1239, %v1252
      %v1255 = vunpack.c.l.s4 1983009808
      %v1256 = vunpack.c.0.s8 %v1255
      %v1257 = vlaneseq
      %v1258 = vshrl.u32 %v1257, 7
      %v1259 = vsub.s32 %v1256, %v1258
      %v1260 = vrot.slane %v1236, %v1259
      %1261 = vrot.lane.b32.xlu0 %v1246, 55
      %v1262 = vpop.permute.xlu0 %1261
      %1263 = vrot.lane.b32.xlu0 %v1253, 55
      %v1264 = vpop.permute.xlu0 %1263
      %1265 = vrot.lane.b32.xlu0 %v1260, 55
      %v1266 = vpop.permute.xlu0 %1265
      %v1267 = vrot.slane %v1262, 4
      %v1268 = vrot.slane %v1264, 4
      %v1269 = vrot.slane %v1266, 4
      %v1270 = vsel %vm345, %v1267, %v1268
      %v1271 = vsel %vm306, %v1262, %v1270
      %v1272 = vsel %vm345, %v1268, %v1269
      %v1273 = vsel %vm306, %v1264, %v1272
      %1276 = vst [vmem:[#allocation2 + $0x40] sm:$0x33] %v1271
      %1277 = vst [vmem:[#allocation2 + $0x48] sm:$0x33] %v1273
      %v1278 = vld [vmem:[#allocation3] sm:$0xff]
      %v1279 = vld [vmem:[#allocation3 + $0x8] sm:$0x3]
      %v1280 = vld [vmem:[%s0 + $0x10] sm:$0x11]
      %v1281 = vld [vmem:[%s0 + $0x18] sm:$0x11]
      %v1284 = vunpack.c.l.b16 %v1280
      %v1285 = vunpack.c.h.b16 %v1280
      %v1286 = vunpack.c.l.b16 %v1281
      %v1287 = vunpack.c.h.b16 %v1281
      %v1288 = vpack.c.b16 %v1284, %v1284
      %v1289 = vpack.c.b16 %v1285, %v1285
      %v1290 = vpack.c.b16 %v1286, %v1286
      %v1291 = vpack.c.b16 %v1287, %v1287
      %v1293 = vshrl.u32 %v1288, 16
      %v1294 = vpack.i.b16 %v1293, %v1293
      %v1296 = vlaneseq
      %v1297 = vshrl.u32 %v1296, 7
      %v1298 = vsub.s32 0, %v1297
      %v1299 = vrot.slane %v1294, %v1298
      %v1301 = vshrl.u32 %v1289, 16
      %v1302 = vpack.i.b16 %v1301, %v1301
      %v1304 = vlaneseq
      %v1305 = vshrl.u32 %v1304, 7
      %v1306 = vsub.s32 0, %v1305
      %v1307 = vrot.slane %v1302, %v1306
      %v1309 = vshrl.u32 %v1290, 16
      %v1310 = vpack.i.b16 %v1309, %v1309
      %v1312 = vlaneseq
      %v1313 = vshrl.u32 %v1312, 7
      %v1314 = vsub.s32 0, %v1313
      %v1315 = vrot.slane %v1310, %v1314
      %v1317 = vshrl.u32 %v1291, 16
      %v1318 = vpack.i.b16 %v1317, %v1317
      %v1320 = vlaneseq
      %v1321 = vshrl.u32 %v1320, 7
      %v1322 = vsub.s32 0, %v1321
      %v1323 = vrot.slane %v1318, %v1322
      %v1328 = vcombine.low %v1299, %v1307
      %v1329 = vcombine.low %v1315, %v1323
      %v1331 = vunpack.c.l.s4 1983009808
      %v1332 = vunpack.c.0.s8 %v1331
      %v1333 = vlaneseq
      %v1334 = vshrl.u32 %v1333, 7
      %v1335 = vsub.s32 %v1332, %v1334
      %v1336 = vrot.slane %v1328, %v1335
      %v1338 = vunpack.c.l.s4 1983009808
      %v1339 = vunpack.c.0.s8 %v1338
      %v1340 = vlaneseq
      %v1341 = vshrl.u32 %v1340, 7
      %v1342 = vsub.s32 %v1339, %v1341
      %v1343 = vrot.slane %v1329, %v1342
      %v1344 = vcombine.low %v1336, %v1343
      %1345 = vrot.lane.b32.xlu0 %v1344, 119
      %v1346 = vpop.permute.xlu0 %1345
      %v1347 = vrot.slane %v1346, 6
      %vm1348 = vcmask 973824
      %v1349 = vsel %vm1348, %v1347, %v1346
      %v1352 = vmul.bf16 %v1278, %v1349
      %v1353 = vmul.bf16 %v1279, %v1347
      %v1356 = vcombine.low %v1352, %v1352
      %v1358 = vunpack.c.l.s4 1983009808
      %v1359 = vunpack.c.0.s8 %v1358
      %v1360 = vlaneseq
      %v1361 = vshrl.u32 %v1360, 7
      %v1362 = vsub.s32 %v1359, %v1361
      %v1363 = vrot.slane %v1356, %v1362
      %v1365 = vunpack.c.l.s4 1983009808
      %v1366 = vunpack.c.0.s8 %v1365
      %v1367 = vlaneseq
      %v1368 = vshrl.u32 %v1367, 7
      %v1369 = vsub.s32 %v1366, %v1368
      %v1370 = vrot.slane %v1352, %v1369
      %v1371 = vcombine.low %v1353, %v1353
      %v1373 = vunpack.c.l.s4 1983009808
      %v1374 = vunpack.c.0.s8 %v1373
      %v1375 = vlaneseq
      %v1376 = vshrl.u32 %v1375, 7
      %v1377 = vsub.s32 %v1374, %v1376
      %v1378 = vrot.slane %v1371, %v1377
      %1379 = vrot.lane.b32.xlu0 %v1363, 9
      %v1380 = vpop.permute.xlu0 %1379
      %1381 = vrot.lane.b32.xlu0 %v1370, 9
      %v1382 = vpop.permute.xlu0 %1381
      %1383 = vrot.lane.b32.xlu0 %v1378, 9
      %v1384 = vpop.permute.xlu0 %1383
      %v1385 = vrot.slane %v1380, 4
      %v1386 = vrot.slane %v1382, 4
      %v1387 = vrot.slane %v1384, 4
      %v1388 = vsel %vm345, %v1385, %v1386
      %vm1389 = vcmask 72704
      %v1390 = vsel %vm1389, %v1380, %v1388
      %v1391 = vsel %vm345, %v1386, %v1387
      %v1392 = vsel %vm1389, %v1382, %v1391
      %1395 = vst [vmem:[#allocation2 + $0x40] sm:$0xcc] %v1390
      %1396 = vst [vmem:[#allocation2 + $0x48] sm:$0xcc] %v1392
      %v1397 = vld [vmem:[#allocation3] sm:$0xff]
      %v1398 = vld [vmem:[#allocation3 + $0x8] sm:$0x3]
      %v1399 = vld [vmem:[%s0 + $0x10] sm:$0x22]
      %v1400 = vld [vmem:[%s0 + $0x18] sm:$0x22]
      %v1403 = vunpack.c.l.b16 %v1399
      %v1404 = vunpack.c.h.b16 %v1399
      %v1405 = vunpack.c.l.b16 %v1400
      %v1406 = vunpack.c.h.b16 %v1400
      %v1407 = vpack.c.b16 %v1403, %v1403
      %v1408 = vpack.c.b16 %v1404, %v1404
      %v1409 = vpack.c.b16 %v1405, %v1405
      %v1410 = vpack.c.b16 %v1406, %v1406
      %v1412 = vpack.i.b16 %v1407, %v1407
      %v1414 = vlaneseq
      %v1415 = vshrl.u32 %v1414, 7
      %v1416 = vsub.s32 1, %v1415
      %v1417 = vrot.slane %v1412, %v1416
      %v1419 = vpack.i.b16 %v1408, %v1408
      %v1421 = vlaneseq
      %v1422 = vshrl.u32 %v1421, 7
      %v1423 = vsub.s32 1, %v1422
      %v1424 = vrot.slane %v1419, %v1423
      %v1426 = vpack.i.b16 %v1409, %v1409
      %v1428 = vlaneseq
      %v1429 = vshrl.u32 %v1428, 7
      %v1430 = vsub.s32 1, %v1429
      %v1431 = vrot.slane %v1426, %v1430
      %v1433 = vpack.i.b16 %v1410, %v1410
      %v1435 = vlaneseq
      %v1436 = vshrl.u32 %v1435, 7
      %v1437 = vsub.s32 1, %v1436
      %v1438 = vrot.slane %v1433, %v1437
      %v1443 = vcombine.low %v1417, %v1424
      %v1444 = vcombine.low %v1431, %v1438
      %v1446 = vunpack.c.l.s4 1983009808
      %v1447 = vunpack.c.0.s8 %v1446
      %v1448 = vlaneseq
      %v1449 = vshrl.u32 %v1448, 7
      %v1450 = vsub.s32 %v1447, %v1449
      %v1451 = vrot.slane %v1443, %v1450
      %v1453 = vunpack.c.l.s4 1983009808
      %v1454 = vunpack.c.0.s8 %v1453
      %v1455 = vlaneseq
      %v1456 = vshrl.u32 %v1455, 7
      %v1457 = vsub.s32 %v1454, %v1456
      %v1458 = vrot.slane %v1444, %v1457
      %v1459 = vcombine.low %v1451, %v1458
      %1460 = vrot.lane.b32.xlu0 %v1459, 120
      %v1461 = vpop.permute.xlu0 %1460
      %v1462 = vrot.slane %v1461, 6
      %vm1463 = vcmask 982016
      %v1464 = vsel %vm1463, %v1462, %v1461
      %v1467 = vmul.bf16 %v1397, %v1464
      %v1468 = vmul.bf16 %v1398, %v1462
      %v1471 = vcombine.high %v1467, %v1467
      %v1473 = vunpack.c.l.s4 1983009808
      %v1474 = vunpack.c.0.s8 %v1473
      %v1475 = vlaneseq
      %v1476 = vshrl.u32 %v1475, 7
      %v1477 = vsub.s32 %v1474, %v1476
      %v1478 = vrot.slane %v1467, %v1477
      %v1480 = vunpack.c.l.s4 1983009808
      %v1481 = vunpack.c.0.s8 %v1480
      %v1482 = vlaneseq
      %v1483 = vshrl.u32 %v1482, 7
      %v1484 = vsub.s32 %v1481, %v1483
      %v1485 = vrot.slane %v1471, %v1484
      %v1487 = vunpack.c.l.s4 1983009808
      %v1488 = vunpack.c.0.s8 %v1487
      %v1489 = vlaneseq
      %v1490 = vshrl.u32 %v1489, 7
      %v1491 = vsub.s32 %v1488, %v1490
      %v1492 = vrot.slane %v1468, %v1491
      %1493 = vrot.lane.b32.xlu0 %v1478, 8
      %v1494 = vpop.permute.xlu0 %1493
      %1495 = vrot.lane.b32.xlu0 %v1485, 8
      %v1496 = vpop.permute.xlu0 %1495
      %1497 = vrot.lane.b32.xlu0 %v1492, 8
      %v1498 = vpop.permute.xlu0 %1497
      %v1499 = vrot.slane %v1494, 4
      %v1500 = vrot.slane %v1496, 4
      %v1501 = vrot.slane %v1498, 4
      %v1502 = vsel %vm345, %v1499, %v1500
      %vm1503 = vcmask 64512
      %v1504 = vsel %vm1503, %v1494, %v1502
      %v1505 = vsel %vm345, %v1500, %v1501
      %v1506 = vsel %vm1503, %v1496, %v1505
      %1509 = vst [vmem:[#allocation2 + $0x50] sm:$0x33] %v1504
      %1510 = vst [vmem:[#allocation2 + $0x58] sm:$0x33] %v1506
      %v1511 = vld [vmem:[#allocation3] sm:$0xff]
      %v1512 = vld [vmem:[#allocation3 + $0x8] sm:$0x3]
      %v1513 = vld [vmem:[%s0 + $0x10] sm:$0x22]
      %v1514 = vld [vmem:[%s0 + $0x18] sm:$0x22]
      %v1517 = vunpack.c.l.b16 %v1513
      %v1518 = vunpack.c.h.b16 %v1513
      %v1519 = vunpack.c.l.b16 %v1514
      %v1520 = vunpack.c.h.b16 %v1514
      %v1521 = vpack.c.b16 %v1517, %v1517
      %v1522 = vpack.c.b16 %v1518, %v1518
      %v1523 = vpack.c.b16 %v1519, %v1519
      %v1524 = vpack.c.b16 %v1520, %v1520
      %v1526 = vshrl.u32 %v1521, 16
      %v1527 = vpack.i.b16 %v1526, %v1526
      %v1529 = vlaneseq
      %v1530 = vshrl.u32 %v1529, 7
      %v1531 = vsub.s32 1, %v1530
      %v1532 = vrot.slane %v1527, %v1531
      %v1534 = vshrl.u32 %v1522, 16
      %v1535 = vpack.i.b16 %v1534, %v1534
      %v1537 = vlaneseq
      %v1538 = vshrl.u32 %v1537, 7
      %v1539 = vsub.s32 1, %v1538
      %v1540 = vrot.slane %v1535, %v1539
      %v1542 = vshrl.u32 %v1523, 16
      %v1543 = vpack.i.b16 %v1542, %v1542
      %v1545 = vlaneseq
      %v1546 = vshrl.u32 %v1545, 7
      %v1547 = vsub.s32 1, %v1546
      %v1548 = vrot.slane %v1543, %v1547
      %v1550 = vshrl.u32 %v1524, 16
      %v1551 = vpack.i.b16 %v1550, %v1550
      %v1553 = vlaneseq
      %v1554 = vshrl.u32 %v1553, 7
      %v1555 = vsub.s32 1, %v1554
      %v1556 = vrot.slane %v1551, %v1555
      %v1561 = vcombine.low %v1532, %v1540
      %v1562 = vcombine.low %v1548, %v1556
      %v1564 = vunpack.c.l.s4 1983009808
      %v1565 = vunpack.c.0.s8 %v1564
      %v1566 = vlaneseq
      %v1567 = vshrl.u32 %v1566, 7
      %v1568 = vsub.s32 %v1565, %v1567
      %v1569 = vrot.slane %v1561, %v1568
      %v1571 = vunpack.c.l.s4 1983009808
      %v1572 = vunpack.c.0.s8 %v1571
      %v1573 = vlaneseq
      %v1574 = vshrl.u32 %v1573, 7
      %v1575 = vsub.s32 %v1572, %v1574
      %v1576 = vrot.slane %v1562, %v1575
      %v1577 = vcombine.low %v1569, %v1576
      %1578 = vrot.lane.b32.xlu0 %v1577, 121
      %v1579 = vpop.permute.xlu0 %1578
      %v1580 = vrot.slane %v1579, 6
      %vm1581 = vcmask 990208
      %v1582 = vsel %vm1581, %v1580, %v1579
      %v1585 = vmul.bf16 %v1511, %v1582
      %v1586 = vmul.bf16 %v1512, %v1580
      %v1589 = vcombine.low %v1585, %v1585
      %v1591 = vunpack.c.l.s4 1983009808
      %v1592 = vunpack.c.0.s8 %v1591
      %v1593 = vlaneseq
      %v1594 = vshrl.u32 %v1593, 7
      %v1595 = vsub.s32 %v1592, %v1594
      %v1596 = vrot.slane %v1589, %v1595
      %v1598 = vunpack.c.l.s4 1983009808
      %v1599 = vunpack.c.0.s8 %v1598
      %v1600 = vlaneseq
      %v1601 = vshrl.u32 %v1600, 7
      %v1602 = vsub.s32 %v1599, %v1601
      %v1603 = vrot.slane %v1585, %v1602
      %v1604 = vcombine.low %v1586, %v1586
      %v1606 = vunpack.c.l.s4 1983009808
      %v1607 = vunpack.c.0.s8 %v1606
      %v1608 = vlaneseq
      %v1609 = vshrl.u32 %v1608, 7
      %v1610 = vsub.s32 %v1607, %v1609
      %v1611 = vrot.slane %v1604, %v1610
      %1612 = vrot.lane.b32.xlu0 %v1596, 7
      %v1613 = vpop.permute.xlu0 %1612
      %1614 = vrot.lane.b32.xlu0 %v1603, 7
      %v1615 = vpop.permute.xlu0 %1614
      %1616 = vrot.lane.b32.xlu0 %v1611, 7
      %v1617 = vpop.permute.xlu0 %1616
      %v1618 = vrot.slane %v1613, 4
      %v1619 = vrot.slane %v1615, 4
      %v1620 = vrot.slane %v1617, 4
      %v1621 = vsel %vm345, %v1618, %v1619
      %vm1622 = vcmask 56320
      %v1623 = vsel %vm1622, %v1613, %v1621
      %v1624 = vsel %vm345, %v1619, %v1620
      %v1625 = vsel %vm1622, %v1615, %v1624
      %1628 = vst [vmem:[#allocation2 + $0x50] sm:$0xcc] %v1623
      %1629 = vst [vmem:[#allocation2 + $0x58] sm:$0xcc] %v1625
      %v1630 = vld [vmem:[#allocation3] sm:$0xff]
      %v1631 = vld [vmem:[#allocation3 + $0x8] sm:$0x3]
      %v1632 = vld [vmem:[%s0 + $0x10] sm:$0x44]
      %v1633 = vld [vmem:[%s0 + $0x18] sm:$0x44]
      %v1636 = vunpack.c.l.b16 %v1632
      %v1637 = vunpack.c.h.b16 %v1632
      %v1638 = vunpack.c.l.b16 %v1633
      %v1639 = vunpack.c.h.b16 %v1633
      %v1640 = vpack.c.b16 %v1636, %v1636
      %v1641 = vpack.c.b16 %v1637, %v1637
      %v1642 = vpack.c.b16 %v1638, %v1638
      %v1643 = vpack.c.b16 %v1639, %v1639
      %v1645 = vpack.i.b16 %v1640, %v1640
      %v1647 = vlaneseq
      %v1648 = vshrl.u32 %v1647, 7
      %v1649 = vsub.s32 2, %v1648
      %v1650 = vrot.slane %v1645, %v1649
      %v1652 = vpack.i.b16 %v1641, %v1641
      %v1654 = vlaneseq
      %v1655 = vshrl.u32 %v1654, 7
      %v1656 = vsub.s32 2, %v1655
      %v1657 = vrot.slane %v1652, %v1656
      %v1659 = vpack.i.b16 %v1642, %v1642
      %v1661 = vlaneseq
      %v1662 = vshrl.u32 %v1661, 7
      %v1663 = vsub.s32 2, %v1662
      %v1664 = vrot.slane %v1659, %v1663
      %v1666 = vpack.i.b16 %v1643, %v1643
      %v1668 = vlaneseq
      %v1669 = vshrl.u32 %v1668, 7
      %v1670 = vsub.s32 2, %v1669
      %v1671 = vrot.slane %v1666, %v1670
      %v1676 = vcombine.low %v1650, %v1657
      %v1677 = vcombine.low %v1664, %v1671
      %v1679 = vunpack.c.l.s4 1983009808
      %v1680 = vunpack.c.0.s8 %v1679
      %v1681 = vlaneseq
      %v1682 = vshrl.u32 %v1681, 7
      %v1683 = vsub.s32 %v1680, %v1682
      %v1684 = vrot.slane %v1676, %v1683
      %v1686 = vunpack.c.l.s4 1983009808
      %v1687 = vunpack.c.0.s8 %v1686
      %v1688 = vlaneseq
      %v1689 = vshrl.u32 %v1688, 7
      %v1690 = vsub.s32 %v1687, %v1689
      %v1691 = vrot.slane %v1677, %v1690
      %v1692 = vcombine.low %v1684, %v1691
      %1693 = vrot.lane.b32.xlu0 %v1692, 127
      %v1694 = vpop.permute.xlu0 %1693
      %v1695 = vrot.slane %v1694, 6
      %vm1696 = vcmask 1039360
      %v1697 = vsel %vm1696, %v1695, %v1694
      %v1700 = vmul.bf16 %v1630, %v1697
      %v1701 = vmul.bf16 %v1631, %v1695
      %v1704 = vcombine.high %v1700, %v1700
      %v1706 = vunpack.c.l.s4 1983009808
      %v1707 = vunpack.c.0.s8 %v1706
      %v1708 = vlaneseq
      %v1709 = vshrl.u32 %v1708, 7
      %v1710 = vsub.s32 %v1707, %v1709
      %v1711 = vrot.slane %v1700, %v1710
      %v1713 = vunpack.c.l.s4 1983009808
      %v1714 = vunpack.c.0.s8 %v1713
      %v1715 = vlaneseq
      %v1716 = vshrl.u32 %v1715, 7
      %v1717 = vsub.s32 %v1714, %v1716
      %v1718 = vrot.slane %v1704, %v1717
      %v1720 = vunpack.c.l.s4 1983009808
      %v1721 = vunpack.c.0.s8 %v1720
      %v1722 = vlaneseq
      %v1723 = vshrl.u32 %v1722, 7
      %v1724 = vsub.s32 %v1721, %v1723
      %v1725 = vrot.slane %v1701, %v1724
      %1726 = vrot.lane.b32.xlu0 %v1711, 1
      %v1727 = vpop.permute.xlu0 %1726
      %1728 = vrot.lane.b32.xlu0 %v1718, 1
      %v1729 = vpop.permute.xlu0 %1728
      %1730 = vrot.lane.b32.xlu0 %v1725, 1
      %v1731 = vpop.permute.xlu0 %1730
      %v1732 = vrot.slane %v1727, 4
      %v1733 = vrot.slane %v1729, 4
      %v1734 = vrot.slane %v1731, 4
      %v1735 = vsel %vm345, %v1732, %v1733
      %vm1736 = vcmask 7168
      %v1737 = vsel %vm1736, %v1727, %v1735
      %v1738 = vsel %vm345, %v1733, %v1734
      %v1739 = vsel %vm1736, %v1729, %v1738
      %1742 = vst [vmem:[#allocation2 + $0x60] sm:$0x33] %v1737
      %1743 = vst [vmem:[#allocation2 + $0x68] sm:$0x33] %v1739
      %v1744 = vld [vmem:[#allocation3 + $0x2] sm:$0xff]
      %v1745 = vld [vmem:[%s0 + $0x10] sm:$0x44]
      %v1746 = vld [vmem:[%s0 + $0x18] sm:$0x44]
      %v1749 = vunpack.c.l.b16 %v1745
      %v1750 = vunpack.c.h.b16 %v1745
      %v1751 = vunpack.c.l.b16 %v1746
      %v1752 = vunpack.c.h.b16 %v1746
      %v1753 = vpack.c.b16 %v1749, %v1749
      %v1754 = vpack.c.b16 %v1750, %v1750
      %v1755 = vpack.c.b16 %v1751, %v1751
      %v1756 = vpack.c.b16 %v1752, %v1752
      %v1758 = vshrl.u32 %v1753, 16
      %v1759 = vpack.i.b16 %v1758, %v1758
      %v1761 = vlaneseq
      %v1762 = vshrl.u32 %v1761, 7
      %v1763 = vsub.s32 2, %v1762
      %v1764 = vrot.slane %v1759, %v1763
      %v1766 = vshrl.u32 %v1754, 16
      %v1767 = vpack.i.b16 %v1766, %v1766
      %v1769 = vlaneseq
      %v1770 = vshrl.u32 %v1769, 7
      %v1771 = vsub.s32 2, %v1770
      %v1772 = vrot.slane %v1767, %v1771
      %v1774 = vshrl.u32 %v1755, 16
      %v1775 = vpack.i.b16 %v1774, %v1774
      %v1777 = vlaneseq
      %v1778 = vshrl.u32 %v1777, 7
      %v1779 = vsub.s32 2, %v1778
      %v1780 = vrot.slane %v1775, %v1779
      %v1782 = vshrl.u32 %v1756, 16
      %v1783 = vpack.i.b16 %v1782, %v1782
      %v1785 = vlaneseq
      %v1786 = vshrl.u32 %v1785, 7
      %v1787 = vsub.s32 2, %v1786
      %v1788 = vrot.slane %v1783, %v1787
      %v1793 = vcombine.low %v1764, %v1772
      %v1794 = vcombine.low %v1780, %v1788
      %v1796 = vunpack.c.l.s4 1983009808
      %v1797 = vunpack.c.0.s8 %v1796
      %v1798 = vlaneseq
      %v1799 = vshrl.u32 %v1798, 7
      %v1800 = vsub.s32 %v1797, %v1799
      %v1801 = vrot.slane %v1793, %v1800
      %v1803 = vunpack.c.l.s4 1983009808
      %v1804 = vunpack.c.0.s8 %v1803
      %v1805 = vlaneseq
      %v1806 = vshrl.u32 %v1805, 7
      %v1807 = vsub.s32 %v1804, %v1806
      %v1808 = vrot.slane %v1794, %v1807
      %v1809 = vcombine.low %v1801, %v1808
      %v1811 = vmul.bf16 %v1744, %v1809
      %v1813 = vcombine.low %v1811, %v1811
      %v1815 = vunpack.c.l.s4 1983009808
      %v1816 = vunpack.c.0.s8 %v1815
      %v1817 = vlaneseq
      %v1818 = vshrl.u32 %v1817, 7
      %v1819 = vsub.s32 %v1816, %v1818
      %v1820 = vrot.slane %v1813, %v1819
      %v1822 = vunpack.c.l.s4 1983009808
      %v1823 = vunpack.c.0.s8 %v1822
      %v1824 = vlaneseq
      %v1825 = vshrl.u32 %v1824, 7
      %v1826 = vsub.s32 %v1823, %v1825
      %v1827 = vrot.slane %v1811, %v1826
      %1830 = vst [vmem:[#allocation2 + $0x60] sm:$0xcc] %v1820
      %1831 = vst [vmem:[#allocation2 + $0x68] sm:$0xcc] %v1827
      %v1832 = vld [vmem:[#allocation3 + $0x2] sm:$0xff]
      %v1833 = vld [vmem:[#allocation3 + $0xa] sm:$0x3]
      %v1834 = vld [vmem:[%s0 + $0x10] sm:$0x88]
      %v1835 = vld [vmem:[%s0 + $0x18] sm:$0x88]
      %v1838 = vunpack.c.l.b16 %v1834
      %v1839 = vunpack.c.h.b16 %v1834
      %v1840 = vunpack.c.l.b16 %v1835
      %v1841 = vunpack.c.h.b16 %v1835
      %v1842 = vpack.c.b16 %v1838, %v1838
      %v1843 = vpack.c.b16 %v1839, %v1839
      %v1844 = vpack.c.b16 %v1840, %v1840
      %v1845 = vpack.c.b16 %v1841, %v1841
      %v1847 = vpack.i.b16 %v1842, %v1842
      %v1849 = vlaneseq
      %v1850 = vshrl.u32 %v1849, 7
      %v1851 = vsub.s32 3, %v1850
      %v1852 = vrot.slane %v1847, %v1851
      %v1854 = vpack.i.b16 %v1843, %v1843
      %v1856 = vlaneseq
      %v1857 = vshrl.u32 %v1856, 7
      %v1858 = vsub.s32 3, %v1857
      %v1859 = vrot.slane %v1854, %v1858
      %v1861 = vpack.i.b16 %v1844, %v1844
      %v1863 = vlaneseq
      %v1864 = vshrl.u32 %v1863, 7
      %v1865 = vsub.s32 3, %v1864
      %v1866 = vrot.slane %v1861, %v1865
      %v1868 = vpack.i.b16 %v1845, %v1845
      %v1870 = vlaneseq
      %v1871 = vshrl.u32 %v1870, 7
      %v1872 = vsub.s32 3, %v1871
      %v1873 = vrot.slane %v1868, %v1872
      %v1878 = vcombine.low %v1852, %v1859
      %v1879 = vcombine.low %v1866, %v1873
      %v1881 = vunpack.c.l.s4 1983009808
      %v1882 = vunpack.c.0.s8 %v1881
      %v1883 = vlaneseq
      %v1884 = vshrl.u32 %v1883, 7
      %v1885 = vsub.s32 %v1882, %v1884
      %v1886 = vrot.slane %v1878, %v1885
      %v1888 = vunpack.c.l.s4 1983009808
      %v1889 = vunpack.c.0.s8 %v1888
      %v1890 = vlaneseq
      %v1891 = vshrl.u32 %v1890, 7
      %v1892 = vsub.s32 %v1889, %v1891
      %v1893 = vrot.slane %v1879, %v1892
      %v1894 = vcombine.low %v1886, %v1893
      %1895 = vrot.lane.b32.xlu0 %v1894, 1
      %v1896 = vpop.permute.xlu0 %1895
      %v1897 = vrot.slane %v1896, 6
      %v1898 = vsel %vm1736, %v1897, %v1896
      %v1901 = vmul.bf16 %v1832, %v1898
      %v1902 = vmul.bf16 %v1833, %v1897
      %v1905 = vcombine.high %v1901, %v1901
      %v1907 = vunpack.c.l.s4 1983009808
      %v1908 = vunpack.c.0.s8 %v1907
      %v1909 = vlaneseq
      %v1910 = vshrl.u32 %v1909, 7
      %v1911 = vsub.s32 %v1908, %v1910
      %v1912 = vrot.slane %v1901, %v1911
      %v1914 = vunpack.c.l.s4 1983009808
      %v1915 = vunpack.c.0.s8 %v1914
      %v1916 = vlaneseq
      %v1917 = vshrl.u32 %v1916, 7
      %v1918 = vsub.s32 %v1915, %v1917
      %v1919 = vrot.slane %v1905, %v1918
      %v1921 = vunpack.c.l.s4 1983009808
      %v1922 = vunpack.c.0.s8 %v1921
      %v1923 = vlaneseq
      %v1924 = vshrl.u32 %v1923, 7
      %v1925 = vsub.s32 %v1922, %v1924
      %v1926 = vrot.slane %v1902, %v1925
      %1927 = vrot.lane.b32.xlu0 %v1912, 127
      %v1928 = vpop.permute.xlu0 %1927
      %1929 = vrot.lane.b32.xlu0 %v1919, 127
      %v1930 = vpop.permute.xlu0 %1929
      %1931 = vrot.lane.b32.xlu0 %v1926, 127
      %v1932 = vpop.permute.xlu0 %1931
      %v1933 = vrot.slane %v1928, 4
      %v1934 = vrot.slane %v1930, 4
      %v1935 = vrot.slane %v1932, 4
      %v1936 = vsel %vm345, %v1933, %v1934
      %v1937 = vsel %vm1696, %v1928, %v1936
      %v1938 = vsel %vm345, %v1934, %v1935
      %v1939 = vsel %vm1696, %v1930, %v1938
      %1942 = vst [vmem:[#allocation2 + $0x70] sm:$0x33] %v1937
      %1943 = vst [vmem:[#allocation2 + $0x78] sm:$0x33] %v1939
      %v1944 = vld [vmem:[#allocation3 + $0x2] sm:$0xff]
      %v1945 = vld [vmem:[#allocation3 + $0xa] sm:$0x3]
      %v1946 = vld [vmem:[%s0 + $0x10] sm:$0x88]
      %v1947 = vld [vmem:[%s0 + $0x18] sm:$0x88]
      %v1950 = vunpack.c.l.b16 %v1946
      %v1951 = vunpack.c.h.b16 %v1946
      %v1952 = vunpack.c.l.b16 %v1947
      %v1953 = vunpack.c.h.b16 %v1947
      %v1954 = vpack.c.b16 %v1950, %v1950
      %v1955 = vpack.c.b16 %v1951, %v1951
      %v1956 = vpack.c.b16 %v1952, %v1952
      %v1957 = vpack.c.b16 %v1953, %v1953
      %v1959 = vshrl.u32 %v1954, 16
      %v1960 = vpack.i.b16 %v1959, %v1959
      %v1962 = vlaneseq
      %v1963 = vshrl.u32 %v1962, 7
      %v1964 = vsub.s32 3, %v1963
      %v1965 = vrot.slane %v1960, %v1964
      %v1967 = vshrl.u32 %v1955, 16
      %v1968 = vpack.i.b16 %v1967, %v1967
      %v1970 = vlaneseq
      %v1971 = vshrl.u32 %v1970, 7
      %v1972 = vsub.s32 3, %v1971
      %v1973 = vrot.slane %v1968, %v1972
      %v1975 = vshrl.u32 %v1956, 16
      %v1976 = vpack.i.b16 %v1975, %v1975
      %v1978 = vlaneseq
      %v1979 = vshrl.u32 %v1978, 7
      %v1980 = vsub.s32 3, %v1979
      %v1981 = vrot.slane %v1976, %v1980
      %v1983 = vshrl.u32 %v1957, 16
      %v1984 = vpack.i.b16 %v1983, %v1983
      %v1986 = vlaneseq
      %v1987 = vshrl.u32 %v1986, 7
      %v1988 = vsub.s32 3, %v1987
      %v1989 = vrot.slane %v1984, %v1988
      %v1994 = vcombine.low %v1965, %v1973
      %v1995 = vcombine.low %v1981, %v1989
      %v1997 = vunpack.c.l.s4 1983009808
      %v1998 = vunpack.c.0.s8 %v1997
      %v1999 = vlaneseq
      %v2000 = vshrl.u32 %v1999, 7
      %v2001 = vsub.s32 %v1998, %v2000
      %v2002 = vrot.slane %v1994, %v2001
      %v2004 = vunpack.c.l.s4 1983009808
      %v2005 = vunpack.c.0.s8 %v2004
      %v2006 = vlaneseq
      %v2007 = vshrl.u32 %v2006, 7
      %v2008 = vsub.s32 %v2005, %v2007
      %v2009 = vrot.slane %v1995, %v2008
      %v2010 = vcombine.low %v2002, %v2009
      %2011 = vrot.lane.b32.xlu0 %v2010, 7
      %v2012 = vpop.permute.xlu0 %2011
      %v2013 = vrot.slane %v2012, 6
      %v2014 = vsel %vm1622, %v2013, %v2012
      %v2017 = vmul.bf16 %v1944, %v2014
      %v2018 = vmul.bf16 %v1945, %v2013
      %v2021 = vcombine.low %v2017, %v2017
      %v2023 = vunpack.c.l.s4 1983009808
      %v2024 = vunpack.c.0.s8 %v2023
      %v2025 = vlaneseq
      %v2026 = vshrl.u32 %v2025, 7
      %v2027 = vsub.s32 %v2024, %v2026
      %v2028 = vrot.slane %v2021, %v2027
      %v2030 = vunpack.c.l.s4 1983009808
      %v2031 = vunpack.c.0.s8 %v2030
      %v2032 = vlaneseq
      %v2033 = vshrl.u32 %v2032, 7
      %v2034 = vsub.s32 %v2031, %v2033
      %v2035 = vrot.slane %v2017, %v2034
      %v2036 = vcombine.low %v2018, %v2018
      %v2038 = vunpack.c.l.s4 1983009808
      %v2039 = vunpack.c.0.s8 %v2038
      %v2040 = vlaneseq
      %v2041 = vshrl.u32 %v2040, 7
      %v2042 = vsub.s32 %v2039, %v2041
      %v2043 = vrot.slane %v2036, %v2042
      %2044 = vrot.lane.b32.xlu0 %v2028, 121
      %v2045 = vpop.permute.xlu0 %2044
      %2046 = vrot.lane.b32.xlu0 %v2035, 121
      %v2047 = vpop.permute.xlu0 %2046
      %2048 = vrot.lane.b32.xlu0 %v2043, 121
      %v2049 = vpop.permute.xlu0 %2048
      %v2050 = vrot.slane %v2045, 4
      %v2051 = vrot.slane %v2047, 4
      %v2052 = vrot.slane %v2049, 4
      %v2053 = vsel %vm345, %v2050, %v2051
      %v2054 = vsel %vm1581, %v2045, %v2053
      %v2055 = vsel %vm345, %v2051, %v2052
      %v2056 = vsel %vm1581, %v2047, %v2055
      %2059 = vst [vmem:[#allocation2 + $0x70] sm:$0xcc] %v2054
      %2060 = vst [vmem:[#allocation2 + $0x78] sm:$0xcc] %v2056
      %v2061 = vld [vmem:[#allocation3 + $0x2] sm:$0xff]
      %v2062 = vld [vmem:[#allocation3 + $0xa] sm:$0x3]
      %v2063 = vld [vmem:[%s0 + $0x20] sm:$0x11]
      %v2064 = vld [vmem:[%s0 + $0x28] sm:$0x11]
      %v2067 = vunpack.c.l.b16 %v2063
      %v2068 = vunpack.c.h.b16 %v2063
      %v2069 = vunpack.c.l.b16 %v2064
      %v2070 = vunpack.c.h.b16 %v2064
      %v2071 = vpack.c.b16 %v2067, %v2067
      %v2072 = vpack.c.b16 %v2068, %v2068
      %v2073 = vpack.c.b16 %v2069, %v2069
      %v2074 = vpack.c.b16 %v2070, %v2070
      %v2076 = vpack.i.b16 %v2071, %v2071
      %v2078 = vlaneseq
      %v2079 = vshrl.u32 %v2078, 7
      %v2080 = vsub.s32 0, %v2079
      %v2081 = vrot.slane %v2076, %v2080
      %v2083 = vpack.i.b16 %v2072, %v2072
      %v2085 = vlaneseq
      %v2086 = vshrl.u32 %v2085, 7
      %v2087 = vsub.s32 0, %v2086
      %v2088 = vrot.slane %v2083, %v2087
      %v2090 = vpack.i.b16 %v2073, %v2073
      %v2092 = vlaneseq
      %v2093 = vshrl.u32 %v2092, 7
      %v2094 = vsub.s32 0, %v2093
      %v2095 = vrot.slane %v2090, %v2094
      %v2097 = vpack.i.b16 %v2074, %v2074
      %v2099 = vlaneseq
      %v2100 = vshrl.u32 %v2099, 7
      %v2101 = vsub.s32 0, %v2100
      %v2102 = vrot.slane %v2097, %v2101
      %v2107 = vcombine.low %v2081, %v2088
      %v2108 = vcombine.low %v2095, %v2102
      %v2110 = vunpack.c.l.s4 1983009808
      %v2111 = vunpack.c.0.s8 %v2110
      %v2112 = vlaneseq
      %v2113 = vshrl.u32 %v2112, 7
      %v2114 = vsub.s32 %v2111, %v2113
      %v2115 = vrot.slane %v2107, %v2114
      %v2117 = vunpack.c.l.s4 1983009808
      %v2118 = vunpack.c.0.s8 %v2117
      %v2119 = vlaneseq
      %v2120 = vshrl.u32 %v2119, 7
      %v2121 = vsub.s32 %v2118, %v2120
      %v2122 = vrot.slane %v2108, %v2121
      %v2123 = vcombine.low %v2115, %v2122
      %2124 = vrot.lane.b32.xlu0 %v2123, 8
      %v2125 = vpop.permute.xlu0 %2124
      %v2126 = vrot.slane %v2125, 6
      %v2127 = vsel %vm1503, %v2126, %v2125
      %v2130 = vmul.bf16 %v2061, %v2127
      %v2131 = vmul.bf16 %v2062, %v2126
      %v2134 = vcombine.high %v2130, %v2130
      %v2136 = vunpack.c.l.s4 1983009808
      %v2137 = vunpack.c.0.s8 %v2136
      %v2138 = vlaneseq
      %v2139 = vshrl.u32 %v2138, 7
      %v2140 = vsub.s32 %v2137, %v2139
      %v2141 = vrot.slane %v2130, %v2140
      %v2143 = vunpack.c.l.s4 1983009808
      %v2144 = vunpack.c.0.s8 %v2143
      %v2145 = vlaneseq
      %v2146 = vshrl.u32 %v2145, 7
      %v2147 = vsub.s32 %v2144, %v2146
      %v2148 = vrot.slane %v2134, %v2147
      %v2150 = vunpack.c.l.s4 1983009808
      %v2151 = vunpack.c.0.s8 %v2150
      %v2152 = vlaneseq
      %v2153 = vshrl.u32 %v2152, 7
      %v2154 = vsub.s32 %v2151, %v2153
      %v2155 = vrot.slane %v2131, %v2154
      %2156 = vrot.lane.b32.xlu0 %v2141, 120
      %v2157 = vpop.permute.xlu0 %2156
      %2158 = vrot.lane.b32.xlu0 %v2148, 120
      %v2159 = vpop.permute.xlu0 %2158
      %2160 = vrot.lane.b32.xlu0 %v2155, 120
      %v2161 = vpop.permute.xlu0 %2160
      %v2162 = vrot.slane %v2157, 4
      %v2163 = vrot.slane %v2159, 4
      %v2164 = vrot.slane %v2161, 4
      %v2165 = vsel %vm345, %v2162, %v2163
      %v2166 = vsel %vm1463, %v2157, %v2165
      %v2167 = vsel %vm345, %v2163, %v2164
      %v2168 = vsel %vm1463, %v2159, %v2167
      %2171 = vst [vmem:[#allocation2 + $0x80] sm:$0x33] %v2166
      %2172 = vst [vmem:[#allocation2 + $0x88] sm:$0x33] %v2168
      %v2173 = vld [vmem:[#allocation3 + $0x2] sm:$0xff]
      %v2174 = vld [vmem:[#allocation3 + $0xa] sm:$0x3]
      %v2175 = vld [vmem:[%s0 + $0x20] sm:$0x11]
      %v2176 = vld [vmem:[%s0 + $0x28] sm:$0x11]
      %v2179 = vunpack.c.l.b16 %v2175
      %v2180 = vunpack.c.h.b16 %v2175
      %v2181 = vunpack.c.l.b16 %v2176
      %v2182 = vunpack.c.h.b16 %v2176
      %v2183 = vpack.c.b16 %v2179, %v2179
      %v2184 = vpack.c.b16 %v2180, %v2180
      %v2185 = vpack.c.b16 %v2181, %v2181
      %v2186 = vpack.c.b16 %v2182, %v2182
      %v2188 = vshrl.u32 %v2183, 16
      %v2189 = vpack.i.b16 %v2188, %v2188
      %v2191 = vlaneseq
      %v2192 = vshrl.u32 %v2191, 7
      %v2193 = vsub.s32 0, %v2192
      %v2194 = vrot.slane %v2189, %v2193
      %v2196 = vshrl.u32 %v2184, 16
      %v2197 = vpack.i.b16 %v2196, %v2196
      %v2199 = vlaneseq
      %v2200 = vshrl.u32 %v2199, 7
      %v2201 = vsub.s32 0, %v2200
      %v2202 = vrot.slane %v2197, %v2201
      %v2204 = vshrl.u32 %v2185, 16
      %v2205 = vpack.i.b16 %v2204, %v2204
      %v2207 = vlaneseq
      %v2208 = vshrl.u32 %v2207, 7
      %v2209 = vsub.s32 0, %v2208
      %v2210 = vrot.slane %v2205, %v2209
      %v2212 = vshrl.u32 %v2186, 16
      %v2213 = vpack.i.b16 %v2212, %v2212
      %v2215 = vlaneseq
      %v2216 = vshrl.u32 %v2215, 7
      %v2217 = vsub.s32 0, %v2216
      %v2218 = vrot.slane %v2213, %v2217
      %v2223 = vcombine.low %v2194, %v2202
      %v2224 = vcombine.low %v2210, %v2218
      %v2226 = vunpack.c.l.s4 1983009808
      %v2227 = vunpack.c.0.s8 %v2226
      %v2228 = vlaneseq
      %v2229 = vshrl.u32 %v2228, 7
      %v2230 = vsub.s32 %v2227, %v2229
      %v2231 = vrot.slane %v2223, %v2230
      %v2233 = vunpack.c.l.s4 1983009808
      %v2234 = vunpack.c.0.s8 %v2233
      %v2235 = vlaneseq
      %v2236 = vshrl.u32 %v2235, 7
      %v2237 = vsub.s32 %v2234, %v2236
      %v2238 = vrot.slane %v2224, %v2237
      %v2239 = vcombine.low %v2231, %v2238
      %2240 = vrot.lane.b32.xlu0 %v2239, 9
      %v2241 = vpop.permute.xlu0 %2240
      %v2242 = vrot.slane %v2241, 6
      %v2243 = vsel %vm1389, %v2242, %v2241
      %v2246 = vmul.bf16 %v2173, %v2243
      %v2247 = vmul.bf16 %v2174, %v2242
      %v2250 = vcombine.low %v2246, %v2246
      %v2252 = vunpack.c.l.s4 1983009808
      %v2253 = vunpack.c.0.s8 %v2252
      %v2254 = vlaneseq
      %v2255 = vshrl.u32 %v2254, 7
      %v2256 = vsub.s32 %v2253, %v2255
      %v2257 = vrot.slane %v2250, %v2256
      %v2259 = vunpack.c.l.s4 1983009808
      %v2260 = vunpack.c.0.s8 %v2259
      %v2261 = vlaneseq
      %v2262 = vshrl.u32 %v2261, 7
      %v2263 = vsub.s32 %v2260, %v2262
      %v2264 = vrot.slane %v2246, %v2263
      %v2265 = vcombine.low %v2247, %v2247
      %v2267 = vunpack.c.l.s4 1983009808
      %v2268 = vunpack.c.0.s8 %v2267
      %v2269 = vlaneseq
      %v2270 = vshrl.u32 %v2269, 7
      %v2271 = vsub.s32 %v2268, %v2270
      %v2272 = vrot.slane %v2265, %v2271
      %2273 = vrot.lane.b32.xlu0 %v2257, 119
      %v2274 = vpop.permute.xlu0 %2273
      %2275 = vrot.lane.b32.xlu0 %v2264, 119
      %v2276 = vpop.permute.xlu0 %2275
      %2277 = vrot.lane.b32.xlu0 %v2272, 119
      %v2278 = vpop.permute.xlu0 %2277
      %v2279 = vrot.slane %v2274, 4
      %v2280 = vrot.slane %v2276, 4
      %v2281 = vrot.slane %v2278, 4
      %v2282 = vsel %vm345, %v2279, %v2280
      %v2283 = vsel %vm1348, %v2274, %v2282
      %v2284 = vsel %vm345, %v2280, %v2281
      %v2285 = vsel %vm1348, %v2276, %v2284
      %2288 = vst [vmem:[#allocation2 + $0x80] sm:$0xcc] %v2283
      %2289 = vst [vmem:[#allocation2 + $0x88] sm:$0xcc] %v2285
      %v2290 = vld [vmem:[#allocation3 + $0x2] sm:$0xff]
      %v2291 = vld [vmem:[#allocation3 + $0xa] sm:$0x3]
      %v2292 = vld [vmem:[%s0 + $0x20] sm:$0x22]
      %v2293 = vld [vmem:[%s0 + $0x28] sm:$0x22]
      %v2296 = vunpack.c.l.b16 %v2292
      %v2297 = vunpack.c.h.b16 %v2292
      %v2298 = vunpack.c.l.b16 %v2293
      %v2299 = vunpack.c.h.b16 %v2293
      %v2300 = vpack.c.b16 %v2296, %v2296
      %v2301 = vpack.c.b16 %v2297, %v2297
      %v2302 = vpack.c.b16 %v2298, %v2298
      %v2303 = vpack.c.b16 %v2299, %v2299
      %v2305 = vpack.i.b16 %v2300, %v2300
      %v2307 = vlaneseq
      %v2308 = vshrl.u32 %v2307, 7
      %v2309 = vsub.s32 1, %v2308
      %v2310 = vrot.slane %v2305, %v2309
      %v2312 = vpack.i.b16 %v2301, %v2301
      %v2314 = vlaneseq
      %v2315 = vshrl.u32 %v2314, 7
      %v2316 = vsub.s32 1, %v2315
      %v2317 = vrot.slane %v2312, %v2316
      %v2319 = vpack.i.b16 %v2302, %v2302
      %v2321 = vlaneseq
      %v2322 = vshrl.u32 %v2321, 7
      %v2323 = vsub.s32 1, %v2322
      %v2324 = vrot.slane %v2319, %v2323
      %v2326 = vpack.i.b16 %v2303, %v2303
      %v2328 = vlaneseq
      %v2329 = vshrl.u32 %v2328, 7
      %v2330 = vsub.s32 1, %v2329
      %v2331 = vrot.slane %v2326, %v2330
      %v2336 = vcombine.low %v2310, %v2317
      %v2337 = vcombine.low %v2324, %v2331
      %v2339 = vunpack.c.l.s4 1983009808
      %v2340 = vunpack.c.0.s8 %v2339
      %v2341 = vlaneseq
      %v2342 = vshrl.u32 %v2341, 7
      %v2343 = vsub.s32 %v2340, %v2342
      %v2344 = vrot.slane %v2336, %v2343
      %v2346 = vunpack.c.l.s4 1983009808
      %v2347 = vunpack.c.0.s8 %v2346
      %v2348 = vlaneseq
      %v2349 = vshrl.u32 %v2348, 7
      %v2350 = vsub.s32 %v2347, %v2349
      %v2351 = vrot.slane %v2337, %v2350
      %v2352 = vcombine.low %v2344, %v2351
      %2353 = vrot.lane.b32.xlu0 %v2352, 55
      %v2354 = vpop.permute.xlu0 %2353
      %v2355 = vrot.slane %v2354, 6
      %v2356 = vsel %vm306, %v2355, %v2354
      %v2359 = vmul.bf16 %v2290, %v2356
      %v2360 = vmul.bf16 %v2291, %v2355
      %v2363 = vcombine.high %v2359, %v2359
      %v2365 = vunpack.c.l.s4 1983009808
      %v2366 = vunpack.c.0.s8 %v2365
      %v2367 = vlaneseq
      %v2368 = vshrl.u32 %v2367, 7
      %v2369 = vsub.s32 %v2366, %v2368
      %v2370 = vrot.slane %v2359, %v2369
      %v2372 = vunpack.c.l.s4 1983009808
      %v2373 = vunpack.c.0.s8 %v2372
      %v2374 = vlaneseq
      %v2375 = vshrl.u32 %v2374, 7
      %v2376 = vsub.s32 %v2373, %v2375
      %v2377 = vrot.slane %v2363, %v2376
      %v2379 = vunpack.c.l.s4 1983009808
      %v2380 = vunpack.c.0.s8 %v2379
      %v2381 = vlaneseq
      %v2382 = vshrl.u32 %v2381, 7
      %v2383 = vsub.s32 %v2380, %v2382
      %v2384 = vrot.slane %v2360, %v2383
      %2385 = vrot.lane.b32.xlu0 %v2370, 73
      %v2386 = vpop.permute.xlu0 %2385
      %2387 = vrot.lane.b32.xlu0 %v2377, 73
      %v2388 = vpop.permute.xlu0 %2387
      %2389 = vrot.lane.b32.xlu0 %v2384, 73
      %v2390 = vpop.permute.xlu0 %2389
      %v2391 = vrot.slane %v2386, 4
      %v2392 = vrot.slane %v2388, 4
      %v2393 = vrot.slane %v2390, 4
      %v2394 = vsel %vm345, %v2391, %v2392
      %v2395 = vsel %vm347, %v2386, %v2394
      %v2396 = vsel %vm345, %v2392, %v2393
      %v2397 = vsel %vm347, %v2388, %v2396
      %2400 = vst [vmem:[#allocation2 + $0x90] sm:$0x33] %v2395
      %2401 = vst [vmem:[#allocation2 + $0x98] sm:$0x33] %v2397
      %v2402 = vld [vmem:[#allocation3 + $0x2] sm:$0xff]
      %v2403 = vld [vmem:[#allocation3 + $0xa] sm:$0x3]
      %v2404 = vld [vmem:[%s0 + $0x20] sm:$0x22]
      %v2405 = vld [vmem:[%s0 + $0x28] sm:$0x22]
      %v2408 = vunpack.c.l.b16 %v2404
      %v2409 = vunpack.c.h.b16 %v2404
      %v2410 = vunpack.c.l.b16 %v2405
      %v2411 = vunpack.c.h.b16 %v2405
      %v2412 = vpack.c.b16 %v2408, %v2408
      %v2413 = vpack.c.b16 %v2409, %v2409
      %v2414 = vpack.c.b16 %v2410, %v2410
      %v2415 = vpack.c.b16 %v2411, %v2411
      %v2417 = vshrl.u32 %v2412, 16
      %v2418 = vpack.i.b16 %v2417, %v2417
      %v2420 = vlaneseq
      %v2421 = vshrl.u32 %v2420, 7
      %v2422 = vsub.s32 1, %v2421
      %v2423 = vrot.slane %v2418, %v2422
      %v2425 = vshrl.u32 %v2413, 16
      %v2426 = vpack.i.b16 %v2425, %v2425
      %v2428 = vlaneseq
      %v2429 = vshrl.u32 %v2428, 7
      %v2430 = vsub.s32 1, %v2429
      %v2431 = vrot.slane %v2426, %v2430
      %v2433 = vshrl.u32 %v2414, 16
      %v2434 = vpack.i.b16 %v2433, %v2433
      %v2436 = vlaneseq
      %v2437 = vshrl.u32 %v2436, 7
      %v2438 = vsub.s32 1, %v2437
      %v2439 = vrot.slane %v2434, %v2438
      %v2441 = vshrl.u32 %v2415, 16
      %v2442 = vpack.i.b16 %v2441, %v2441
      %v2444 = vlaneseq
      %v2445 = vshrl.u32 %v2444, 7
      %v2446 = vsub.s32 1, %v2445
      %v2447 = vrot.slane %v2442, %v2446
      %v2452 = vcombine.low %v2423, %v2431
      %v2453 = vcombine.low %v2439, %v2447
      %v2455 = vunpack.c.l.s4 1983009808
      %v2456 = vunpack.c.0.s8 %v2455
      %v2457 = vlaneseq
      %v2458 = vshrl.u32 %v2457, 7
      %v2459 = vsub.s32 %v2456, %v2458
      %v2460 = vrot.slane %v2452, %v2459
      %v2462 = vunpack.c.l.s4 1983009808
      %v2463 = vunpack.c.0.s8 %v2462
      %v2464 = vlaneseq
      %v2465 = vshrl.u32 %v2464, 7
      %v2466 = vsub.s32 %v2463, %v2465
      %v2467 = vrot.slane %v2453, %v2466
      %v2468 = vcombine.low %v2460, %v2467
      %2469 = vrot.lane.b32.xlu0 %v2468, 56
      %v2470 = vpop.permute.xlu0 %2469
      %v2471 = vrot.slane %v2470, 6
      %v2472 = vsel %vm425, %v2471, %v2470
      %v2475 = vmul.bf16 %v2402, %v2472
      %v2476 = vmul.bf16 %v2403, %v2471
      %v2479 = vcombine.low %v2475, %v2475
      %v2481 = vunpack.c.l.s4 1983009808
      %v2482 = vunpack.c.0.s8 %v2481
      %v2483 = vlaneseq
      %v2484 = vshrl.u32 %v2483, 7
      %v2485 = vsub.s32 %v2482, %v2484
      %v2486 = vrot.slane %v2479, %v2485
      %v2488 = vunpack.c.l.s4 1983009808
      %v2489 = vunpack.c.0.s8 %v2488
      %v2490 = vlaneseq
      %v2491 = vshrl.u32 %v2490, 7
      %v2492 = vsub.s32 %v2489, %v2491
      %v2493 = vrot.slane %v2475, %v2492
      %v2494 = vcombine.low %v2476, %v2476
      %v2496 = vunpack.c.l.s4 1983009808
      %v2497 = vunpack.c.0.s8 %v2496
      %v2498 = vlaneseq
      %v2499 = vshrl.u32 %v2498, 7
      %v2500 = vsub.s32 %v2497, %v2499
      %v2501 = vrot.slane %v2494, %v2500
      %2502 = vrot.lane.b32.xlu0 %v2486, 72
      %v2503 = vpop.permute.xlu0 %2502
      %2504 = vrot.lane.b32.xlu0 %v2493, 72
      %v2505 = vpop.permute.xlu0 %2504
      %2506 = vrot.lane.b32.xlu0 %v2501, 72
      %v2507 = vpop.permute.xlu0 %2506
      %v2508 = vrot.slane %v2503, 4
      %v2509 = vrot.slane %v2505, 4
      %v2510 = vrot.slane %v2507, 4
      %v2511 = vsel %vm345, %v2508, %v2509
      %v2512 = vsel %vm466, %v2503, %v2511
      %v2513 = vsel %vm345, %v2509, %v2510
      %v2514 = vsel %vm466, %v2505, %v2513
      %2517 = vst [vmem:[#allocation2 + $0x90] sm:$0xcc] %v2512
      %2518 = vst [vmem:[#allocation2 + $0x98] sm:$0xcc] %v2514
      %v2519 = vld [vmem:[#allocation3 + $0x2] sm:$0xff]
      %v2520 = vld [vmem:[#allocation3 + $0xa] sm:$0x3]
      %v2521 = vld [vmem:[%s0 + $0x20] sm:$0x44]
      %v2522 = vld [vmem:[%s0 + $0x28] sm:$0x44]
      %v2525 = vunpack.c.l.b16 %v2521
      %v2526 = vunpack.c.h.b16 %v2521
      %v2527 = vunpack.c.l.b16 %v2522
      %v2528 = vunpack.c.h.b16 %v2522
      %v2529 = vpack.c.b16 %v2525, %v2525
      %v2530 = vpack.c.b16 %v2526, %v2526
      %v2531 = vpack.c.b16 %v2527, %v2527
      %v2532 = vpack.c.b16 %v2528, %v2528
      %v2534 = vpack.i.b16 %v2529, %v2529
      %v2536 = vlaneseq
      %v2537 = vshrl.u32 %v2536, 7
      %v2538 = vsub.s32 2, %v2537
      %v2539 = vrot.slane %v2534, %v2538
      %v2541 = vpack.i.b16 %v2530, %v2530
      %v2543 = vlaneseq
      %v2544 = vshrl.u32 %v2543, 7
      %v2545 = vsub.s32 2, %v2544
      %v2546 = vrot.slane %v2541, %v2545
      %v2548 = vpack.i.b16 %v2531, %v2531
      %v2550 = vlaneseq
      %v2551 = vshrl.u32 %v2550, 7
      %v2552 = vsub.s32 2, %v2551
      %v2553 = vrot.slane %v2548, %v2552
      %v2555 = vpack.i.b16 %v2532, %v2532
      %v2557 = vlaneseq
      %v2558 = vshrl.u32 %v2557, 7
      %v2559 = vsub.s32 2, %v2558
      %v2560 = vrot.slane %v2555, %v2559
      %v2565 = vcombine.low %v2539, %v2546
      %v2566 = vcombine.low %v2553, %v2560
      %v2568 = vunpack.c.l.s4 1983009808
      %v2569 = vunpack.c.0.s8 %v2568
      %v2570 = vlaneseq
      %v2571 = vshrl.u32 %v2570, 7
      %v2572 = vsub.s32 %v2569, %v2571
      %v2573 = vrot.slane %v2565, %v2572
      %v2575 = vunpack.c.l.s4 1983009808
      %v2576 = vunpack.c.0.s8 %v2575
      %v2577 = vlaneseq
      %v2578 = vshrl.u32 %v2577, 7
      %v2579 = vsub.s32 %v2576, %v2578
      %v2580 = vrot.slane %v2566, %v2579
      %v2581 = vcombine.low %v2573, %v2580
      %2582 = vrot.lane.b32.xlu0 %v2581, 57
      %v2583 = vpop.permute.xlu0 %2582
      %v2584 = vrot.slane %v2583, 6
      %v2585 = vsel %vm540, %v2584, %v2583
      %v2588 = vmul.bf16 %v2519, %v2585
      %v2589 = vmul.bf16 %v2520, %v2584
      %v2592 = vcombine.high %v2588, %v2588
      %v2594 = vunpack.c.l.s4 1983009808
      %v2595 = vunpack.c.0.s8 %v2594
      %v2596 = vlaneseq
      %v2597 = vshrl.u32 %v2596, 7
      %v2598 = vsub.s32 %v2595, %v2597
      %v2599 = vrot.slane %v2588, %v2598
      %v2601 = vunpack.c.l.s4 1983009808
      %v2602 = vunpack.c.0.s8 %v2601
      %v2603 = vlaneseq
      %v2604 = vshrl.u32 %v2603, 7
      %v2605 = vsub.s32 %v2602, %v2604
      %v2606 = vrot.slane %v2592, %v2605
      %v2608 = vunpack.c.l.s4 1983009808
      %v2609 = vunpack.c.0.s8 %v2608
      %v2610 = vlaneseq
      %v2611 = vshrl.u32 %v2610, 7
      %v2612 = vsub.s32 %v2609, %v2611
      %v2613 = vrot.slane %v2589, %v2612
      %2614 = vrot.lane.b32.xlu0 %v2599, 71
      %v2615 = vpop.permute.xlu0 %2614
      %2616 = vrot.lane.b32.xlu0 %v2606, 71
      %v2617 = vpop.permute.xlu0 %2616
      %2618 = vrot.lane.b32.xlu0 %v2613, 71
      %v2619 = vpop.permute.xlu0 %2618
      %v2620 = vrot.slane %v2615, 4
      %v2621 = vrot.slane %v2617, 4
      %v2622 = vrot.slane %v2619, 4
      %v2623 = vsel %vm345, %v2620, %v2621
      %v2624 = vsel %vm580, %v2615, %v2623
      %v2625 = vsel %vm345, %v2621, %v2622
      %v2626 = vsel %vm580, %v2617, %v2625
      %2629 = vst [vmem:[#allocation2 + $0xa0] sm:$0x33] %v2624
      %2630 = vst [vmem:[#allocation2 + $0xa8] sm:$0x33] %v2626
      %v2631 = vld [vmem:[#allocation3 + $0x2] sm:$0xff]
      %v2632 = vld [vmem:[#allocation3 + $0xa] sm:$0x3]
      %v2633 = vld [vmem:[%s0 + $0x20] sm:$0x44]
      %v2634 = vld [vmem:[%s0 + $0x28] sm:$0x44]
      %v2637 = vunpack.c.l.b16 %v2633
      %v2638 = vunpack.c.h.b16 %v2633
      %v2639 = vunpack.c.l.b16 %v2634
      %v2640 = vunpack.c.h.b16 %v2634
      %v2641 = vpack.c.b16 %v2637, %v2637
      %v2642 = vpack.c.b16 %v2638, %v2638
      %v2643 = vpack.c.b16 %v2639, %v2639
      %v2644 = vpack.c.b16 %v2640, %v2640
      %v2646 = vshrl.u32 %v2641, 16
      %v2647 = vpack.i.b16 %v2646, %v2646
      %v2649 = vlaneseq
      %v2650 = vshrl.u32 %v2649, 7
      %v2651 = vsub.s32 2, %v2650
      %v2652 = vrot.slane %v2647, %v2651
      %v2654 = vshrl.u32 %v2642, 16
      %v2655 = vpack.i.b16 %v2654, %v2654
      %v2657 = vlaneseq
      %v2658 = vshrl.u32 %v2657, 7
      %v2659 = vsub.s32 2, %v2658
      %v2660 = vrot.slane %v2655, %v2659
      %v2662 = vshrl.u32 %v2643, 16
      %v2663 = vpack.i.b16 %v2662, %v2662
      %v2665 = vlaneseq
      %v2666 = vshrl.u32 %v2665, 7
      %v2667 = vsub.s32 2, %v2666
      %v2668 = vrot.slane %v2663, %v2667
      %v2670 = vshrl.u32 %v2644, 16
      %v2671 = vpack.i.b16 %v2670, %v2670
      %v2673 = vlaneseq
      %v2674 = vshrl.u32 %v2673, 7
      %v2675 = vsub.s32 2, %v2674
      %v2676 = vrot.slane %v2671, %v2675
      %v2681 = vcombine.low %v2652, %v2660
      %v2682 = vcombine.low %v2668, %v2676
      %v2684 = vunpack.c.l.s4 1983009808
      %v2685 = vunpack.c.0.s8 %v2684
      %v2686 = vlaneseq
      %v2687 = vshrl.u32 %v2686, 7
      %v2688 = vsub.s32 %v2685, %v2687
      %v2689 = vrot.slane %v2681, %v2688
      %v2691 = vunpack.c.l.s4 1983009808
      %v2692 = vunpack.c.0.s8 %v2691
      %v2693 = vlaneseq
      %v2694 = vshrl.u32 %v2693, 7
      %v2695 = vsub.s32 %v2692, %v2694
      %v2696 = vrot.slane %v2682, %v2695
      %v2697 = vcombine.low %v2689, %v2696
      %2698 = vrot.lane.b32.xlu0 %v2697, 63
      %v2699 = vpop.permute.xlu0 %2698
      %v2700 = vrot.slane %v2699, 6
      %v2701 = vsel %vm658, %v2700, %v2699
      %v2704 = vmul.bf16 %v2631, %v2701
      %v2705 = vmul.bf16 %v2632, %v2700
      %v2708 = vcombine.low %v2704, %v2704
      %v2710 = vunpack.c.l.s4 1983009808
      %v2711 = vunpack.c.0.s8 %v2710
      %v2712 = vlaneseq
      %v2713 = vshrl.u32 %v2712, 7
      %v2714 = vsub.s32 %v2711, %v2713
      %v2715 = vrot.slane %v2708, %v2714
      %v2717 = vunpack.c.l.s4 1983009808
      %v2718 = vunpack.c.0.s8 %v2717
      %v2719 = vlaneseq
      %v2720 = vshrl.u32 %v2719, 7
      %v2721 = vsub.s32 %v2718, %v2720
      %v2722 = vrot.slane %v2704, %v2721
      %v2723 = vcombine.low %v2705, %v2705
      %v2725 = vunpack.c.l.s4 1983009808
      %v2726 = vunpack.c.0.s8 %v2725
      %v2727 = vlaneseq
      %v2728 = vshrl.u32 %v2727, 7
      %v2729 = vsub.s32 %v2726, %v2728
      %v2730 = vrot.slane %v2723, %v2729
      %2731 = vrot.lane.b32.xlu0 %v2715, 65
      %v2732 = vpop.permute.xlu0 %2731
      %2733 = vrot.lane.b32.xlu0 %v2722, 65
      %v2734 = vpop.permute.xlu0 %2733
      %2735 = vrot.lane.b32.xlu0 %v2730, 65
      %v2736 = vpop.permute.xlu0 %2735
      %v2737 = vrot.slane %v2732, 4
      %v2738 = vrot.slane %v2734, 4
      %v2739 = vrot.slane %v2736, 4
      %v2740 = vsel %vm345, %v2737, %v2738
      %v2741 = vsel %vm699, %v2732, %v2740
      %v2742 = vsel %vm345, %v2738, %v2739
      %v2743 = vsel %vm699, %v2734, %v2742
      %2746 = vst [vmem:[#allocation2 + $0xa0] sm:$0xcc] %v2741
      %2747 = vst [vmem:[#allocation2 + $0xa8] sm:$0xcc] %v2743
      %v2748 = vld [vmem:[#allocation3 + $0x2] sm:$0xff]
      %v2749 = vld [vmem:[#allocation3 + $0xa] sm:$0x3]
      %v2750 = vld [vmem:[%s0 + $0x20] sm:$0x88]
      %v2751 = vld [vmem:[%s0 + $0x28] sm:$0x88]
      %v2754 = vunpack.c.l.b16 %v2750
      %v2755 = vunpack.c.h.b16 %v2750
      %v2756 = vunpack.c.l.b16 %v2751
      %v2757 = vunpack.c.h.b16 %v2751
      %v2758 = vpack.c.b16 %v2754, %v2754
      %v2759 = vpack.c.b16 %v2755, %v2755
      %v2760 = vpack.c.b16 %v2756, %v2756
      %v2761 = vpack.c.b16 %v2757, %v2757
      %v2763 = vpack.i.b16 %v2758, %v2758
      %v2765 = vlaneseq
      %v2766 = vshrl.u32 %v2765, 7
      %v2767 = vsub.s32 3, %v2766
      %v2768 = vrot.slane %v2763, %v2767
      %v2770 = vpack.i.b16 %v2759, %v2759
      %v2772 = vlaneseq
      %v2773 = vshrl.u32 %v2772, 7
      %v2774 = vsub.s32 3, %v2773
      %v2775 = vrot.slane %v2770, %v2774
      %v2777 = vpack.i.b16 %v2760, %v2760
      %v2779 = vlaneseq
      %v2780 = vshrl.u32 %v2779, 7
      %v2781 = vsub.s32 3, %v2780
      %v2782 = vrot.slane %v2777, %v2781
      %v2784 = vpack.i.b16 %v2761, %v2761
      %v2786 = vlaneseq
      %v2787 = vshrl.u32 %v2786, 7
      %v2788 = vsub.s32 3, %v2787
      %v2789 = vrot.slane %v2784, %v2788
      %v2794 = vcombine.low %v2768, %v2775
      %v2795 = vcombine.low %v2782, %v2789
      %v2797 = vunpack.c.l.s4 1983009808
      %v2798 = vunpack.c.0.s8 %v2797
      %v2799 = vlaneseq
      %v2800 = vshrl.u32 %v2799, 7
      %v2801 = vsub.s32 %v2798, %v2800
      %v2802 = vrot.slane %v2794, %v2801
      %v2804 = vunpack.c.l.s4 1983009808
      %v2805 = vunpack.c.0.s8 %v2804
      %v2806 = vlaneseq
      %v2807 = vshrl.u32 %v2806, 7
      %v2808 = vsub.s32 %v2805, %v2807
      %v2809 = vrot.slane %v2795, %v2808
      %v2810 = vcombine.low %v2802, %v2809
      %2811 = vrot.lane.b32.xlu0 %v2810, 64
      %v2812 = vpop.permute.xlu0 %2811
      %v2813 = vrot.slane %v2812, 6
      %v2814 = vsel %vm773, %v2813, %v2812
      %v2817 = vmul.bf16 %v2748, %v2814
      %v2818 = vmul.bf16 %v2749, %v2813
      %v2821 = vcombine.high %v2817, %v2817
      %v2823 = vunpack.c.l.s4 1983009808
      %v2824 = vunpack.c.0.s8 %v2823
      %v2825 = vlaneseq
      %v2826 = vshrl.u32 %v2825, 7
      %v2827 = vsub.s32 %v2824, %v2826
      %v2828 = vrot.slane %v2817, %v2827
      %v2830 = vunpack.c.l.s4 1983009808
      %v2831 = vunpack.c.0.s8 %v2830
      %v2832 = vlaneseq
      %v2833 = vshrl.u32 %v2832, 7
      %v2834 = vsub.s32 %v2831, %v2833
      %v2835 = vrot.slane %v2821, %v2834
      %v2837 = vunpack.c.l.s4 1983009808
      %v2838 = vunpack.c.0.s8 %v2837
      %v2839 = vlaneseq
      %v2840 = vshrl.u32 %v2839, 7
      %v2841 = vsub.s32 %v2838, %v2840
      %v2842 = vrot.slane %v2818, %v2841
      %2843 = vrot.lane.b32.xlu0 %v2828, 64
      %v2844 = vpop.permute.xlu0 %2843
      %2845 = vrot.lane.b32.xlu0 %v2835, 64
      %v2846 = vpop.permute.xlu0 %2845
      %2847 = vrot.lane.b32.xlu0 %v2842, 64
      %v2848 = vpop.permute.xlu0 %2847
      %v2849 = vrot.slane %v2844, 4
      %v2850 = vrot.slane %v2846, 4
      %v2851 = vrot.slane %v2848, 4
      %v2852 = vsel %vm345, %v2849, %v2850
      %v2853 = vsel %vm773, %v2844, %v2852
      %v2854 = vsel %vm345, %v2850, %v2851
      %v2855 = vsel %vm773, %v2846, %v2854
      %2858 = vst [vmem:[#allocation2 + $0xb0] sm:$0x33] %v2853
      %2859 = vst [vmem:[#allocation2 + $0xb8] sm:$0x33] %v2855
      %v2860 = vld [vmem:[#allocation3 + $0x2] sm:$0xff]
      %v2861 = vld [vmem:[#allocation3 + $0xa] sm:$0x3]
      %v2862 = vld [vmem:[%s0 + $0x20] sm:$0x88]
      %v2863 = vld [vmem:[%s0 + $0x28] sm:$0x88]
      %v2866 = vunpack.c.l.b16 %v2862
      %v2867 = vunpack.c.h.b16 %v2862
      %v2868 = vunpack.c.l.b16 %v2863
      %v2869 = vunpack.c.h.b16 %v2863
      %v2870 = vpack.c.b16 %v2866, %v2866
      %v2871 = vpack.c.b16 %v2867, %v2867
      %v2872 = vpack.c.b16 %v2868, %v2868
      %v2873 = vpack.c.b16 %v2869, %v2869
      %v2875 = vshrl.u32 %v2870, 16
      %v2876 = vpack.i.b16 %v2875, %v2875
      %v2878 = vlaneseq
      %v2879 = vshrl.u32 %v2878, 7
      %v2880 = vsub.s32 3, %v2879
      %v2881 = vrot.slane %v2876, %v2880
      %v2883 = vshrl.u32 %v2871, 16
      %v2884 = vpack.i.b16 %v2883, %v2883
      %v2886 = vlaneseq
      %v2887 = vshrl.u32 %v2886, 7
      %v2888 = vsub.s32 3, %v2887
      %v2889 = vrot.slane %v2884, %v2888
      %v2891 = vshrl.u32 %v2872, 16
      %v2892 = vpack.i.b16 %v2891, %v2891
      %v2894 = vlaneseq
      %v2895 = vshrl.u32 %v2894, 7
      %v2896 = vsub.s32 3, %v2895
      %v2897 = vrot.slane %v2892, %v2896
      %v2899 = vshrl.u32 %v2873, 16
      %v2900 = vpack.i.b16 %v2899, %v2899
      %v2902 = vlaneseq
      %v2903 = vshrl.u32 %v2902, 7
      %v2904 = vsub.s32 3, %v2903
      %v2905 = vrot.slane %v2900, %v2904
      %v2910 = vcombine.low %v2881, %v2889
      %v2911 = vcombine.low %v2897, %v2905
      %v2913 = vunpack.c.l.s4 1983009808
      %v2914 = vunpack.c.0.s8 %v2913
      %v2915 = vlaneseq
      %v2916 = vshrl.u32 %v2915, 7
      %v2917 = vsub.s32 %v2914, %v2916
      %v2918 = vrot.slane %v2910, %v2917
      %v2920 = vunpack.c.l.s4 1983009808
      %v2921 = vunpack.c.0.s8 %v2920
      %v2922 = vlaneseq
      %v2923 = vshrl.u32 %v2922, 7
      %v2924 = vsub.s32 %v2921, %v2923
      %v2925 = vrot.slane %v2911, %v2924
      %v2926 = vcombine.low %v2918, %v2925
      %2927 = vrot.lane.b32.xlu0 %v2926, 65
      %v2928 = vpop.permute.xlu0 %2927
      %v2929 = vrot.slane %v2928, 6
      %v2930 = vsel %vm699, %v2929, %v2928
      %v2933 = vmul.bf16 %v2860, %v2930
      %v2934 = vmul.bf16 %v2861, %v2929
      %v2937 = vcombine.low %v2933, %v2933
      %v2939 = vunpack.c.l.s4 1983009808
      %v2940 = vunpack.c.0.s8 %v2939
      %v2941 = vlaneseq
      %v2942 = vshrl.u32 %v2941, 7
      %v2943 = vsub.s32 %v2940, %v2942
      %v2944 = vrot.slane %v2937, %v2943
      %v2946 = vunpack.c.l.s4 1983009808
      %v2947 = vunpack.c.0.s8 %v2946
      %v2948 = vlaneseq
      %v2949 = vshrl.u32 %v2948, 7
      %v2950 = vsub.s32 %v2947, %v2949
      %v2951 = vrot.slane %v2933, %v2950
      %v2952 = vcombine.low %v2934, %v2934
      %v2954 = vunpack.c.l.s4 1983009808
      %v2955 = vunpack.c.0.s8 %v2954
      %v2956 = vlaneseq
      %v2957 = vshrl.u32 %v2956, 7
      %v2958 = vsub.s32 %v2955, %v2957
      %v2959 = vrot.slane %v2952, %v2958
      %2960 = vrot.lane.b32.xlu0 %v2944, 63
      %v2961 = vpop.permute.xlu0 %2960
      %2962 = vrot.lane.b32.xlu0 %v2951, 63
      %v2963 = vpop.permute.xlu0 %2962
      %2964 = vrot.lane.b32.xlu0 %v2959, 63
      %v2965 = vpop.permute.xlu0 %2964
      %v2966 = vrot.slane %v2961, 4
      %v2967 = vrot.slane %v2963, 4
      %v2968 = vrot.slane %v2965, 4
      %v2969 = vsel %vm345, %v2966, %v2967
      %v2970 = vsel %vm658, %v2961, %v2969
      %v2971 = vsel %vm345, %v2967, %v2968
      %v2972 = vsel %vm658, %v2963, %v2971
      %2975 = vst [vmem:[#allocation2 + $0xb0] sm:$0xcc] %v2970
      %2976 = vst [vmem:[#allocation2 + $0xb8] sm:$0xcc] %v2972
      %v2977 = vld [vmem:[#allocation3 + $0x2] sm:$0xff]
      %v2978 = vld [vmem:[#allocation3 + $0xa] sm:$0x3]
      %v2979 = vld [vmem:[%s0 + $0x30] sm:$0x11]
      %v2980 = vld [vmem:[%s0 + $0x38] sm:$0x11]
      %v2983 = vunpack.c.l.b16 %v2979
      %v2984 = vunpack.c.h.b16 %v2979
      %v2985 = vunpack.c.l.b16 %v2980
      %v2986 = vunpack.c.h.b16 %v2980
      %v2987 = vpack.c.b16 %v2983, %v2983
      %v2988 = vpack.c.b16 %v2984, %v2984
      %v2989 = vpack.c.b16 %v2985, %v2985
      %v2990 = vpack.c.b16 %v2986, %v2986
      %v2992 = vpack.i.b16 %v2987, %v2987
      %v2994 = vlaneseq
      %v2995 = vshrl.u32 %v2994, 7
      %v2996 = vsub.s32 0, %v2995
      %v2997 = vrot.slane %v2992, %v2996
      %v2999 = vpack.i.b16 %v2988, %v2988
      %v3001 = vlaneseq
      %v3002 = vshrl.u32 %v3001, 7
      %v3003 = vsub.s32 0, %v3002
      %v3004 = vrot.slane %v2999, %v3003
      %v3006 = vpack.i.b16 %v2989, %v2989
      %v3008 = vlaneseq
      %v3009 = vshrl.u32 %v3008, 7
      %v3010 = vsub.s32 0, %v3009
      %v3011 = vrot.slane %v3006, %v3010
      %v3013 = vpack.i.b16 %v2990, %v2990
      %v3015 = vlaneseq
      %v3016 = vshrl.u32 %v3015, 7
      %v3017 = vsub.s32 0, %v3016
      %v3018 = vrot.slane %v3013, %v3017
      %v3023 = vcombine.low %v2997, %v3004
      %v3024 = vcombine.low %v3011, %v3018
      %v3026 = vunpack.c.l.s4 1983009808
      %v3027 = vunpack.c.0.s8 %v3026
      %v3028 = vlaneseq
      %v3029 = vshrl.u32 %v3028, 7
      %v3030 = vsub.s32 %v3027, %v3029
      %v3031 = vrot.slane %v3023, %v3030
      %v3033 = vunpack.c.l.s4 1983009808
      %v3034 = vunpack.c.0.s8 %v3033
      %v3035 = vlaneseq
      %v3036 = vshrl.u32 %v3035, 7
      %v3037 = vsub.s32 %v3034, %v3036
      %v3038 = vrot.slane %v3024, %v3037
      %v3039 = vcombine.low %v3031, %v3038
      %3040 = vrot.lane.b32.xlu0 %v3039, 71
      %v3041 = vpop.permute.xlu0 %3040
      %v3042 = vrot.slane %v3041, 6
      %v3043 = vsel %vm580, %v3042, %v3041
      %v3046 = vmul.bf16 %v2977, %v3043
      %v3047 = vmul.bf16 %v2978, %v3042
      %v3050 = vcombine.high %v3046, %v3046
      %v3052 = vunpack.c.l.s4 1983009808
      %v3053 = vunpack.c.0.s8 %v3052
      %v3054 = vlaneseq
      %v3055 = vshrl.u32 %v3054, 7
      %v3056 = vsub.s32 %v3053, %v3055
      %v3057 = vrot.slane %v3046, %v3056
      %v3059 = vunpack.c.l.s4 1983009808
      %v3060 = vunpack.c.0.s8 %v3059
      %v3061 = vlaneseq
      %v3062 = vshrl.u32 %v3061, 7
      %v3063 = vsub.s32 %v3060, %v3062
      %v3064 = vrot.slane %v3050, %v3063
      %v3066 = vunpack.c.l.s4 1983009808
      %v3067 = vunpack.c.0.s8 %v3066
      %v3068 = vlaneseq
      %v3069 = vshrl.u32 %v3068, 7
      %v3070 = vsub.s32 %v3067, %v3069
      %v3071 = vrot.slane %v3047, %v3070
      %3072 = vrot.lane.b32.xlu0 %v3057, 57
      %v3073 = vpop.permute.xlu0 %3072
      %3074 = vrot.lane.b32.xlu0 %v3064, 57
      %v3075 = vpop.permute.xlu0 %3074
      %3076 = vrot.lane.b32.xlu0 %v3071, 57
      %v3077 = vpop.permute.xlu0 %3076
      %v3078 = vrot.slane %v3073, 4
      %v3079 = vrot.slane %v3075, 4
      %v3080 = vrot.slane %v3077, 4
      %v3081 = vsel %vm345, %v3078, %v3079
      %v3082 = vsel %vm540, %v3073, %v3081
      %v3083 = vsel %vm345, %v3079, %v3080
      %v3084 = vsel %vm540, %v3075, %v3083
      %3087 = vst [vmem:[#allocation2 + $0xc0] sm:$0x33] %v3082
      %3088 = vst [vmem:[#allocation2 + $0xc8] sm:$0x33] %v3084
      %v3089 = vld [vmem:[#allocation3 + $0x2] sm:$0xff]
      %v3090 = vld [vmem:[#allocation3 + $0xa] sm:$0x3]
      %v3091 = vld [vmem:[%s0 + $0x30] sm:$0x11]
      %v3092 = vld [vmem:[%s0 + $0x38] sm:$0x11]
      %v3095 = vunpack.c.l.b16 %v3091
      %v3096 = vunpack.c.h.b16 %v3091
      %v3097 = vunpack.c.l.b16 %v3092
      %v3098 = vunpack.c.h.b16 %v3092
      %v3099 = vpack.c.b16 %v3095, %v3095
      %v3100 = vpack.c.b16 %v3096, %v3096
      %v3101 = vpack.c.b16 %v3097, %v3097
      %v3102 = vpack.c.b16 %v3098, %v3098
      %v3104 = vshrl.u32 %v3099, 16
      %v3105 = vpack.i.b16 %v3104, %v3104
      %v3107 = vlaneseq
      %v3108 = vshrl.u32 %v3107, 7
      %v3109 = vsub.s32 0, %v3108
      %v3110 = vrot.slane %v3105, %v3109
      %v3112 = vshrl.u32 %v3100, 16
      %v3113 = vpack.i.b16 %v3112, %v3112
      %v3115 = vlaneseq
      %v3116 = vshrl.u32 %v3115, 7
      %v3117 = vsub.s32 0, %v3116
      %v3118 = vrot.slane %v3113, %v3117
      %v3120 = vshrl.u32 %v3101, 16
      %v3121 = vpack.i.b16 %v3120, %v3120
      %v3123 = vlaneseq
      %v3124 = vshrl.u32 %v3123, 7
      %v3125 = vsub.s32 0, %v3124
      %v3126 = vrot.slane %v3121, %v3125
      %v3128 = vshrl.u32 %v3102, 16
      %v3129 = vpack.i.b16 %v3128, %v3128
      %v3131 = vlaneseq
      %v3132 = vshrl.u32 %v3131, 7
      %v3133 = vsub.s32 0, %v3132
      %v3134 = vrot.slane %v3129, %v3133
      %v3139 = vcombine.low %v3110, %v3118
      %v3140 = vcombine.low %v3126, %v3134
      %v3142 = vunpack.c.l.s4 1983009808
      %v3143 = vunpack.c.0.s8 %v3142
      %v3144 = vlaneseq
      %v3145 = vshrl.u32 %v3144, 7
      %v3146 = vsub.s32 %v3143, %v3145
      %v3147 = vrot.slane %v3139, %v3146
      %v3149 = vunpack.c.l.s4 1983009808
      %v3150 = vunpack.c.0.s8 %v3149
      %v3151 = vlaneseq
      %v3152 = vshrl.u32 %v3151, 7
      %v3153 = vsub.s32 %v3150, %v3152
      %v3154 = vrot.slane %v3140, %v3153
      %v3155 = vcombine.low %v3147, %v3154
      %3156 = vrot.lane.b32.xlu0 %v3155, 72
      %v3157 = vpop.permute.xlu0 %3156
      %v3158 = vrot.slane %v3157, 6
      %v3159 = vsel %vm466, %v3158, %v3157
      %v3162 = vmul.bf16 %v3089, %v3159
      %v3163 = vmul.bf16 %v3090, %v3158
      %v3166 = vcombine.low %v3162, %v3162
      %v3168 = vunpack.c.l.s4 1983009808
      %v3169 = vunpack.c.0.s8 %v3168
      %v3170 = vlaneseq
      %v3171 = vshrl.u32 %v3170, 7
      %v3172 = vsub.s32 %v3169, %v3171
      %v3173 = vrot.slane %v3166, %v3172
      %v3175 = vunpack.c.l.s4 1983009808
      %v3176 = vunpack.c.0.s8 %v3175
      %v3177 = vlaneseq
      %v3178 = vshrl.u32 %v3177, 7
      %v3179 = vsub.s32 %v3176, %v3178
      %v3180 = vrot.slane %v3162, %v3179
      %v3181 = vcombine.low %v3163, %v3163
      %v3183 = vunpack.c.l.s4 1983009808
      %v3184 = vunpack.c.0.s8 %v3183
      %v3185 = vlaneseq
      %v3186 = vshrl.u32 %v3185, 7
      %v3187 = vsub.s32 %v3184, %v3186
      %v3188 = vrot.slane %v3181, %v3187
      %3189 = vrot.lane.b32.xlu0 %v3173, 56
      %v3190 = vpop.permute.xlu0 %3189
      %3191 = vrot.lane.b32.xlu0 %v3180, 56
      %v3192 = vpop.permute.xlu0 %3191
      %3193 = vrot.lane.b32.xlu0 %v3188, 56
      %v3194 = vpop.permute.xlu0 %3193
      %v3195 = vrot.slane %v3190, 4
      %v3196 = vrot.slane %v3192, 4
      %v3197 = vrot.slane %v3194, 4
      %v3198 = vsel %vm345, %v3195, %v3196
      %v3199 = vsel %vm425, %v3190, %v3198
      %v3200 = vsel %vm345, %v3196, %v3197
      %v3201 = vsel %vm425, %v3192, %v3200
      %3204 = vst [vmem:[#allocation2 + $0xc0] sm:$0xcc] %v3199
      %3205 = vst [vmem:[#allocation2 + $0xc8] sm:$0xcc] %v3201
      %v3206 = vld [vmem:[#allocation3 + $0x2] sm:$0xff]
      %v3207 = vld [vmem:[#allocation3 + $0xa] sm:$0x3]
      %v3208 = vld [vmem:[%s0 + $0x30] sm:$0x22]
      %v3209 = vld [vmem:[%s0 + $0x38] sm:$0x22]
      %v3212 = vunpack.c.l.b16 %v3208
      %v3213 = vunpack.c.h.b16 %v3208
      %v3214 = vunpack.c.l.b16 %v3209
      %v3215 = vunpack.c.h.b16 %v3209
      %v3216 = vpack.c.b16 %v3212, %v3212
      %v3217 = vpack.c.b16 %v3213, %v3213
      %v3218 = vpack.c.b16 %v3214, %v3214
      %v3219 = vpack.c.b16 %v3215, %v3215
      %v3221 = vpack.i.b16 %v3216, %v3216
      %v3223 = vlaneseq
      %v3224 = vshrl.u32 %v3223, 7
      %v3225 = vsub.s32 1, %v3224
      %v3226 = vrot.slane %v3221, %v3225
      %v3228 = vpack.i.b16 %v3217, %v3217
      %v3230 = vlaneseq
      %v3231 = vshrl.u32 %v3230, 7
      %v3232 = vsub.s32 1, %v3231
      %v3233 = vrot.slane %v3228, %v3232
      %v3235 = vpack.i.b16 %v3218, %v3218
      %v3237 = vlaneseq
      %v3238 = vshrl.u32 %v3237, 7
      %v3239 = vsub.s32 1, %v3238
      %v3240 = vrot.slane %v3235, %v3239
      %v3242 = vpack.i.b16 %v3219, %v3219
      %v3244 = vlaneseq
      %v3245 = vshrl.u32 %v3244, 7
      %v3246 = vsub.s32 1, %v3245
      %v3247 = vrot.slane %v3242, %v3246
      %v3252 = vcombine.low %v3226, %v3233
      %v3253 = vcombine.low %v3240, %v3247
      %v3255 = vunpack.c.l.s4 1983009808
      %v3256 = vunpack.c.0.s8 %v3255
      %v3257 = vlaneseq
      %v3258 = vshrl.u32 %v3257, 7
      %v3259 = vsub.s32 %v3256, %v3258
      %v3260 = vrot.slane %v3252, %v3259
      %v3262 = vunpack.c.l.s4 1983009808
      %v3263 = vunpack.c.0.s8 %v3262
      %v3264 = vlaneseq
      %v3265 = vshrl.u32 %v3264, 7
      %v3266 = vsub.s32 %v3263, %v3265
      %v3267 = vrot.slane %v3253, %v3266
      %v3268 = vcombine.low %v3260, %v3267
      %3269 = vrot.lane.b32.xlu0 %v3268, 73
      %v3270 = vpop.permute.xlu0 %3269
      %v3271 = vrot.slane %v3270, 6
      %v3272 = vsel %vm347, %v3271, %v3270
      %v3275 = vmul.bf16 %v3206, %v3272
      %v3276 = vmul.bf16 %v3207, %v3271
      %v3279 = vcombine.high %v3275, %v3275
      %v3281 = vunpack.c.l.s4 1983009808
      %v3282 = vunpack.c.0.s8 %v3281
      %v3283 = vlaneseq
      %v3284 = vshrl.u32 %v3283, 7
      %v3285 = vsub.s32 %v3282, %v3284
      %v3286 = vrot.slane %v3275, %v3285
      %v3288 = vunpack.c.l.s4 1983009808
      %v3289 = vunpack.c.0.s8 %v3288
      %v3290 = vlaneseq
      %v3291 = vshrl.u32 %v3290, 7
      %v3292 = vsub.s32 %v3289, %v3291
      %v3293 = vrot.slane %v3279, %v3292
      %v3295 = vunpack.c.l.s4 1983009808
      %v3296 = vunpack.c.0.s8 %v3295
      %v3297 = vlaneseq
      %v3298 = vshrl.u32 %v3297, 7
      %v3299 = vsub.s32 %v3296, %v3298
      %v3300 = vrot.slane %v3276, %v3299
      %3301 = vrot.lane.b32.xlu0 %v3286, 55
      %v3302 = vpop.permute.xlu0 %3301
      %3303 = vrot.lane.b32.xlu0 %v3293, 55
      %v3304 = vpop.permute.xlu0 %3303
      %3305 = vrot.lane.b32.xlu0 %v3300, 55
      %v3306 = vpop.permute.xlu0 %3305
      %v3307 = vrot.slane %v3302, 4
      %v3308 = vrot.slane %v3304, 4
      %v3309 = vrot.slane %v3306, 4
      %v3310 = vsel %vm345, %v3307, %v3308
      %v3311 = vsel %vm306, %v3302, %v3310
      %v3312 = vsel %vm345, %v3308, %v3309
      %v3313 = vsel %vm306, %v3304, %v3312
      %3316 = vst [vmem:[#allocation2 + $0xd0] sm:$0x33] %v3311
      %3317 = vst [vmem:[#allocation2 + $0xd8] sm:$0x33] %v3313
      %v3318 = vld [vmem:[%s2] sm:$0xf]
      %v3319 = vld [vmem:[#allocation2] sm:$0xff]
      %v3320 = vld [vmem:[#allocation2 + $0x8] sm:$0xff]
      %v3321 = vld [vmem:[#allocation2 + $0x10] sm:$0xff]
      %v3322 = vld [vmem:[#allocation2 + $0x18] sm:$0xff]
      %v3323 = vld [vmem:[#allocation2 + $0x20] sm:$0xff]
      %v3324 = vld [vmem:[#allocation2 + $0x28] sm:$0xff]
      %v3325 = vld [vmem:[#allocation2 + $0x30] sm:$0xff]
      %v3326 = vld [vmem:[#allocation2 + $0x38] sm:$0xff]
      %v3327 = vld [vmem:[#allocation2 + $0x40] sm:$0xff]
      %v3328 = vld [vmem:[#allocation2 + $0x48] sm:$0xff]
      %v3329 = vld [vmem:[#allocation2 + $0x50] sm:$0xff]
      %v3330 = vld [vmem:[#allocation2 + $0x58] sm:$0xff]
      %v3331 = vld [vmem:[#allocation2 + $0x60] sm:$0xff]
      %v3332 = vld [vmem:[#allocation2 + $0x68] sm:$0xff]
      %v3333 = vld [vmem:[#allocation2 + $0x70] sm:$0xff]
      %v3334 = vld [vmem:[#allocation2 + $0x78] sm:$0xff]
      %v3335 = vld [vmem:[#allocation2 + $0x80] sm:$0xff]
      %v3336 = vld [vmem:[#allocation2 + $0x88] sm:$0xff]
      %v3337 = vld [vmem:[#allocation2 + $0x90] sm:$0xff]
      %v3338 = vld [vmem:[#allocation2 + $0x98] sm:$0xff]
      %v3339 = vld [vmem:[#allocation2 + $0xa0] sm:$0xff]
      %v3340 = vld [vmem:[#allocation2 + $0xa8] sm:$0xff]
      %v3341 = vld [vmem:[#allocation2 + $0xb0] sm:$0xff]
      %v3342 = vld [vmem:[#allocation2 + $0xb8] sm:$0xff]
      %v3343 = vld [vmem:[#allocation2 + $0xc0] sm:$0xff]
      %v3344 = vld [vmem:[#allocation2 + $0xc8] sm:$0xff]
      %v3345 = vld [vmem:[#allocation2 + $0xd0] sm:$0xff]
      %v3346 = vld [vmem:[#allocation2 + $0xd8] sm:$0xff]
      %v3375 = vunpack.c.l.b16 %v3319
      %v3376 = vunpack.c.h.b16 %v3319
      %v3377 = vunpack.c.l.b16 %v3320
      %v3378 = vunpack.c.h.b16 %v3320
      %v3379 = vunpack.c.l.b16 %v3321
      %v3380 = vunpack.c.h.b16 %v3321
      %v3381 = vunpack.c.l.b16 %v3322
      %v3382 = vunpack.c.h.b16 %v3322
      %v3383 = vunpack.c.l.b16 %v3323
      %v3384 = vunpack.c.h.b16 %v3323
      %v3385 = vunpack.c.l.b16 %v3324
      %v3386 = vunpack.c.h.b16 %v3324
      %v3387 = vunpack.c.l.b16 %v3325
      %v3388 = vunpack.c.h.b16 %v3325
      %v3389 = vunpack.c.l.b16 %v3326
      %v3390 = vunpack.c.h.b16 %v3326
      %v3391 = vunpack.c.l.b16 %v3327
      %v3392 = vunpack.c.h.b16 %v3327
      %v3393 = vunpack.c.l.b16 %v3328
      %v3394 = vunpack.c.h.b16 %v3328
      %v3395 = vunpack.c.l.b16 %v3329
      %v3396 = vunpack.c.h.b16 %v3329
      %v3397 = vunpack.c.l.b16 %v3330
      %v3398 = vunpack.c.h.b16 %v3330
      %v3399 = vunpack.c.l.b16 %v3331
      %v3400 = vunpack.c.h.b16 %v3331
      %v3401 = vunpack.c.l.b16 %v3332
      %v3402 = vunpack.c.h.b16 %v3332
      %v3403 = vunpack.c.l.b16 %v3333
      %v3404 = vunpack.c.h.b16 %v3333
      %v3405 = vunpack.c.l.b16 %v3334
      %v3406 = vunpack.c.h.b16 %v3334
      %v3407 = vunpack.c.l.b16 %v3335
      %v3408 = vunpack.c.h.b16 %v3335
      %v3409 = vunpack.c.l.b16 %v3336
      %v3410 = vunpack.c.h.b16 %v3336
      %v3411 = vunpack.c.l.b16 %v3337
      %v3412 = vunpack.c.h.b16 %v3337
      %v3413 = vunpack.c.l.b16 %v3338
      %v3414 = vunpack.c.h.b16 %v3338
      %v3415 = vunpack.c.l.b16 %v3339
      %v3416 = vunpack.c.h.b16 %v3339
      %v3417 = vunpack.c.l.b16 %v3340
      %v3418 = vunpack.c.h.b16 %v3340
      %v3419 = vunpack.c.l.b16 %v3341
      %v3420 = vunpack.c.h.b16 %v3341
      %v3421 = vunpack.c.l.b16 %v3342
      %v3422 = vunpack.c.h.b16 %v3342
      %v3423 = vunpack.c.l.b16 %v3343
      %v3424 = vunpack.c.h.b16 %v3343
      %v3425 = vunpack.c.l.b16 %v3344
      %v3426 = vunpack.c.h.b16 %v3344
      %v3427 = vunpack.c.l.b16 %v3345
      %v3428 = vunpack.c.h.b16 %v3345
      %v3429 = vunpack.c.l.b16 %v3346
      %v3430 = vunpack.c.h.b16 %v3346
      %v3431 = vpack.c.b16 %v3379, %v3375
      %v3432 = vpack.c.b16 %v3380, %v3376
      %v3433 = vpack.c.b16 %v3381, %v3377
      %v3434 = vpack.c.b16 %v3382, %v3378
      %v3435 = vpack.c.b16 %v3387, %v3383
      %v3436 = vpack.c.b16 %v3388, %v3384
      %v3437 = vpack.c.b16 %v3389, %v3385
      %v3438 = vpack.c.b16 %v3390, %v3386
      %v3439 = vpack.c.b16 %v3395, %v3391
      %v3440 = vpack.c.b16 %v3396, %v3392
      %v3441 = vpack.c.b16 %v3397, %v3393
      %v3442 = vpack.c.b16 %v3398, %v3394
      %v3443 = vpack.c.b16 %v3403, %v3399
      %v3444 = vpack.c.b16 %v3404, %v3400
      %v3445 = vpack.c.b16 %v3405, %v3401
      %v3446 = vpack.c.b16 %v3406, %v3402
      %v3447 = vpack.c.b16 %v3411, %v3407
      %v3448 = vpack.c.b16 %v3412, %v3408
      %v3449 = vpack.c.b16 %v3413, %v3409
      %v3450 = vpack.c.b16 %v3414, %v3410
      %v3451 = vpack.c.b16 %v3419, %v3415
      %v3452 = vpack.c.b16 %v3420, %v3416
      %v3453 = vpack.c.b16 %v3421, %v3417
      %v3454 = vpack.c.b16 %v3422, %v3418
      %v3455 = vpack.c.b16 %v3427, %v3423
      %v3456 = vpack.c.b16 %v3428, %v3424
      %v3457 = vpack.c.b16 %v3429, %v3425
      %v3458 = vpack.c.b16 %v3430, %v3426
      %vm3487 = vcmask 916480
      %v3489 = vsel %vm3487, %v3318, 0
      %3491 = vmatprep.subr.bf16.mxu0 0
      %3492 = vmatpush1.bf16.msra.mxu0 0
      %3493 = vmatprep.subr.bf16.mxu0 %v3456
      %3494 = vmatpush1.bf16.msra.mxu0 %v3455
      %3495 = vmatprep.subr.bf16.mxu0 %v3452
      %3496 = vmatpush1.bf16.msra.mxu0 %v3451
      %3497 = vmatprep.subr.bf16.mxu0 %v3448
      %3498 = vmatpush1.bf16.msra.mxu0 %v3447
      %3499 = vmatprep.subr.bf16.mxu0 %v3444
      %3500 = vmatpush1.bf16.msra.mxu0 %v3443
      %3501 = vmatprep.subr.bf16.mxu0 %v3440
      %3502 = vmatpush1.bf16.msra.mxu0 %v3439
      %3503 = vmatprep.subr.bf16.mxu0 %v3436
      %3504 = vmatpush1.bf16.msra.mxu0 %v3435
      %3505 = vmatprep.subr.bf16.mxu0 %v3432
      %3506 = vmatpush1.bf16.msra.mxu0 %v3431
      %3507 = vmatprep.subr.bf16.mxu0 0
      %3508 = vmatpush2.bf16.msra.mxu0 0
      %3509 = vmatprep.subr.bf16.mxu0 0
      %3510 = vmatpush2.bf16.msra.mxu0 0
      %3511 = vmatprep.subr.bf16.mxu0 0
      %3512 = vmatpush2.bf16.msra.mxu0 0
      %3513 = vmatprep.subr.bf16.mxu0 0
      %3514 = vmatpush2.bf16.msra.mxu0 0
      %3515 = vmatprep.subr.bf16.mxu0 0
      %3516 = vmatpush2.bf16.msra.mxu0 0
      %3517 = vmatprep.subr.bf16.mxu0 0
      %3518 = vmatpush2.bf16.msra.mxu0 0
      %3519 = vmatprep.subr.bf16.mxu0 0
      %3520 = vmatpush2.bf16.msra.mxu0 0
      %3521 = vmatprep.subr.bf16.mxu0 0
      %3522 = vmatpush2.bf16.msra.mxu0 0
      %3523 = vmatprep.mubr.bf16.mxu0 0
      %3524 = vmatmul.mubr.bf16.gmra.mxu0 %v3489
      %v3525 = vpop.f32.mrf.mxu0
      %v3526 = vadd.f32 0.0, %v3525
      %v3527 = vpop.f32.mrf.mxu0
      %v3528 = vadd.f32 0.0, %v3527
      %v3529 = vpop.f32.mrf.mxu0
      %v3530 = vpop.f32.mrf.mxu0
      %3531 = vdwg.mxu0
      %3532 = vmatprep.subr.bf16.mxu0 0
      %3533 = vmatpush1.bf16.msra.mxu0 0
      %3534 = vmatprep.subr.bf16.mxu0 %v3458
      %3535 = vmatpush1.bf16.msra.mxu0 %v3457
      %3536 = vmatprep.subr.bf16.mxu0 %v3454
      %3537 = vmatpush1.bf16.msra.mxu0 %v3453
      %3538 = vmatprep.subr.bf16.mxu0 %v3450
      %3539 = vmatpush1.bf16.msra.mxu0 %v3449
      %3540 = vmatprep.subr.bf16.mxu0 %v3446
      %3541 = vmatpush1.bf16.msra.mxu0 %v3445
      %3542 = vmatprep.subr.bf16.mxu0 %v3442
      %3543 = vmatpush1.bf16.msra.mxu0 %v3441
      %3544 = vmatprep.subr.bf16.mxu0 %v3438
      %3545 = vmatpush1.bf16.msra.mxu0 %v3437
      %3546 = vmatprep.subr.bf16.mxu0 %v3434
      %3547 = vmatpush1.bf16.msra.mxu0 %v3433
      %3548 = vmatprep.subr.bf16.mxu0 0
      %3549 = vmatpush2.bf16.msra.mxu0 0
      %3550 = vmatprep.subr.bf16.mxu0 0
      %3551 = vmatpush2.bf16.msra.mxu0 0
      %3552 = vmatprep.subr.bf16.mxu0 0
      %3553 = vmatpush2.bf16.msra.mxu0 0
      %3554 = vmatprep.subr.bf16.mxu0 0
      %3555 = vmatpush2.bf16.msra.mxu0 0
      %3556 = vmatprep.subr.bf16.mxu0 0
      %3557 = vmatpush2.bf16.msra.mxu0 0
      %3558 = vmatprep.subr.bf16.mxu0 0
      %3559 = vmatpush2.bf16.msra.mxu0 0
      %3560 = vmatprep.subr.bf16.mxu0 0
      %3561 = vmatpush2.bf16.msra.mxu0 0
      %3562 = vmatprep.subr.bf16.mxu0 0
      %3563 = vmatpush2.bf16.msra.mxu0 0
      %3564 = vmatprep.mubr.bf16.mxu0 0
      %3565 = vmatmul.mubr.bf16.gmra.mxu0 %v3489
      %v3566 = vpop.f32.mrf.mxu0
      %v3567 = vadd.f32 0.0, %v3566
      %v3568 = vpop.f32.mrf.mxu0
      %v3569 = vadd.f32 0.0, %v3568
      %v3570 = vpop.f32.mrf.mxu0
      %v3571 = vpop.f32.mrf.mxu0
      %3572 = vdwg.mxu0
      %v3573 = vadd.f32 %v3526, %v3528
      %v3574 = vadd.f32 %v3573, %v3567
      %v3575 = vadd.f32 %v3574, %v3569
      %3576 = vadd.xlane.f32.xlu0 %v3575
      %v3577 = vpop.xlane.xlu0 %3576
      %v3578 = vmul.f32 %v3526, %v3526
      %v3579 = vmul.f32 %v3528, %v3528
      %v3580 = vmul.f32 %v3567, %v3567
      %v3581 = vmul.f32 %v3569, %v3569
      %v3582 = vadd.f32 %v3578, %v3579
      %v3583 = vadd.f32 %v3582, %v3580
      %v3584 = vadd.f32 %v3583, %v3581
      %3585 = vadd.xlane.f32.xlu0 %v3584
      %v3586 = vpop.xlane.xlu0 %3585
      %v3587 = vmul.f32 %v3577, 0.001953125
      %v3588 = vmul.f32 %v3586, 0.001953125
      %v3589 = vmul.f32 %v3587, %v3587
      %v3590 = vsub.f32 %v3588, %v3589
      %v3591 = vmax.f32 %v3590, 0.0
      %v3592 = vsub.f32 %v3526, %v3587
      %v3593 = vsub.f32 %v3528, %v3587
      %v3594 = vsub.f32 %v3567, %v3587
      %v3595 = vsub.f32 %v3569, %v3587
      %v3596 = vadd.f32 %v3591, 1e-05
      %v3597 = vrsqrt.pop %v3596
      %v3598 = vmul.f32 %v3592, %v3597
      %v3599 = vmul.f32 %v3593, %v3597
      %v3600 = vmul.f32 %v3594, %v3597
      %v3601 = vmul.f32 %v3595, %v3597
      %v3602 = vmax.f32 %v3598, 0.0
      %v3603 = vmax.f32 %v3599, 0.0
      %v3604 = vmax.f32 %v3600, 0.0
      %v3605 = vmax.f32 %v3601, 0.0
      %v3606 = vpack.c.bf16 %v3602, %v3602
      %v3607 = vpack.c.bf16 %v3603, %v3603
      %v3608 = vpack.c.bf16 %v3604, %v3604
      %v3609 = vpack.c.bf16 %v3605, %v3605
      %v3614 = vunpack.c.l.b16 %v3606
      %v3615 = vunpack.c.l.b16 %v3607
      %v3616 = vunpack.c.l.b16 %v3608
      %v3617 = vunpack.c.l.b16 %v3609
      %v3618 = vpack.c.b16 %v3615, %v3614
      %v3619 = vpack.c.b16 %v3617, %v3616
      %3622 = vst [vmem:[#allocation4 + $0x4] sm:$0xff] %v3618
      %3623 = vst [vmem:[#allocation4 + $0xc] sm:$0xff] %v3619
      %3624 = vst [vmem:[#allocation2 + $0x1b0] sm:$0xff] 0
      %3625 = vst [vmem:[#allocation2 + $0x1b8] sm:$0xff] 0
      %v3626 = vld [vmem:[#allocation4] sm:$0xff]
      %v3627 = vld [vmem:[#allocation4 + $0x8] sm:$0xff]
      %v3628 = vld [vmem:[#allocation4 + $0x10] sm:$0xf]
      %v3629 = vld [vmem:[%s0] sm:$0x11]
      %v3630 = vld [vmem:[%s0 + $0x8] sm:$0x11]
      %v3633 = vunpack.c.l.b16 %v3629
      %v3634 = vunpack.c.h.b16 %v3629
      %v3635 = vunpack.c.l.b16 %v3630
      %v3636 = vunpack.c.h.b16 %v3630
      %v3637 = vpack.c.b16 %v3633, %v3633
      %v3638 = vpack.c.b16 %v3634, %v3634
      %v3639 = vpack.c.b16 %v3635, %v3635
      %v3640 = vpack.c.b16 %v3636, %v3636
      %v3642 = vpack.i.b16 %v3637, %v3637
      %v3644 = vlaneseq
      %v3645 = vshrl.u32 %v3644, 7
      %v3646 = vsub.s32 0, %v3645
      %v3647 = vrot.slane %v3642, %v3646
      %v3649 = vpack.i.b16 %v3638, %v3638
      %v3651 = vlaneseq
      %v3652 = vshrl.u32 %v3651, 7
      %v3653 = vsub.s32 0, %v3652
      %v3654 = vrot.slane %v3649, %v3653
      %v3656 = vpack.i.b16 %v3639, %v3639
      %v3658 = vlaneseq
      %v3659 = vshrl.u32 %v3658, 7
      %v3660 = vsub.s32 0, %v3659
      %v3661 = vrot.slane %v3656, %v3660
      %v3663 = vpack.i.b16 %v3640, %v3640
      %v3665 = vlaneseq
      %v3666 = vshrl.u32 %v3665, 7
      %v3667 = vsub.s32 0, %v3666
      %v3668 = vrot.slane %v3663, %v3667
      %v3673 = vunpack.c.l.b16 %v3647
      %v3674 = vunpack.c.l.b16 %v3654
      %v3675 = vunpack.c.l.b16 %v3661
      %v3676 = vunpack.c.l.b16 %v3668
      %v3677 = vpack.c.b16 %v3674, %v3673
      %v3678 = vpack.c.b16 %v3676, %v3675
      %3679 = vrot.lane.b32.xlu0 %v3677, 55
      %v3680 = vpop.permute.xlu0 %3679
      %3681 = vrot.lane.b32.xlu0 %v3678, 55
      %v3682 = vpop.permute.xlu0 %3681
      %v3683 = vrot.slane %v3680, 4
      %v3684 = vrot.slane %v3682, 4
      %v3685 = vsel %vm306, %v3683, %v3680
      %v3686 = vsel %vm345, %v3683, %v3684
      %v3687 = vsel %vm306, %v3686, %v3682
      %v3691 = vmul.bf16 %v3626, %v3685
      %v3692 = vmul.bf16 %v3627, %v3687
      %v3693 = vmul.bf16 %v3628, %v3684
      %3697 = vrot.lane.b32.xlu0 %v3691, 73
      %v3698 = vpop.permute.xlu0 %3697
      %3699 = vrot.lane.b32.xlu0 %v3692, 73
      %v3700 = vpop.permute.xlu0 %3699
      %3701 = vrot.lane.b32.xlu0 %v3693, 73
      %v3702 = vpop.permute.xlu0 %3701
      %v3703 = vrot.slane %v3698, 4
      %v3704 = vrot.slane %v3700, 4
      %v3705 = vrot.slane %v3702, 4
      %v3706 = vsel %vm345, %v3703, %v3704
      %v3707 = vsel %vm347, %v3698, %v3706
      %v3708 = vsel %vm345, %v3704, %v3705
      %v3709 = vsel %vm347, %v3700, %v3708
      %3712 = vst [vmem:[#allocation2] sm:$0xff] %v3707
      %3713 = vst [vmem:[#allocation2 + $0x8] sm:$0xff] %v3709
      %v3714 = vld [vmem:[#allocation4] sm:$0xff]
      %v3715 = vld [vmem:[#allocation4 + $0x8] sm:$0xff]
      %v3716 = vld [vmem:[#allocation4 + $0x10] sm:$0xf]
      %v3717 = vld [vmem:[%s0] sm:$0x11]
      %v3718 = vld [vmem:[%s0 + $0x8] sm:$0x11]
      %v3721 = vunpack.c.l.b16 %v3717
      %v3722 = vunpack.c.h.b16 %v3717
      %v3723 = vunpack.c.l.b16 %v3718
      %v3724 = vunpack.c.h.b16 %v3718
      %v3725 = vpack.c.b16 %v3721, %v3721
      %v3726 = vpack.c.b16 %v3722, %v3722
      %v3727 = vpack.c.b16 %v3723, %v3723
      %v3728 = vpack.c.b16 %v3724, %v3724
      %v3730 = vshrl.u32 %v3725, 16
      %v3731 = vpack.i.b16 %v3730, %v3730
      %v3733 = vlaneseq
      %v3734 = vshrl.u32 %v3733, 7
      %v3735 = vsub.s32 0, %v3734
      %v3736 = vrot.slane %v3731, %v3735
      %v3738 = vshrl.u32 %v3726, 16
      %v3739 = vpack.i.b16 %v3738, %v3738
      %v3741 = vlaneseq
      %v3742 = vshrl.u32 %v3741, 7
      %v3743 = vsub.s32 0, %v3742
      %v3744 = vrot.slane %v3739, %v3743
      %v3746 = vshrl.u32 %v3727, 16
      %v3747 = vpack.i.b16 %v3746, %v3746
      %v3749 = vlaneseq
      %v3750 = vshrl.u32 %v3749, 7
      %v3751 = vsub.s32 0, %v3750
      %v3752 = vrot.slane %v3747, %v3751
      %v3754 = vshrl.u32 %v3728, 16
      %v3755 = vpack.i.b16 %v3754, %v3754
      %v3757 = vlaneseq
      %v3758 = vshrl.u32 %v3757, 7
      %v3759 = vsub.s32 0, %v3758
      %v3760 = vrot.slane %v3755, %v3759
      %v3765 = vunpack.c.l.b16 %v3736
      %v3766 = vunpack.c.l.b16 %v3744
      %v3767 = vunpack.c.l.b16 %v3752
      %v3768 = vunpack.c.l.b16 %v3760
      %v3769 = vpack.c.b16 %v3766, %v3765
      %v3770 = vpack.c.b16 %v3768, %v3767
      %3771 = vrot.lane.b32.xlu0 %v3769, 56
      %v3772 = vpop.permute.xlu0 %3771
      %3773 = vrot.lane.b32.xlu0 %v3770, 56
      %v3774 = vpop.permute.xlu0 %3773
      %v3775 = vrot.slane %v3772, 4
      %v3776 = vrot.slane %v3774, 4
      %v3777 = vsel %vm425, %v3775, %v3772
      %v3778 = vsel %vm345, %v3775, %v3776
      %v3779 = vsel %vm425, %v3778, %v3774
      %v3783 = vmul.bf16 %v3714, %v3777
      %v3784 = vmul.bf16 %v3715, %v3779
      %v3785 = vmul.bf16 %v3716, %v3776
      %3789 = vrot.lane.b32.xlu0 %v3783, 72
      %v3790 = vpop.permute.xlu0 %3789
      %3791 = vrot.lane.b32.xlu0 %v3784, 72
      %v3792 = vpop.permute.xlu0 %3791
      %3793 = vrot.lane.b32.xlu0 %v3785, 72
      %v3794 = vpop.permute.xlu0 %3793
      %v3795 = vrot.slane %v3790, 4
      %v3796 = vrot.slane %v3792, 4
      %v3797 = vrot.slane %v3794, 4
      %v3798 = vsel %vm345, %v3795, %v3796
      %v3799 = vsel %vm466, %v3790, %v3798
      %v3800 = vsel %vm345, %v3796, %v3797
      %v3801 = vsel %vm466, %v3792, %v3800
      %3804 = vst [vmem:[#allocation2 + $0x10] sm:$0xff] %v3799
      %3805 = vst [vmem:[#allocation2 + $0x18] sm:$0xff] %v3801
      %v3806 = vld [vmem:[#allocation4] sm:$0xff]
      %v3807 = vld [vmem:[#allocation4 + $0x8] sm:$0xff]
      %v3808 = vld [vmem:[#allocation4 + $0x10] sm:$0xf]
      %v3809 = vld [vmem:[%s0] sm:$0x22]
      %v3810 = vld [vmem:[%s0 + $0x8] sm:$0x22]
      %v3813 = vunpack.c.l.b16 %v3809
      %v3814 = vunpack.c.h.b16 %v3809
      %v3815 = vunpack.c.l.b16 %v3810
      %v3816 = vunpack.c.h.b16 %v3810
      %v3817 = vpack.c.b16 %v3813, %v3813
      %v3818 = vpack.c.b16 %v3814, %v3814
      %v3819 = vpack.c.b16 %v3815, %v3815
      %v3820 = vpack.c.b16 %v3816, %v3816
      %v3822 = vpack.i.b16 %v3817, %v3817
      %v3824 = vlaneseq
      %v3825 = vshrl.u32 %v3824, 7
      %v3826 = vsub.s32 1, %v3825
      %v3827 = vrot.slane %v3822, %v3826
      %v3829 = vpack.i.b16 %v3818, %v3818
      %v3831 = vlaneseq
      %v3832 = vshrl.u32 %v3831, 7
      %v3833 = vsub.s32 1, %v3832
      %v3834 = vrot.slane %v3829, %v3833
      %v3836 = vpack.i.b16 %v3819, %v3819
      %v3838 = vlaneseq
      %v3839 = vshrl.u32 %v3838, 7
      %v3840 = vsub.s32 1, %v3839
      %v3841 = vrot.slane %v3836, %v3840
      %v3843 = vpack.i.b16 %v3820, %v3820
      %v3845 = vlaneseq
      %v3846 = vshrl.u32 %v3845, 7
      %v3847 = vsub.s32 1, %v3846
      %v3848 = vrot.slane %v3843, %v3847
      %v3853 = vunpack.c.l.b16 %v3827
      %v3854 = vunpack.c.l.b16 %v3834
      %v3855 = vunpack.c.l.b16 %v3841
      %v3856 = vunpack.c.l.b16 %v3848
      %v3857 = vpack.c.b16 %v3854, %v3853
      %v3858 = vpack.c.b16 %v3856, %v3855
      %3859 = vrot.lane.b32.xlu0 %v3857, 57
      %v3860 = vpop.permute.xlu0 %3859
      %3861 = vrot.lane.b32.xlu0 %v3858, 57
      %v3862 = vpop.permute.xlu0 %3861
      %v3863 = vrot.slane %v3860, 4
      %v3864 = vrot.slane %v3862, 4
      %v3865 = vsel %vm540, %v3863, %v3860
      %v3866 = vsel %vm345, %v3863, %v3864
      %v3867 = vsel %vm540, %v3866, %v3862
      %v3871 = vmul.bf16 %v3806, %v3865
      %v3872 = vmul.bf16 %v3807, %v3867
      %v3873 = vmul.bf16 %v3808, %v3864
      %3877 = vrot.lane.b32.xlu0 %v3871, 71
      %v3878 = vpop.permute.xlu0 %3877
      %3879 = vrot.lane.b32.xlu0 %v3872, 71
      %v3880 = vpop.permute.xlu0 %3879
      %3881 = vrot.lane.b32.xlu0 %v3873, 71
      %v3882 = vpop.permute.xlu0 %3881
      %v3883 = vrot.slane %v3878, 4
      %v3884 = vrot.slane %v3880, 4
      %v3885 = vrot.slane %v3882, 4
      %v3886 = vsel %vm345, %v3883, %v3884
      %v3887 = vsel %vm580, %v3878, %v3886
      %v3888 = vsel %vm345, %v3884, %v3885
      %v3889 = vsel %vm580, %v3880, %v3888
      %3892 = vst [vmem:[#allocation2 + $0x20] sm:$0xff] %v3887
      %3893 = vst [vmem:[#allocation2 + $0x28] sm:$0xff] %v3889
      %v3894 = vld [vmem:[#allocation4] sm:$0xff]
      %v3895 = vld [vmem:[#allocation4 + $0x8] sm:$0xff]
      %v3896 = vld [vmem:[#allocation4 + $0x10] sm:$0xf]
      %v3897 = vld [vmem:[%s0] sm:$0x22]
      %v3898 = vld [vmem:[%s0 + $0x8] sm:$0x22]
      %v3901 = vunpack.c.l.b16 %v3897
      %v3902 = vunpack.c.h.b16 %v3897
      %v3903 = vunpack.c.l.b16 %v3898
      %v3904 = vunpack.c.h.b16 %v3898
      %v3905 = vpack.c.b16 %v3901, %v3901
      %v3906 = vpack.c.b16 %v3902, %v3902
      %v3907 = vpack.c.b16 %v3903, %v3903
      %v3908 = vpack.c.b16 %v3904, %v3904
      %v3910 = vshrl.u32 %v3905, 16
      %v3911 = vpack.i.b16 %v3910, %v3910
      %v3913 = vlaneseq
      %v3914 = vshrl.u32 %v3913, 7
      %v3915 = vsub.s32 1, %v3914
      %v3916 = vrot.slane %v3911, %v3915
      %v3918 = vshrl.u32 %v3906, 16
      %v3919 = vpack.i.b16 %v3918, %v3918
      %v3921 = vlaneseq
      %v3922 = vshrl.u32 %v3921, 7
      %v3923 = vsub.s32 1, %v3922
      %v3924 = vrot.slane %v3919, %v3923
      %v3926 = vshrl.u32 %v3907, 16
      %v3927 = vpack.i.b16 %v3926, %v3926
      %v3929 = vlaneseq
      %v3930 = vshrl.u32 %v3929, 7
      %v3931 = vsub.s32 1, %v3930
      %v3932 = vrot.slane %v3927, %v3931
      %v3934 = vshrl.u32 %v3908, 16
      %v3935 = vpack.i.b16 %v3934, %v3934
      %v3937 = vlaneseq
      %v3938 = vshrl.u32 %v3937, 7
      %v3939 = vsub.s32 1, %v3938
      %v3940 = vrot.slane %v3935, %v3939
      %v3945 = vunpack.c.l.b16 %v3916
      %v3946 = vunpack.c.l.b16 %v3924
      %v3947 = vunpack.c.l.b16 %v3932
      %v3948 = vunpack.c.l.b16 %v3940
      %v3949 = vpack.c.b16 %v3946, %v3945
      %v3950 = vpack.c.b16 %v3948, %v3947
      %3951 = vrot.lane.b32.xlu0 %v3949, 63
      %v3952 = vpop.permute.xlu0 %3951
      %3953 = vrot.lane.b32.xlu0 %v3950, 63
      %v3954 = vpop.permute.xlu0 %3953
      %v3955 = vrot.slane %v3952, 4
      %v3956 = vrot.slane %v3954, 4
      %v3957 = vsel %vm658, %v3955, %v3952
      %v3958 = vsel %vm345, %v3955, %v3956
      %v3959 = vsel %vm658, %v3958, %v3954
      %v3963 = vmul.bf16 %v3894, %v3957
      %v3964 = vmul.bf16 %v3895, %v3959
      %v3965 = vmul.bf16 %v3896, %v3956
      %3969 = vrot.lane.b32.xlu0 %v3963, 65
      %v3970 = vpop.permute.xlu0 %3969
      %3971 = vrot.lane.b32.xlu0 %v3964, 65
      %v3972 = vpop.permute.xlu0 %3971
      %3973 = vrot.lane.b32.xlu0 %v3965, 65
      %v3974 = vpop.permute.xlu0 %3973
      %v3975 = vrot.slane %v3970, 4
      %v3976 = vrot.slane %v3972, 4
      %v3977 = vrot.slane %v3974, 4
      %v3978 = vsel %vm345, %v3975, %v3976
      %v3979 = vsel %vm699, %v3970, %v3978
      %v3980 = vsel %vm345, %v3976, %v3977
      %v3981 = vsel %vm699, %v3972, %v3980
      %3984 = vst [vmem:[#allocation2 + $0x30] sm:$0xff] %v3979
      %3985 = vst [vmem:[#allocation2 + $0x38] sm:$0xff] %v3981
      %v3986 = vld [vmem:[#allocation4] sm:$0xff]
      %v3987 = vld [vmem:[#allocation4 + $0x8] sm:$0xff]
      %v3988 = vld [vmem:[#allocation4 + $0x10] sm:$0xf]
      %v3989 = vld [vmem:[%s0] sm:$0x44]
      %v3990 = vld [vmem:[%s0 + $0x8] sm:$0x44]
      %v3993 = vunpack.c.l.b16 %v3989
      %v3994 = vunpack.c.h.b16 %v3989
      %v3995 = vunpack.c.l.b16 %v3990
      %v3996 = vunpack.c.h.b16 %v3990
      %v3997 = vpack.c.b16 %v3993, %v3993
      %v3998 = vpack.c.b16 %v3994, %v3994
      %v3999 = vpack.c.b16 %v3995, %v3995
      %v4000 = vpack.c.b16 %v3996, %v3996
      %v4002 = vpack.i.b16 %v3997, %v3997
      %v4004 = vlaneseq
      %v4005 = vshrl.u32 %v4004, 7
      %v4006 = vsub.s32 2, %v4005
      %v4007 = vrot.slane %v4002, %v4006
      %v4009 = vpack.i.b16 %v3998, %v3998
      %v4011 = vlaneseq
      %v4012 = vshrl.u32 %v4011, 7
      %v4013 = vsub.s32 2, %v4012
      %v4014 = vrot.slane %v4009, %v4013
      %v4016 = vpack.i.b16 %v3999, %v3999
      %v4018 = vlaneseq
      %v4019 = vshrl.u32 %v4018, 7
      %v4020 = vsub.s32 2, %v4019
      %v4021 = vrot.slane %v4016, %v4020
      %v4023 = vpack.i.b16 %v4000, %v4000
      %v4025 = vlaneseq
      %v4026 = vshrl.u32 %v4025, 7
      %v4027 = vsub.s32 2, %v4026
      %v4028 = vrot.slane %v4023, %v4027
      %v4033 = vunpack.c.l.b16 %v4007
      %v4034 = vunpack.c.l.b16 %v4014
      %v4035 = vunpack.c.l.b16 %v4021
      %v4036 = vunpack.c.l.b16 %v4028
      %v4037 = vpack.c.b16 %v4034, %v4033
      %v4038 = vpack.c.b16 %v4036, %v4035
      %4039 = vrot.lane.b32.xlu0 %v4037, 64
      %v4040 = vpop.permute.xlu0 %4039
      %4041 = vrot.lane.b32.xlu0 %v4038, 64
      %v4042 = vpop.permute.xlu0 %4041
      %v4043 = vrot.slane %v4040, 4
      %v4044 = vrot.slane %v4042, 4
      %v4045 = vsel %vm773, %v4043, %v4040
      %v4046 = vsel %vm345, %v4043, %v4044
      %v4047 = vsel %vm773, %v4046, %v4042
      %v4051 = vmul.bf16 %v3986, %v4045
      %v4052 = vmul.bf16 %v3987, %v4047
      %v4053 = vmul.bf16 %v3988, %v4044
      %4057 = vrot.lane.b32.xlu0 %v4051, 64
      %v4058 = vpop.permute.xlu0 %4057
      %4059 = vrot.lane.b32.xlu0 %v4052, 64
      %v4060 = vpop.permute.xlu0 %4059
      %4061 = vrot.lane.b32.xlu0 %v4053, 64
      %v4062 = vpop.permute.xlu0 %4061
      %v4063 = vrot.slane %v4058, 4
      %v4064 = vrot.slane %v4060, 4
      %v4065 = vrot.slane %v4062, 4
      %v4066 = vsel %vm345, %v4063, %v4064
      %v4067 = vsel %vm773, %v4058, %v4066
      %v4068 = vsel %vm345, %v4064, %v4065
      %v4069 = vsel %vm773, %v4060, %v4068
      %4072 = vst [vmem:[#allocation2 + $0x40] sm:$0xff] %v4067
      %4073 = vst [vmem:[#allocation2 + $0x48] sm:$0xff] %v4069
      %v4074 = vld [vmem:[#allocation4] sm:$0xff]
      %v4075 = vld [vmem:[#allocation4 + $0x8] sm:$0xff]
      %v4076 = vld [vmem:[#allocation4 + $0x10] sm:$0xf]
      %v4077 = vld [vmem:[%s0] sm:$0x44]
      %v4078 = vld [vmem:[%s0 + $0x8] sm:$0x44]
      %v4081 = vunpack.c.l.b16 %v4077
      %v4082 = vunpack.c.h.b16 %v4077
      %v4083 = vunpack.c.l.b16 %v4078
      %v4084 = vunpack.c.h.b16 %v4078
      %v4085 = vpack.c.b16 %v4081, %v4081
      %v4086 = vpack.c.b16 %v4082, %v4082
      %v4087 = vpack.c.b16 %v4083, %v4083
      %v4088 = vpack.c.b16 %v4084, %v4084
      %v4090 = vshrl.u32 %v4085, 16
      %v4091 = vpack.i.b16 %v4090, %v4090
      %v4093 = vlaneseq
      %v4094 = vshrl.u32 %v4093, 7
      %v4095 = vsub.s32 2, %v4094
      %v4096 = vrot.slane %v4091, %v4095
      %v4098 = vshrl.u32 %v4086, 16
      %v4099 = vpack.i.b16 %v4098, %v4098
      %v4101 = vlaneseq
      %v4102 = vshrl.u32 %v4101, 7
      %v4103 = vsub.s32 2, %v4102
      %v4104 = vrot.slane %v4099, %v4103
      %v4106 = vshrl.u32 %v4087, 16
      %v4107 = vpack.i.b16 %v4106, %v4106
      %v4109 = vlaneseq
      %v4110 = vshrl.u32 %v4109, 7
      %v4111 = vsub.s32 2, %v4110
      %v4112 = vrot.slane %v4107, %v4111
      %v4114 = vshrl.u32 %v4088, 16
      %v4115 = vpack.i.b16 %v4114, %v4114
      %v4117 = vlaneseq
      %v4118 = vshrl.u32 %v4117, 7
      %v4119 = vsub.s32 2, %v4118
      %v4120 = vrot.slane %v4115, %v4119
      %v4125 = vunpack.c.l.b16 %v4096
      %v4126 = vunpack.c.l.b16 %v4104
      %v4127 = vunpack.c.l.b16 %v4112
      %v4128 = vunpack.c.l.b16 %v4120
      %v4129 = vpack.c.b16 %v4126, %v4125
      %v4130 = vpack.c.b16 %v4128, %v4127
      %4131 = vrot.lane.b32.xlu0 %v4129, 65
      %v4132 = vpop.permute.xlu0 %4131
      %4133 = vrot.lane.b32.xlu0 %v4130, 65
      %v4134 = vpop.permute.xlu0 %4133
      %v4135 = vrot.slane %v4132, 4
      %v4136 = vrot.slane %v4134, 4
      %v4137 = vsel %vm699, %v4135, %v4132
      %v4138 = vsel %vm345, %v4135, %v4136
      %v4139 = vsel %vm699, %v4138, %v4134
      %v4143 = vmul.bf16 %v4074, %v4137
      %v4144 = vmul.bf16 %v4075, %v4139
      %v4145 = vmul.bf16 %v4076, %v4136
      %4149 = vrot.lane.b32.xlu0 %v4143, 63
      %v4150 = vpop.permute.xlu0 %4149
      %4151 = vrot.lane.b32.xlu0 %v4144, 63
      %v4152 = vpop.permute.xlu0 %4151
      %4153 = vrot.lane.b32.xlu0 %v4145, 63
      %v4154 = vpop.permute.xlu0 %4153
      %v4155 = vrot.slane %v4150, 4
      %v4156 = vrot.slane %v4152, 4
      %v4157 = vrot.slane %v4154, 4
      %v4158 = vsel %vm345, %v4155, %v4156
      %v4159 = vsel %vm658, %v4150, %v4158
      %v4160 = vsel %vm345, %v4156, %v4157
      %v4161 = vsel %vm658, %v4152, %v4160
      %4164 = vst [vmem:[#allocation2 + $0x50] sm:$0xff] %v4159
      %4165 = vst [vmem:[#allocation2 + $0x58] sm:$0xff] %v4161
      %v4166 = vld [vmem:[#allocation4] sm:$0xff]
      %v4167 = vld [vmem:[#allocation4 + $0x8] sm:$0xff]
      %v4168 = vld [vmem:[#allocation4 + $0x10] sm:$0xf]
      %v4169 = vld [vmem:[%s0] sm:$0x88]
      %v4170 = vld [vmem:[%s0 + $0x8] sm:$0x88]
      %v4173 = vunpack.c.l.b16 %v4169
      %v4174 = vunpack.c.h.b16 %v4169
      %v4175 = vunpack.c.l.b16 %v4170
      %v4176 = vunpack.c.h.b16 %v4170
      %v4177 = vpack.c.b16 %v4173, %v4173
      %v4178 = vpack.c.b16 %v4174, %v4174
      %v4179 = vpack.c.b16 %v4175, %v4175
      %v4180 = vpack.c.b16 %v4176, %v4176
      %v4182 = vpack.i.b16 %v4177, %v4177
      %v4184 = vlaneseq
      %v4185 = vshrl.u32 %v4184, 7
      %v4186 = vsub.s32 3, %v4185
      %v4187 = vrot.slane %v4182, %v4186
      %v4189 = vpack.i.b16 %v4178, %v4178
      %v4191 = vlaneseq
      %v4192 = vshrl.u32 %v4191, 7
      %v4193 = vsub.s32 3, %v4192
      %v4194 = vrot.slane %v4189, %v4193
      %v4196 = vpack.i.b16 %v4179, %v4179
      %v4198 = vlaneseq
      %v4199 = vshrl.u32 %v4198, 7
      %v4200 = vsub.s32 3, %v4199
      %v4201 = vrot.slane %v4196, %v4200
      %v4203 = vpack.i.b16 %v4180, %v4180
      %v4205 = vlaneseq
      %v4206 = vshrl.u32 %v4205, 7
      %v4207 = vsub.s32 3, %v4206
      %v4208 = vrot.slane %v4203, %v4207
      %v4213 = vunpack.c.l.b16 %v4187
      %v4214 = vunpack.c.l.b16 %v4194
      %v4215 = vunpack.c.l.b16 %v4201
      %v4216 = vunpack.c.l.b16 %v4208
      %v4217 = vpack.c.b16 %v4214, %v4213
      %v4218 = vpack.c.b16 %v4216, %v4215
      %4219 = vrot.lane.b32.xlu0 %v4217, 71
      %v4220 = vpop.permute.xlu0 %4219
      %4221 = vrot.lane.b32.xlu0 %v4218, 71
      %v4222 = vpop.permute.xlu0 %4221
      %v4223 = vrot.slane %v4220, 4
      %v4224 = vrot.slane %v4222, 4
      %v4225 = vsel %vm580, %v4223, %v4220
      %v4226 = vsel %vm345, %v4223, %v4224
      %v4227 = vsel %vm580, %v4226, %v4222
      %v4231 = vmul.bf16 %v4166, %v4225
      %v4232 = vmul.bf16 %v4167, %v4227
      %v4233 = vmul.bf16 %v4168, %v4224
      %4237 = vrot.lane.b32.xlu0 %v4231, 57
      %v4238 = vpop.permute.xlu0 %4237
      %4239 = vrot.lane.b32.xlu0 %v4232, 57
      %v4240 = vpop.permute.xlu0 %4239
      %4241 = vrot.lane.b32.xlu0 %v4233, 57
      %v4242 = vpop.permute.xlu0 %4241
      %v4243 = vrot.slane %v4238, 4
      %v4244 = vrot.slane %v4240, 4
      %v4245 = vrot.slane %v4242, 4
      %v4246 = vsel %vm345, %v4243, %v4244
      %v4247 = vsel %vm540, %v4238, %v4246
      %v4248 = vsel %vm345, %v4244, %v4245
      %v4249 = vsel %vm540, %v4240, %v4248
      %4252 = vst [vmem:[#allocation2 + $0x60] sm:$0xff] %v4247
      %4253 = vst [vmem:[#allocation2 + $0x68] sm:$0xff] %v4249
      %v4254 = vld [vmem:[#allocation4] sm:$0xff]
      %v4255 = vld [vmem:[#allocation4 + $0x8] sm:$0xff]
      %v4256 = vld [vmem:[#allocation4 + $0x10] sm:$0xf]
      %v4257 = vld [vmem:[%s0] sm:$0x88]
      %v4258 = vld [vmem:[%s0 + $0x8] sm:$0x88]
      %v4261 = vunpack.c.l.b16 %v4257
      %v4262 = vunpack.c.h.b16 %v4257
      %v4263 = vunpack.c.l.b16 %v4258
      %v4264 = vunpack.c.h.b16 %v4258
      %v4265 = vpack.c.b16 %v4261, %v4261
      %v4266 = vpack.c.b16 %v4262, %v4262
      %v4267 = vpack.c.b16 %v4263, %v4263
      %v4268 = vpack.c.b16 %v4264, %v4264
      %v4270 = vshrl.u32 %v4265, 16
      %v4271 = vpack.i.b16 %v4270, %v4270
      %v4273 = vlaneseq
      %v4274 = vshrl.u32 %v4273, 7
      %v4275 = vsub.s32 3, %v4274
      %v4276 = vrot.slane %v4271, %v4275
      %v4278 = vshrl.u32 %v4266, 16
      %v4279 = vpack.i.b16 %v4278, %v4278
      %v4281 = vlaneseq
      %v4282 = vshrl.u32 %v4281, 7
      %v4283 = vsub.s32 3, %v4282
      %v4284 = vrot.slane %v4279, %v4283
      %v4286 = vshrl.u32 %v4267, 16
      %v4287 = vpack.i.b16 %v4286, %v4286
      %v4289 = vlaneseq
      %v4290 = vshrl.u32 %v4289, 7
      %v4291 = vsub.s32 3, %v4290
      %v4292 = vrot.slane %v4287, %v4291
      %v4294 = vshrl.u32 %v4268, 16
      %v4295 = vpack.i.b16 %v4294, %v4294
      %v4297 = vlaneseq
      %v4298 = vshrl.u32 %v4297, 7
      %v4299 = vsub.s32 3, %v4298
      %v4300 = vrot.slane %v4295, %v4299
      %v4305 = vunpack.c.l.b16 %v4276
      %v4306 = vunpack.c.l.b16 %v4284
      %v4307 = vunpack.c.l.b16 %v4292
      %v4308 = vunpack.c.l.b16 %v4300
      %v4309 = vpack.c.b16 %v4306, %v4305
      %v4310 = vpack.c.b16 %v4308, %v4307
      %4311 = vrot.lane.b32.xlu0 %v4309, 72
      %v4312 = vpop.permute.xlu0 %4311
      %4313 = vrot.lane.b32.xlu0 %v4310, 72
      %v4314 = vpop.permute.xlu0 %4313
      %v4315 = vrot.slane %v4312, 4
      %v4316 = vrot.slane %v4314, 4
      %v4317 = vsel %vm466, %v4315, %v4312
      %v4318 = vsel %vm345, %v4315, %v4316
      %v4319 = vsel %vm466, %v4318, %v4314
      %v4323 = vmul.bf16 %v4254, %v4317
      %v4324 = vmul.bf16 %v4255, %v4319
      %v4325 = vmul.bf16 %v4256, %v4316
      %4329 = vrot.lane.b32.xlu0 %v4323, 56
      %v4330 = vpop.permute.xlu0 %4329
      %4331 = vrot.lane.b32.xlu0 %v4324, 56
      %v4332 = vpop.permute.xlu0 %4331
      %4333 = vrot.lane.b32.xlu0 %v4325, 56
      %v4334 = vpop.permute.xlu0 %4333
      %v4335 = vrot.slane %v4330, 4
      %v4336 = vrot.slane %v4332, 4
      %v4337 = vrot.slane %v4334, 4
      %v4338 = vsel %vm345, %v4335, %v4336
      %v4339 = vsel %vm425, %v4330, %v4338
      %v4340 = vsel %vm345, %v4336, %v4337
      %v4341 = vsel %vm425, %v4332, %v4340
      %4344 = vst [vmem:[#allocation2 + $0x70] sm:$0xff] %v4339
      %4345 = vst [vmem:[#allocation2 + $0x78] sm:$0xff] %v4341
      %v4346 = vld [vmem:[#allocation4] sm:$0xff]
      %v4347 = vld [vmem:[#allocation4 + $0x8] sm:$0xff]
      %v4348 = vld [vmem:[#allocation4 + $0x10] sm:$0xf]
      %v4349 = vld [vmem:[%s0 + $0x10] sm:$0x11]
      %v4350 = vld [vmem:[%s0 + $0x18] sm:$0x11]
      %v4353 = vunpack.c.l.b16 %v4349
      %v4354 = vunpack.c.h.b16 %v4349
      %v4355 = vunpack.c.l.b16 %v4350
      %v4356 = vunpack.c.h.b16 %v4350
      %v4357 = vpack.c.b16 %v4353, %v4353
      %v4358 = vpack.c.b16 %v4354, %v4354
      %v4359 = vpack.c.b16 %v4355, %v4355
      %v4360 = vpack.c.b16 %v4356, %v4356
      %v4362 = vpack.i.b16 %v4357, %v4357
      %v4364 = vlaneseq
      %v4365 = vshrl.u32 %v4364, 7
      %v4366 = vsub.s32 0, %v4365
      %v4367 = vrot.slane %v4362, %v4366
      %v4369 = vpack.i.b16 %v4358, %v4358
      %v4371 = vlaneseq
      %v4372 = vshrl.u32 %v4371, 7
      %v4373 = vsub.s32 0, %v4372
      %v4374 = vrot.slane %v4369, %v4373
      %v4376 = vpack.i.b16 %v4359, %v4359
      %v4378 = vlaneseq
      %v4379 = vshrl.u32 %v4378, 7
      %v4380 = vsub.s32 0, %v4379
      %v4381 = vrot.slane %v4376, %v4380
      %v4383 = vpack.i.b16 %v4360, %v4360
      %v4385 = vlaneseq
      %v4386 = vshrl.u32 %v4385, 7
      %v4387 = vsub.s32 0, %v4386
      %v4388 = vrot.slane %v4383, %v4387
      %v4393 = vunpack.c.l.b16 %v4367
      %v4394 = vunpack.c.l.b16 %v4374
      %v4395 = vunpack.c.l.b16 %v4381
      %v4396 = vunpack.c.l.b16 %v4388
      %v4397 = vpack.c.b16 %v4394, %v4393
      %v4398 = vpack.c.b16 %v4396, %v4395
      %4399 = vrot.lane.b32.xlu0 %v4397, 73
      %v4400 = vpop.permute.xlu0 %4399
      %4401 = vrot.lane.b32.xlu0 %v4398, 73
      %v4402 = vpop.permute.xlu0 %4401
      %v4403 = vrot.slane %v4400, 4
      %v4404 = vrot.slane %v4402, 4
      %v4405 = vsel %vm347, %v4403, %v4400
      %v4406 = vsel %vm345, %v4403, %v4404
      %v4407 = vsel %vm347, %v4406, %v4402
      %v4411 = vmul.bf16 %v4346, %v4405
      %v4412 = vmul.bf16 %v4347, %v4407
      %v4413 = vmul.bf16 %v4348, %v4404
      %4417 = vrot.lane.b32.xlu0 %v4411, 55
      %v4418 = vpop.permute.xlu0 %4417
      %4419 = vrot.lane.b32.xlu0 %v4412, 55
      %v4420 = vpop.permute.xlu0 %4419
      %4421 = vrot.lane.b32.xlu0 %v4413, 55
      %v4422 = vpop.permute.xlu0 %4421
      %v4423 = vrot.slane %v4418, 4
      %v4424 = vrot.slane %v4420, 4
      %v4425 = vrot.slane %v4422, 4
      %v4426 = vsel %vm345, %v4423, %v4424
      %v4427 = vsel %vm306, %v4418, %v4426
      %v4428 = vsel %vm345, %v4424, %v4425
      %v4429 = vsel %vm306, %v4420, %v4428
      %4432 = vst [vmem:[#allocation2 + $0x80] sm:$0xff] %v4427
      %4433 = vst [vmem:[#allocation2 + $0x88] sm:$0xff] %v4429
      %v4434 = vld [vmem:[#allocation4] sm:$0xff]
      %v4435 = vld [vmem:[#allocation4 + $0x8] sm:$0xff]
      %v4436 = vld [vmem:[#allocation4 + $0x10] sm:$0xf]
      %v4437 = vld [vmem:[%s0 + $0x10] sm:$0x11]
      %v4438 = vld [vmem:[%s0 + $0x18] sm:$0x11]
      %v4441 = vunpack.c.l.b16 %v4437
      %v4442 = vunpack.c.h.b16 %v4437
      %v4443 = vunpack.c.l.b16 %v4438
      %v4444 = vunpack.c.h.b16 %v4438
      %v4445 = vpack.c.b16 %v4441, %v4441
      %v4446 = vpack.c.b16 %v4442, %v4442
      %v4447 = vpack.c.b16 %v4443, %v4443
      %v4448 = vpack.c.b16 %v4444, %v4444
      %v4450 = vshrl.u32 %v4445, 16
      %v4451 = vpack.i.b16 %v4450, %v4450
      %v4453 = vlaneseq
      %v4454 = vshrl.u32 %v4453, 7
      %v4455 = vsub.s32 0, %v4454
      %v4456 = vrot.slane %v4451, %v4455
      %v4458 = vshrl.u32 %v4446, 16
      %v4459 = vpack.i.b16 %v4458, %v4458
      %v4461 = vlaneseq
      %v4462 = vshrl.u32 %v4461, 7
      %v4463 = vsub.s32 0, %v4462
      %v4464 = vrot.slane %v4459, %v4463
      %v4466 = vshrl.u32 %v4447, 16
      %v4467 = vpack.i.b16 %v4466, %v4466
      %v4469 = vlaneseq
      %v4470 = vshrl.u32 %v4469, 7
      %v4471 = vsub.s32 0, %v4470
      %v4472 = vrot.slane %v4467, %v4471
      %v4474 = vshrl.u32 %v4448, 16
      %v4475 = vpack.i.b16 %v4474, %v4474
      %v4477 = vlaneseq
      %v4478 = vshrl.u32 %v4477, 7
      %v4479 = vsub.s32 0, %v4478
      %v4480 = vrot.slane %v4475, %v4479
      %v4485 = vunpack.c.l.b16 %v4456
      %v4486 = vunpack.c.l.b16 %v4464
      %v4487 = vunpack.c.l.b16 %v4472
      %v4488 = vunpack.c.l.b16 %v4480
      %v4489 = vpack.c.b16 %v4486, %v4485
      %v4490 = vpack.c.b16 %v4488, %v4487
      %4491 = vrot.lane.b32.xlu0 %v4489, 119
      %v4492 = vpop.permute.xlu0 %4491
      %4493 = vrot.lane.b32.xlu0 %v4490, 119
      %v4494 = vpop.permute.xlu0 %4493
      %v4495 = vrot.slane %v4492, 4
      %v4496 = vrot.slane %v4494, 4
      %v4497 = vsel %vm1348, %v4495, %v4492
      %v4498 = vsel %vm345, %v4495, %v4496
      %v4499 = vsel %vm1348, %v4498, %v4494
      %v4503 = vmul.bf16 %v4434, %v4497
      %v4504 = vmul.bf16 %v4435, %v4499
      %v4505 = vmul.bf16 %v4436, %v4496
      %4509 = vrot.lane.b32.xlu0 %v4503, 9
      %v4510 = vpop.permute.xlu0 %4509
      %4511 = vrot.lane.b32.xlu0 %v4504, 9
      %v4512 = vpop.permute.xlu0 %4511
      %4513 = vrot.lane.b32.xlu0 %v4505, 9
      %v4514 = vpop.permute.xlu0 %4513
      %v4515 = vrot.slane %v4510, 4
      %v4516 = vrot.slane %v4512, 4
      %v4517 = vrot.slane %v4514, 4
      %v4518 = vsel %vm345, %v4515, %v4516
      %v4519 = vsel %vm1389, %v4510, %v4518
      %v4520 = vsel %vm345, %v4516, %v4517
      %v4521 = vsel %vm1389, %v4512, %v4520
      %4524 = vst [vmem:[#allocation2 + $0x90] sm:$0xff] %v4519
      %4525 = vst [vmem:[#allocation2 + $0x98] sm:$0xff] %v4521
      %v4526 = vld [vmem:[#allocation4] sm:$0xff]
      %v4527 = vld [vmem:[#allocation4 + $0x8] sm:$0xff]
      %v4528 = vld [vmem:[#allocation4 + $0x10] sm:$0xf]
      %v4529 = vld [vmem:[%s0 + $0x10] sm:$0x22]
      %v4530 = vld [vmem:[%s0 + $0x18] sm:$0x22]
      %v4533 = vunpack.c.l.b16 %v4529
      %v4534 = vunpack.c.h.b16 %v4529
      %v4535 = vunpack.c.l.b16 %v4530
      %v4536 = vunpack.c.h.b16 %v4530
      %v4537 = vpack.c.b16 %v4533, %v4533
      %v4538 = vpack.c.b16 %v4534, %v4534
      %v4539 = vpack.c.b16 %v4535, %v4535
      %v4540 = vpack.c.b16 %v4536, %v4536
      %v4542 = vpack.i.b16 %v4537, %v4537
      %v4544 = vlaneseq
      %v4545 = vshrl.u32 %v4544, 7
      %v4546 = vsub.s32 1, %v4545
      %v4547 = vrot.slane %v4542, %v4546
      %v4549 = vpack.i.b16 %v4538, %v4538
      %v4551 = vlaneseq
      %v4552 = vshrl.u32 %v4551, 7
      %v4553 = vsub.s32 1, %v4552
      %v4554 = vrot.slane %v4549, %v4553
      %v4556 = vpack.i.b16 %v4539, %v4539
      %v4558 = vlaneseq
      %v4559 = vshrl.u32 %v4558, 7
      %v4560 = vsub.s32 1, %v4559
      %v4561 = vrot.slane %v4556, %v4560
      %v4563 = vpack.i.b16 %v4540, %v4540
      %v4565 = vlaneseq
      %v4566 = vshrl.u32 %v4565, 7
      %v4567 = vsub.s32 1, %v4566
      %v4568 = vrot.slane %v4563, %v4567
      %v4573 = vunpack.c.l.b16 %v4547
      %v4574 = vunpack.c.l.b16 %v4554
      %v4575 = vunpack.c.l.b16 %v4561
      %v4576 = vunpack.c.l.b16 %v4568
      %v4577 = vpack.c.b16 %v4574, %v4573
      %v4578 = vpack.c.b16 %v4576, %v4575
      %4579 = vrot.lane.b32.xlu0 %v4577, 120
      %v4580 = vpop.permute.xlu0 %4579
      %4581 = vrot.lane.b32.xlu0 %v4578, 120
      %v4582 = vpop.permute.xlu0 %4581
      %v4583 = vrot.slane %v4580, 4
      %v4584 = vrot.slane %v4582, 4
      %v4585 = vsel %vm1463, %v4583, %v4580
      %v4586 = vsel %vm345, %v4583, %v4584
      %v4587 = vsel %vm1463, %v4586, %v4582
      %v4591 = vmul.bf16 %v4526, %v4585
      %v4592 = vmul.bf16 %v4527, %v4587
      %v4593 = vmul.bf16 %v4528, %v4584
      %4597 = vrot.lane.b32.xlu0 %v4591, 8
      %v4598 = vpop.permute.xlu0 %4597
      %4599 = vrot.lane.b32.xlu0 %v4592, 8
      %v4600 = vpop.permute.xlu0 %4599
      %4601 = vrot.lane.b32.xlu0 %v4593, 8
      %v4602 = vpop.permute.xlu0 %4601
      %v4603 = vrot.slane %v4598, 4
      %v4604 = vrot.slane %v4600, 4
      %v4605 = vrot.slane %v4602, 4
      %v4606 = vsel %vm345, %v4603, %v4604
      %v4607 = vsel %vm1503, %v4598, %v4606
      %v4608 = vsel %vm345, %v4604, %v4605
      %v4609 = vsel %vm1503, %v4600, %v4608
      %4612 = vst [vmem:[#allocation2 + $0xa0] sm:$0xff] %v4607
      %4613 = vst [vmem:[#allocation2 + $0xa8] sm:$0xff] %v4609
      %v4614 = vld [vmem:[#allocation4] sm:$0xff]
      %v4615 = vld [vmem:[#allocation4 + $0x8] sm:$0xff]
      %v4616 = vld [vmem:[#allocation4 + $0x10] sm:$0xf]
      %v4617 = vld [vmem:[%s0 + $0x10] sm:$0x22]
      %v4618 = vld [vmem:[%s0 + $0x18] sm:$0x22]
      %v4621 = vunpack.c.l.b16 %v4617
      %v4622 = vunpack.c.h.b16 %v4617
      %v4623 = vunpack.c.l.b16 %v4618
      %v4624 = vunpack.c.h.b16 %v4618
      %v4625 = vpack.c.b16 %v4621, %v4621
      %v4626 = vpack.c.b16 %v4622, %v4622
      %v4627 = vpack.c.b16 %v4623, %v4623
      %v4628 = vpack.c.b16 %v4624, %v4624
      %v4630 = vshrl.u32 %v4625, 16
      %v4631 = vpack.i.b16 %v4630, %v4630
      %v4633 = vlaneseq
      %v4634 = vshrl.u32 %v4633, 7
      %v4635 = vsub.s32 1, %v4634
      %v4636 = vrot.slane %v4631, %v4635
      %v4638 = vshrl.u32 %v4626, 16
      %v4639 = vpack.i.b16 %v4638, %v4638
      %v4641 = vlaneseq
      %v4642 = vshrl.u32 %v4641, 7
      %v4643 = vsub.s32 1, %v4642
      %v4644 = vrot.slane %v4639, %v4643
      %v4646 = vshrl.u32 %v4627, 16
      %v4647 = vpack.i.b16 %v4646, %v4646
      %v4649 = vlaneseq
      %v4650 = vshrl.u32 %v4649, 7
      %v4651 = vsub.s32 1, %v4650
      %v4652 = vrot.slane %v4647, %v4651
      %v4654 = vshrl.u32 %v4628, 16
      %v4655 = vpack.i.b16 %v4654, %v4654
      %v4657 = vlaneseq
      %v4658 = vshrl.u32 %v4657, 7
      %v4659 = vsub.s32 1, %v4658
      %v4660 = vrot.slane %v4655, %v4659
      %v4665 = vunpack.c.l.b16 %v4636
      %v4666 = vunpack.c.l.b16 %v4644
      %v4667 = vunpack.c.l.b16 %v4652
      %v4668 = vunpack.c.l.b16 %v4660
      %v4669 = vpack.c.b16 %v4666, %v4665
      %v4670 = vpack.c.b16 %v4668, %v4667
      %4671 = vrot.lane.b32.xlu0 %v4669, 121
      %v4672 = vpop.permute.xlu0 %4671
      %4673 = vrot.lane.b32.xlu0 %v4670, 121
      %v4674 = vpop.permute.xlu0 %4673
      %v4675 = vrot.slane %v4672, 4
      %v4676 = vrot.slane %v4674, 4
      %v4677 = vsel %vm1581, %v4675, %v4672
      %v4678 = vsel %vm345, %v4675, %v4676
      %v4679 = vsel %vm1581, %v4678, %v4674
      %v4683 = vmul.bf16 %v4614, %v4677
      %v4684 = vmul.bf16 %v4615, %v4679
      %v4685 = vmul.bf16 %v4616, %v4676
      %4689 = vrot.lane.b32.xlu0 %v4683, 7
      %v4690 = vpop.permute.xlu0 %4689
      %4691 = vrot.lane.b32.xlu0 %v4684, 7
      %v4692 = vpop.permute.xlu0 %4691
      %4693 = vrot.lane.b32.xlu0 %v4685, 7
      %v4694 = vpop.permute.xlu0 %4693
      %v4695 = vrot.slane %v4690, 4
      %v4696 = vrot.slane %v4692, 4
      %v4697 = vrot.slane %v4694, 4
      %v4698 = vsel %vm345, %v4695, %v4696
      %v4699 = vsel %vm1622, %v4690, %v4698
      %v4700 = vsel %vm345, %v4696, %v4697
      %v4701 = vsel %vm1622, %v4692, %v4700
      %4704 = vst [vmem:[#allocation2 + $0xb0] sm:$0xff] %v4699
      %4705 = vst [vmem:[#allocation2 + $0xb8] sm:$0xff] %v4701
      %v4706 = vld [vmem:[#allocation4] sm:$0xff]
      %v4707 = vld [vmem:[#allocation4 + $0x8] sm:$0xff]
      %v4708 = vld [vmem:[#allocation4 + $0x10] sm:$0xf]
      %v4709 = vld [vmem:[%s0 + $0x10] sm:$0x44]
      %v4710 = vld [vmem:[%s0 + $0x18] sm:$0x44]
      %v4713 = vunpack.c.l.b16 %v4709
      %v4714 = vunpack.c.h.b16 %v4709
      %v4715 = vunpack.c.l.b16 %v4710
      %v4716 = vunpack.c.h.b16 %v4710
      %v4717 = vpack.c.b16 %v4713, %v4713
      %v4718 = vpack.c.b16 %v4714, %v4714
      %v4719 = vpack.c.b16 %v4715, %v4715
      %v4720 = vpack.c.b16 %v4716, %v4716
      %v4722 = vpack.i.b16 %v4717, %v4717
      %v4724 = vlaneseq
      %v4725 = vshrl.u32 %v4724, 7
      %v4726 = vsub.s32 2, %v4725
      %v4727 = vrot.slane %v4722, %v4726
      %v4729 = vpack.i.b16 %v4718, %v4718
      %v4731 = vlaneseq
      %v4732 = vshrl.u32 %v4731, 7
      %v4733 = vsub.s32 2, %v4732
      %v4734 = vrot.slane %v4729, %v4733
      %v4736 = vpack.i.b16 %v4719, %v4719
      %v4738 = vlaneseq
      %v4739 = vshrl.u32 %v4738, 7
      %v4740 = vsub.s32 2, %v4739
      %v4741 = vrot.slane %v4736, %v4740
      %v4743 = vpack.i.b16 %v4720, %v4720
      %v4745 = vlaneseq
      %v4746 = vshrl.u32 %v4745, 7
      %v4747 = vsub.s32 2, %v4746
      %v4748 = vrot.slane %v4743, %v4747
      %v4753 = vunpack.c.l.b16 %v4727
      %v4754 = vunpack.c.l.b16 %v4734
      %v4755 = vunpack.c.l.b16 %v4741
      %v4756 = vunpack.c.l.b16 %v4748
      %v4757 = vpack.c.b16 %v4754, %v4753
      %v4758 = vpack.c.b16 %v4756, %v4755
      %4759 = vrot.lane.b32.xlu0 %v4757, 127
      %v4760 = vpop.permute.xlu0 %4759
      %4761 = vrot.lane.b32.xlu0 %v4758, 127
      %v4762 = vpop.permute.xlu0 %4761
      %v4763 = vrot.slane %v4760, 4
      %v4764 = vrot.slane %v4762, 4
      %v4765 = vsel %vm1696, %v4763, %v4760
      %v4766 = vsel %vm345, %v4763, %v4764
      %v4767 = vsel %vm1696, %v4766, %v4762
      %v4771 = vmul.bf16 %v4706, %v4765
      %v4772 = vmul.bf16 %v4707, %v4767
      %v4773 = vmul.bf16 %v4708, %v4764
      %4777 = vrot.lane.b32.xlu0 %v4771, 1
      %v4778 = vpop.permute.xlu0 %4777
      %4779 = vrot.lane.b32.xlu0 %v4772, 1
      %v4780 = vpop.permute.xlu0 %4779
      %4781 = vrot.lane.b32.xlu0 %v4773, 1
      %v4782 = vpop.permute.xlu0 %4781
      %v4783 = vrot.slane %v4778, 4
      %v4784 = vrot.slane %v4780, 4
      %v4785 = vrot.slane %v4782, 4
      %v4786 = vsel %vm345, %v4783, %v4784
      %v4787 = vsel %vm1736, %v4778, %v4786
      %v4788 = vsel %vm345, %v4784, %v4785
      %v4789 = vsel %vm1736, %v4780, %v4788
      %4792 = vst [vmem:[#allocation2 + $0xc0] sm:$0xff] %v4787
      %4793 = vst [vmem:[#allocation2 + $0xc8] sm:$0xff] %v4789
      %v4794 = vld [vmem:[#allocation4 + $0x4] sm:$0xff]
      %v4795 = vld [vmem:[#allocation4 + $0xc] sm:$0xff]
      %v4796 = vld [vmem:[%s0 + $0x10] sm:$0x44]
      %v4797 = vld [vmem:[%s0 + $0x18] sm:$0x44]
      %v4800 = vunpack.c.l.b16 %v4796
      %v4801 = vunpack.c.h.b16 %v4796
      %v4802 = vunpack.c.l.b16 %v4797
      %v4803 = vunpack.c.h.b16 %v4797
      %v4804 = vpack.c.b16 %v4800, %v4800
      %v4805 = vpack.c.b16 %v4801, %v4801
      %v4806 = vpack.c.b16 %v4802, %v4802
      %v4807 = vpack.c.b16 %v4803, %v4803
      %v4809 = vshrl.u32 %v4804, 16
      %v4810 = vpack.i.b16 %v4809, %v4809
      %v4812 = vlaneseq
      %v4813 = vshrl.u32 %v4812, 7
      %v4814 = vsub.s32 2, %v4813
      %v4815 = vrot.slane %v4810, %v4814
      %v4817 = vshrl.u32 %v4805, 16
      %v4818 = vpack.i.b16 %v4817, %v4817
      %v4820 = vlaneseq
      %v4821 = vshrl.u32 %v4820, 7
      %v4822 = vsub.s32 2, %v4821
      %v4823 = vrot.slane %v4818, %v4822
      %v4825 = vshrl.u32 %v4806, 16
      %v4826 = vpack.i.b16 %v4825, %v4825
      %v4828 = vlaneseq
      %v4829 = vshrl.u32 %v4828, 7
      %v4830 = vsub.s32 2, %v4829
      %v4831 = vrot.slane %v4826, %v4830
      %v4833 = vshrl.u32 %v4807, 16
      %v4834 = vpack.i.b16 %v4833, %v4833
      %v4836 = vlaneseq
      %v4837 = vshrl.u32 %v4836, 7
      %v4838 = vsub.s32 2, %v4837
      %v4839 = vrot.slane %v4834, %v4838
      %v4844 = vunpack.c.l.b16 %v4815
      %v4845 = vunpack.c.l.b16 %v4823
      %v4846 = vunpack.c.l.b16 %v4831
      %v4847 = vunpack.c.l.b16 %v4839
      %v4848 = vpack.c.b16 %v4845, %v4844
      %v4849 = vpack.c.b16 %v4847, %v4846
      %v4852 = vmul.bf16 %v4794, %v4848
      %v4853 = vmul.bf16 %v4795, %v4849
      %4854 = vst [vmem:[#allocation2 + $0xd0] sm:$0xff] %v4852
      %4855 = vst [vmem:[#allocation2 + $0xd8] sm:$0xff] %v4853
      %v4856 = vld [vmem:[#allocation4 + $0x4] sm:$0xff]
      %v4857 = vld [vmem:[#allocation4 + $0xc] sm:$0xff]
      %v4858 = vld [vmem:[#allocation4 + $0x14] sm:$0xf]
      %v4859 = vld [vmem:[%s0 + $0x10] sm:$0x88]
      %v4860 = vld [vmem:[%s0 + $0x18] sm:$0x88]
      %v4863 = vunpack.c.l.b16 %v4859
      %v4864 = vunpack.c.h.b16 %v4859
      %v4865 = vunpack.c.l.b16 %v4860
      %v4866 = vunpack.c.h.b16 %v4860
      %v4867 = vpack.c.b16 %v4863, %v4863
      %v4868 = vpack.c.b16 %v4864, %v4864
      %v4869 = vpack.c.b16 %v4865, %v4865
      %v4870 = vpack.c.b16 %v4866, %v4866
      %v4872 = vpack.i.b16 %v4867, %v4867
      %v4874 = vlaneseq
      %v4875 = vshrl.u32 %v4874, 7
      %v4876 = vsub.s32 3, %v4875
      %v4877 = vrot.slane %v4872, %v4876
      %v4879 = vpack.i.b16 %v4868, %v4868
      %v4881 = vlaneseq
      %v4882 = vshrl.u32 %v4881, 7
      %v4883 = vsub.s32 3, %v4882
      %v4884 = vrot.slane %v4879, %v4883
      %v4886 = vpack.i.b16 %v4869, %v4869
      %v4888 = vlaneseq
      %v4889 = vshrl.u32 %v4888, 7
      %v4890 = vsub.s32 3, %v4889
      %v4891 = vrot.slane %v4886, %v4890
      %v4893 = vpack.i.b16 %v4870, %v4870
      %v4895 = vlaneseq
      %v4896 = vshrl.u32 %v4895, 7
      %v4897 = vsub.s32 3, %v4896
      %v4898 = vrot.slane %v4893, %v4897
      %v4903 = vunpack.c.l.b16 %v4877
      %v4904 = vunpack.c.l.b16 %v4884
      %v4905 = vunpack.c.l.b16 %v4891
      %v4906 = vunpack.c.l.b16 %v4898
      %v4907 = vpack.c.b16 %v4904, %v4903
      %v4908 = vpack.c.b16 %v4906, %v4905
      %4909 = vrot.lane.b32.xlu0 %v4907, 1
      %v4910 = vpop.permute.xlu0 %4909
      %4911 = vrot.lane.b32.xlu0 %v4908, 1
      %v4912 = vpop.permute.xlu0 %4911
      %v4913 = vrot.slane %v4910, 4
      %v4914 = vrot.slane %v4912, 4
      %v4915 = vsel %vm1736, %v4913, %v4910
      %v4916 = vsel %vm345, %v4913, %v4914
      %v4917 = vsel %vm1736, %v4916, %v4912
      %v4921 = vmul.bf16 %v4856, %v4915
      %v4922 = vmul.bf16 %v4857, %v4917
      %v4923 = vmul.bf16 %v4858, %v4914
      %4927 = vrot.lane.b32.xlu0 %v4921, 127
      %v4928 = vpop.permute.xlu0 %4927
      %4929 = vrot.lane.b32.xlu0 %v4922, 127
      %v4930 = vpop.permute.xlu0 %4929
      %4931 = vrot.lane.b32.xlu0 %v4923, 127
      %v4932 = vpop.permute.xlu0 %4931
      %v4933 = vrot.slane %v4928, 4
      %v4934 = vrot.slane %v4930, 4
      %v4935 = vrot.slane %v4932, 4
      %v4936 = vsel %vm345, %v4933, %v4934
      %v4937 = vsel %vm1696, %v4928, %v4936
      %v4938 = vsel %vm345, %v4934, %v4935
      %v4939 = vsel %vm1696, %v4930, %v4938
      %4942 = vst [vmem:[#allocation2 + $0xe0] sm:$0xff] %v4937
      %4943 = vst [vmem:[#allocation2 + $0xe8] sm:$0xff] %v4939
      %v4944 = vld [vmem:[#allocation4 + $0x4] sm:$0xff]
      %v4945 = vld [vmem:[#allocation4 + $0xc] sm:$0xff]
      %v4946 = vld [vmem:[#allocation4 + $0x14] sm:$0xf]
      %v4947 = vld [vmem:[%s0 + $0x10] sm:$0x88]
      %v4948 = vld [vmem:[%s0 + $0x18] sm:$0x88]
      %v4951 = vunpack.c.l.b16 %v4947
      %v4952 = vunpack.c.h.b16 %v4947
      %v4953 = vunpack.c.l.b16 %v4948
      %v4954 = vunpack.c.h.b16 %v4948
      %v4955 = vpack.c.b16 %v4951, %v4951
      %v4956 = vpack.c.b16 %v4952, %v4952
      %v4957 = vpack.c.b16 %v4953, %v4953
      %v4958 = vpack.c.b16 %v4954, %v4954
      %v4960 = vshrl.u32 %v4955, 16
      %v4961 = vpack.i.b16 %v4960, %v4960
      %v4963 = vlaneseq
      %v4964 = vshrl.u32 %v4963, 7
      %v4965 = vsub.s32 3, %v4964
      %v4966 = vrot.slane %v4961, %v4965
      %v4968 = vshrl.u32 %v4956, 16
      %v4969 = vpack.i.b16 %v4968, %v4968
      %v4971 = vlaneseq
      %v4972 = vshrl.u32 %v4971, 7
      %v4973 = vsub.s32 3, %v4972
      %v4974 = vrot.slane %v4969, %v4973
      %v4976 = vshrl.u32 %v4957, 16
      %v4977 = vpack.i.b16 %v4976, %v4976
      %v4979 = vlaneseq
      %v4980 = vshrl.u32 %v4979, 7
      %v4981 = vsub.s32 3, %v4980
      %v4982 = vrot.slane %v4977, %v4981
      %v4984 = vshrl.u32 %v4958, 16
      %v4985 = vpack.i.b16 %v4984, %v4984
      %v4987 = vlaneseq
      %v4988 = vshrl.u32 %v4987, 7
      %v4989 = vsub.s32 3, %v4988
      %v4990 = vrot.slane %v4985, %v4989
      %v4995 = vunpack.c.l.b16 %v4966
      %v4996 = vunpack.c.l.b16 %v4974
      %v4997 = vunpack.c.l.b16 %v4982
      %v4998 = vunpack.c.l.b16 %v4990
      %v4999 = vpack.c.b16 %v4996, %v4995
      %v5000 = vpack.c.b16 %v4998, %v4997
      %5001 = vrot.lane.b32.xlu0 %v4999, 7
      %v5002 = vpop.permute.xlu0 %5001
      %5003 = vrot.lane.b32.xlu0 %v5000, 7
      %v5004 = vpop.permute.xlu0 %5003
      %v5005 = vrot.slane %v5002, 4
      %v5006 = vrot.slane %v5004, 4
      %v5007 = vsel %vm1622, %v5005, %v5002
      %v5008 = vsel %vm345, %v5005, %v5006
      %v5009 = vsel %vm1622, %v5008, %v5004
      %v5013 = vmul.bf16 %v4944, %v5007
      %v5014 = vmul.bf16 %v4945, %v5009
      %v5015 = vmul.bf16 %v4946, %v5006
      %5019 = vrot.lane.b32.xlu0 %v5013, 121
      %v5020 = vpop.permute.xlu0 %5019
      %5021 = vrot.lane.b32.xlu0 %v5014, 121
      %v5022 = vpop.permute.xlu0 %5021
      %5023 = vrot.lane.b32.xlu0 %v5015, 121
      %v5024 = vpop.permute.xlu0 %5023
      %v5025 = vrot.slane %v5020, 4
      %v5026 = vrot.slane %v5022, 4
      %v5027 = vrot.slane %v5024, 4
      %v5028 = vsel %vm345, %v5025, %v5026
      %v5029 = vsel %vm1581, %v5020, %v5028
      %v5030 = vsel %vm345, %v5026, %v5027
      %v5031 = vsel %vm1581, %v5022, %v5030
      %5034 = vst [vmem:[#allocation2 + $0xf0] sm:$0xff] %v5029
      %5035 = vst [vmem:[#allocation2 + $0xf8] sm:$0xff] %v5031
      %v5036 = vld [vmem:[#allocation4 + $0x4] sm:$0xff]
      %v5037 = vld [vmem:[#allocation4 + $0xc] sm:$0xff]
      %v5038 = vld [vmem:[#allocation4 + $0x14] sm:$0xf]
      %v5039 = vld [vmem:[%s0 + $0x20] sm:$0x11]
      %v5040 = vld [vmem:[%s0 + $0x28] sm:$0x11]
      %v5043 = vunpack.c.l.b16 %v5039
      %v5044 = vunpack.c.h.b16 %v5039
      %v5045 = vunpack.c.l.b16 %v5040
      %v5046 = vunpack.c.h.b16 %v5040
      %v5047 = vpack.c.b16 %v5043, %v5043
      %v5048 = vpack.c.b16 %v5044, %v5044
      %v5049 = vpack.c.b16 %v5045, %v5045
      %v5050 = vpack.c.b16 %v5046, %v5046
      %v5052 = vpack.i.b16 %v5047, %v5047
      %v5054 = vlaneseq
      %v5055 = vshrl.u32 %v5054, 7
      %v5056 = vsub.s32 0, %v5055
      %v5057 = vrot.slane %v5052, %v5056
      %v5059 = vpack.i.b16 %v5048, %v5048
      %v5061 = vlaneseq
      %v5062 = vshrl.u32 %v5061, 7
      %v5063 = vsub.s32 0, %v5062
      %v5064 = vrot.slane %v5059, %v5063
      %v5066 = vpack.i.b16 %v5049, %v5049
      %v5068 = vlaneseq
      %v5069 = vshrl.u32 %v5068, 7
      %v5070 = vsub.s32 0, %v5069
      %v5071 = vrot.slane %v5066, %v5070
      %v5073 = vpack.i.b16 %v5050, %v5050
      %v5075 = vlaneseq
      %v5076 = vshrl.u32 %v5075, 7
      %v5077 = vsub.s32 0, %v5076
      %v5078 = vrot.slane %v5073, %v5077
      %v5083 = vunpack.c.l.b16 %v5057
      %v5084 = vunpack.c.l.b16 %v5064
      %v5085 = vunpack.c.l.b16 %v5071
      %v5086 = vunpack.c.l.b16 %v5078
      %v5087 = vpack.c.b16 %v5084, %v5083
      %v5088 = vpack.c.b16 %v5086, %v5085
      %5089 = vrot.lane.b32.xlu0 %v5087, 8
      %v5090 = vpop.permute.xlu0 %5089
      %5091 = vrot.lane.b32.xlu0 %v5088, 8
      %v5092 = vpop.permute.xlu0 %5091
      %v5093 = vrot.slane %v5090, 4
      %v5094 = vrot.slane %v5092, 4
      %v5095 = vsel %vm1503, %v5093, %v5090
      %v5096 = vsel %vm345, %v5093, %v5094
      %v5097 = vsel %vm1503, %v5096, %v5092
      %v5101 = vmul.bf16 %v5036, %v5095
      %v5102 = vmul.bf16 %v5037, %v5097
      %v5103 = vmul.bf16 %v5038, %v5094
      %5107 = vrot.lane.b32.xlu0 %v5101, 120
      %v5108 = vpop.permute.xlu0 %5107
      %5109 = vrot.lane.b32.xlu0 %v5102, 120
      %v5110 = vpop.permute.xlu0 %5109
      %5111 = vrot.lane.b32.xlu0 %v5103, 120
      %v5112 = vpop.permute.xlu0 %5111
      %v5113 = vrot.slane %v5108, 4
      %v5114 = vrot.slane %v5110, 4
      %v5115 = vrot.slane %v5112, 4
      %v5116 = vsel %vm345, %v5113, %v5114
      %v5117 = vsel %vm1463, %v5108, %v5116
      %v5118 = vsel %vm345, %v5114, %v5115
      %v5119 = vsel %vm1463, %v5110, %v5118
      %5122 = vst [vmem:[#allocation2 + $0x100] sm:$0xff] %v5117
      %5123 = vst [vmem:[#allocation2 + $0x108] sm:$0xff] %v5119
      %v5124 = vld [vmem:[#allocation4 + $0x4] sm:$0xff]
      %v5125 = vld [vmem:[#allocation4 + $0xc] sm:$0xff]
      %v5126 = vld [vmem:[#allocation4 + $0x14] sm:$0xf]
      %v5127 = vld [vmem:[%s0 + $0x20] sm:$0x11]
      %v5128 = vld [vmem:[%s0 + $0x28] sm:$0x11]
      %v5131 = vunpack.c.l.b16 %v5127
      %v5132 = vunpack.c.h.b16 %v5127
      %v5133 = vunpack.c.l.b16 %v5128
      %v5134 = vunpack.c.h.b16 %v5128
      %v5135 = vpack.c.b16 %v5131, %v5131
      %v5136 = vpack.c.b16 %v5132, %v5132
      %v5137 = vpack.c.b16 %v5133, %v5133
      %v5138 = vpack.c.b16 %v5134, %v5134
      %v5140 = vshrl.u32 %v5135, 16
      %v5141 = vpack.i.b16 %v5140, %v5140
      %v5143 = vlaneseq
      %v5144 = vshrl.u32 %v5143, 7
      %v5145 = vsub.s32 0, %v5144
      %v5146 = vrot.slane %v5141, %v5145
      %v5148 = vshrl.u32 %v5136, 16
      %v5149 = vpack.i.b16 %v5148, %v5148
      %v5151 = vlaneseq
      %v5152 = vshrl.u32 %v5151, 7
      %v5153 = vsub.s32 0, %v5152
      %v5154 = vrot.slane %v5149, %v5153
      %v5156 = vshrl.u32 %v5137, 16
      %v5157 = vpack.i.b16 %v5156, %v5156
      %v5159 = vlaneseq
      %v5160 = vshrl.u32 %v5159, 7
      %v5161 = vsub.s32 0, %v5160
      %v5162 = vrot.slane %v5157, %v5161
      %v5164 = vshrl.u32 %v5138, 16
      %v5165 = vpack.i.b16 %v5164, %v5164
      %v5167 = vlaneseq
      %v5168 = vshrl.u32 %v5167, 7
      %v5169 = vsub.s32 0, %v5168
      %v5170 = vrot.slane %v5165, %v5169
      %v5175 = vunpack.c.l.b16 %v5146
      %v5176 = vunpack.c.l.b16 %v5154
      %v5177 = vunpack.c.l.b16 %v5162
      %v5178 = vunpack.c.l.b16 %v5170
      %v5179 = vpack.c.b16 %v5176, %v5175
      %v5180 = vpack.c.b16 %v5178, %v5177
      %5181 = vrot.lane.b32.xlu0 %v5179, 9
      %v5182 = vpop.permute.xlu0 %5181
      %5183 = vrot.lane.b32.xlu0 %v5180, 9
      %v5184 = vpop.permute.xlu0 %5183
      %v5185 = vrot.slane %v5182, 4
      %v5186 = vrot.slane %v5184, 4
      %v5187 = vsel %vm1389, %v5185, %v5182
      %v5188 = vsel %vm345, %v5185, %v5186
      %v5189 = vsel %vm1389, %v5188, %v5184
      %v5193 = vmul.bf16 %v5124, %v5187
      %v5194 = vmul.bf16 %v5125, %v5189
      %v5195 = vmul.bf16 %v5126, %v5186
      %5199 = vrot.lane.b32.xlu0 %v5193, 119
      %v5200 = vpop.permute.xlu0 %5199
      %5201 = vrot.lane.b32.xlu0 %v5194, 119
      %v5202 = vpop.permute.xlu0 %5201
      %5203 = vrot.lane.b32.xlu0 %v5195, 119
      %v5204 = vpop.permute.xlu0 %5203
      %v5205 = vrot.slane %v5200, 4
      %v5206 = vrot.slane %v5202, 4
      %v5207 = vrot.slane %v5204, 4
      %v5208 = vsel %vm345, %v5205, %v5206
      %v5209 = vsel %vm1348, %v5200, %v5208
      %v5210 = vsel %vm345, %v5206, %v5207
      %v5211 = vsel %vm1348, %v5202, %v5210
      %5214 = vst [vmem:[#allocation2 + $0x110] sm:$0xff] %v5209
      %5215 = vst [vmem:[#allocation2 + $0x118] sm:$0xff] %v5211
      %v5216 = vld [vmem:[#allocation4 + $0x4] sm:$0xff]
      %v5217 = vld [vmem:[#allocation4 + $0xc] sm:$0xff]
      %v5218 = vld [vmem:[#allocation4 + $0x14] sm:$0xf]
      %v5219 = vld [vmem:[%s0 + $0x20] sm:$0x22]
      %v5220 = vld [vmem:[%s0 + $0x28] sm:$0x22]
      %v5223 = vunpack.c.l.b16 %v5219
      %v5224 = vunpack.c.h.b16 %v5219
      %v5225 = vunpack.c.l.b16 %v5220
      %v5226 = vunpack.c.h.b16 %v5220
      %v5227 = vpack.c.b16 %v5223, %v5223
      %v5228 = vpack.c.b16 %v5224, %v5224
      %v5229 = vpack.c.b16 %v5225, %v5225
      %v5230 = vpack.c.b16 %v5226, %v5226
      %v5232 = vpack.i.b16 %v5227, %v5227
      %v5234 = vlaneseq
      %v5235 = vshrl.u32 %v5234, 7
      %v5236 = vsub.s32 1, %v5235
      %v5237 = vrot.slane %v5232, %v5236
      %v5239 = vpack.i.b16 %v5228, %v5228
      %v5241 = vlaneseq
      %v5242 = vshrl.u32 %v5241, 7
      %v5243 = vsub.s32 1, %v5242
      %v5244 = vrot.slane %v5239, %v5243
      %v5246 = vpack.i.b16 %v5229, %v5229
      %v5248 = vlaneseq
      %v5249 = vshrl.u32 %v5248, 7
      %v5250 = vsub.s32 1, %v5249
      %v5251 = vrot.slane %v5246, %v5250
      %v5253 = vpack.i.b16 %v5230, %v5230
      %v5255 = vlaneseq
      %v5256 = vshrl.u32 %v5255, 7
      %v5257 = vsub.s32 1, %v5256
      %v5258 = vrot.slane %v5253, %v5257
      %v5263 = vunpack.c.l.b16 %v5237
      %v5264 = vunpack.c.l.b16 %v5244
      %v5265 = vunpack.c.l.b16 %v5251
      %v5266 = vunpack.c.l.b16 %v5258
      %v5267 = vpack.c.b16 %v5264, %v5263
      %v5268 = vpack.c.b16 %v5266, %v5265
      %5269 = vrot.lane.b32.xlu0 %v5267, 55
      %v5270 = vpop.permute.xlu0 %5269
      %5271 = vrot.lane.b32.xlu0 %v5268, 55
      %v5272 = vpop.permute.xlu0 %5271
      %v5273 = vrot.slane %v5270, 4
      %v5274 = vrot.slane %v5272, 4
      %v5275 = vsel %vm306, %v5273, %v5270
      %v5276 = vsel %vm345, %v5273, %v5274
      %v5277 = vsel %vm306, %v5276, %v5272
      %v5281 = vmul.bf16 %v5216, %v5275
      %v5282 = vmul.bf16 %v5217, %v5277
      %v5283 = vmul.bf16 %v5218, %v5274
      %5287 = vrot.lane.b32.xlu0 %v5281, 73
      %v5288 = vpop.permute.xlu0 %5287
      %5289 = vrot.lane.b32.xlu0 %v5282, 73
      %v5290 = vpop.permute.xlu0 %5289
      %5291 = vrot.lane.b32.xlu0 %v5283, 73
      %v5292 = vpop.permute.xlu0 %5291
      %v5293 = vrot.slane %v5288, 4
      %v5294 = vrot.slane %v5290, 4
      %v5295 = vrot.slane %v5292, 4
      %v5296 = vsel %vm345, %v5293, %v5294
      %v5297 = vsel %vm347, %v5288, %v5296
      %v5298 = vsel %vm345, %v5294, %v5295
      %v5299 = vsel %vm347, %v5290, %v5298
      %5302 = vst [vmem:[#allocation2 + $0x120] sm:$0xff] %v5297
      %5303 = vst [vmem:[#allocation2 + $0x128] sm:$0xff] %v5299
      %v5304 = vld [vmem:[#allocation4 + $0x4] sm:$0xff]
      %v5305 = vld [vmem:[#allocation4 + $0xc] sm:$0xff]
      %v5306 = vld [vmem:[#allocation4 + $0x14] sm:$0xf]
      %v5307 = vld [vmem:[%s0 + $0x20] sm:$0x22]
      %v5308 = vld [vmem:[%s0 + $0x28] sm:$0x22]
      %v5311 = vunpack.c.l.b16 %v5307
      %v5312 = vunpack.c.h.b16 %v5307
      %v5313 = vunpack.c.l.b16 %v5308
      %v5314 = vunpack.c.h.b16 %v5308
      %v5315 = vpack.c.b16 %v5311, %v5311
      %v5316 = vpack.c.b16 %v5312, %v5312
      %v5317 = vpack.c.b16 %v5313, %v5313
      %v5318 = vpack.c.b16 %v5314, %v5314
      %v5320 = vshrl.u32 %v5315, 16
      %v5321 = vpack.i.b16 %v5320, %v5320
      %v5323 = vlaneseq
      %v5324 = vshrl.u32 %v5323, 7
      %v5325 = vsub.s32 1, %v5324
      %v5326 = vrot.slane %v5321, %v5325
      %v5328 = vshrl.u32 %v5316, 16
      %v5329 = vpack.i.b16 %v5328, %v5328
      %v5331 = vlaneseq
      %v5332 = vshrl.u32 %v5331, 7
      %v5333 = vsub.s32 1, %v5332
      %v5334 = vrot.slane %v5329, %v5333
      %v5336 = vshrl.u32 %v5317, 16
      %v5337 = vpack.i.b16 %v5336, %v5336
      %v5339 = vlaneseq
      %v5340 = vshrl.u32 %v5339, 7
      %v5341 = vsub.s32 1, %v5340
      %v5342 = vrot.slane %v5337, %v5341
      %v5344 = vshrl.u32 %v5318, 16
      %v5345 = vpack.i.b16 %v5344, %v5344
      %v5347 = vlaneseq
      %v5348 = vshrl.u32 %v5347, 7
      %v5349 = vsub.s32 1, %v5348
      %v5350 = vrot.slane %v5345, %v5349
      %v5355 = vunpack.c.l.b16 %v5326
      %v5356 = vunpack.c.l.b16 %v5334
      %v5357 = vunpack.c.l.b16 %v5342
      %v5358 = vunpack.c.l.b16 %v5350
      %v5359 = vpack.c.b16 %v5356, %v5355
      %v5360 = vpack.c.b16 %v5358, %v5357
      %5361 = vrot.lane.b32.xlu0 %v5359, 56
      %v5362 = vpop.permute.xlu0 %5361
      %5363 = vrot.lane.b32.xlu0 %v5360, 56
      %v5364 = vpop.permute.xlu0 %5363
      %v5365 = vrot.slane %v5362, 4
      %v5366 = vrot.slane %v5364, 4
      %v5367 = vsel %vm425, %v5365, %v5362
      %v5368 = vsel %vm345, %v5365, %v5366
      %v5369 = vsel %vm425, %v5368, %v5364
      %v5373 = vmul.bf16 %v5304, %v5367
      %v5374 = vmul.bf16 %v5305, %v5369
      %v5375 = vmul.bf16 %v5306, %v5366
      %5379 = vrot.lane.b32.xlu0 %v5373, 72
      %v5380 = vpop.permute.xlu0 %5379
      %5381 = vrot.lane.b32.xlu0 %v5374, 72
      %v5382 = vpop.permute.xlu0 %5381
      %5383 = vrot.lane.b32.xlu0 %v5375, 72
      %v5384 = vpop.permute.xlu0 %5383
      %v5385 = vrot.slane %v5380, 4
      %v5386 = vrot.slane %v5382, 4
      %v5387 = vrot.slane %v5384, 4
      %v5388 = vsel %vm345, %v5385, %v5386
      %v5389 = vsel %vm466, %v5380, %v5388
      %v5390 = vsel %vm345, %v5386, %v5387
      %v5391 = vsel %vm466, %v5382, %v5390
      %5394 = vst [vmem:[#allocation2 + $0x130] sm:$0xff] %v5389
      %5395 = vst [vmem:[#allocation2 + $0x138] sm:$0xff] %v5391
      %v5396 = vld [vmem:[#allocation4 + $0x4] sm:$0xff]
      %v5397 = vld [vmem:[#allocation4 + $0xc] sm:$0xff]
      %v5398 = vld [vmem:[#allocation4 + $0x14] sm:$0xf]
      %v5399 = vld [vmem:[%s0 + $0x20] sm:$0x44]
      %v5400 = vld [vmem:[%s0 + $0x28] sm:$0x44]
      %v5403 = vunpack.c.l.b16 %v5399
      %v5404 = vunpack.c.h.b16 %v5399
      %v5405 = vunpack.c.l.b16 %v5400
      %v5406 = vunpack.c.h.b16 %v5400
      %v5407 = vpack.c.b16 %v5403, %v5403
      %v5408 = vpack.c.b16 %v5404, %v5404
      %v5409 = vpack.c.b16 %v5405, %v5405
      %v5410 = vpack.c.b16 %v5406, %v5406
      %v5412 = vpack.i.b16 %v5407, %v5407
      %v5414 = vlaneseq
      %v5415 = vshrl.u32 %v5414, 7
      %v5416 = vsub.s32 2, %v5415
      %v5417 = vrot.slane %v5412, %v5416
      %v5419 = vpack.i.b16 %v5408, %v5408
      %v5421 = vlaneseq
      %v5422 = vshrl.u32 %v5421, 7
      %v5423 = vsub.s32 2, %v5422
      %v5424 = vrot.slane %v5419, %v5423
      %v5426 = vpack.i.b16 %v5409, %v5409
      %v5428 = vlaneseq
      %v5429 = vshrl.u32 %v5428, 7
      %v5430 = vsub.s32 2, %v5429
      %v5431 = vrot.slane %v5426, %v5430
      %v5433 = vpack.i.b16 %v5410, %v5410
      %v5435 = vlaneseq
      %v5436 = vshrl.u32 %v5435, 7
      %v5437 = vsub.s32 2, %v5436
      %v5438 = vrot.slane %v5433, %v5437
      %v5443 = vunpack.c.l.b16 %v5417
      %v5444 = vunpack.c.l.b16 %v5424
      %v5445 = vunpack.c.l.b16 %v5431
      %v5446 = vunpack.c.l.b16 %v5438
      %v5447 = vpack.c.b16 %v5444, %v5443
      %v5448 = vpack.c.b16 %v5446, %v5445
      %5449 = vrot.lane.b32.xlu0 %v5447, 57
      %v5450 = vpop.permute.xlu0 %5449
      %5451 = vrot.lane.b32.xlu0 %v5448, 57
      %v5452 = vpop.permute.xlu0 %5451
      %v5453 = vrot.slane %v5450, 4
      %v5454 = vrot.slane %v5452, 4
      %v5455 = vsel %vm540, %v5453, %v5450
      %v5456 = vsel %vm345, %v5453, %v5454
      %v5457 = vsel %vm540, %v5456, %v5452
      %v5461 = vmul.bf16 %v5396, %v5455
      %v5462 = vmul.bf16 %v5397, %v5457
      %v5463 = vmul.bf16 %v5398, %v5454
      %5467 = vrot.lane.b32.xlu0 %v5461, 71
      %v5468 = vpop.permute.xlu0 %5467
      %5469 = vrot.lane.b32.xlu0 %v5462, 71
      %v5470 = vpop.permute.xlu0 %5469
      %5471 = vrot.lane.b32.xlu0 %v5463, 71
      %v5472 = vpop.permute.xlu0 %5471
      %v5473 = vrot.slane %v5468, 4
      %v5474 = vrot.slane %v5470, 4
      %v5475 = vrot.slane %v5472, 4
      %v5476 = vsel %vm345, %v5473, %v5474
      %v5477 = vsel %vm580, %v5468, %v5476
      %v5478 = vsel %vm345, %v5474, %v5475
      %v5479 = vsel %vm580, %v5470, %v5478
      %5482 = vst [vmem:[#allocation2 + $0x140] sm:$0xff] %v5477
      %5483 = vst [vmem:[#allocation2 + $0x148] sm:$0xff] %v5479
      %v5484 = vld [vmem:[#allocation4 + $0x4] sm:$0xff]
      %v5485 = vld [vmem:[#allocation4 + $0xc] sm:$0xff]
      %v5486 = vld [vmem:[#allocation4 + $0x14] sm:$0xf]
      %v5487 = vld [vmem:[%s0 + $0x20] sm:$0x44]
      %v5488 = vld [vmem:[%s0 + $0x28] sm:$0x44]
      %v5491 = vunpack.c.l.b16 %v5487
      %v5492 = vunpack.c.h.b16 %v5487
      %v5493 = vunpack.c.l.b16 %v5488
      %v5494 = vunpack.c.h.b16 %v5488
      %v5495 = vpack.c.b16 %v5491, %v5491
      %v5496 = vpack.c.b16 %v5492, %v5492
      %v5497 = vpack.c.b16 %v5493, %v5493
      %v5498 = vpack.c.b16 %v5494, %v5494
      %v5500 = vshrl.u32 %v5495, 16
      %v5501 = vpack.i.b16 %v5500, %v5500
      %v5503 = vlaneseq
      %v5504 = vshrl.u32 %v5503, 7
      %v5505 = vsub.s32 2, %v5504
      %v5506 = vrot.slane %v5501, %v5505
      %v5508 = vshrl.u32 %v5496, 16
      %v5509 = vpack.i.b16 %v5508, %v5508
      %v5511 = vlaneseq
      %v5512 = vshrl.u32 %v5511, 7
      %v5513 = vsub.s32 2, %v5512
      %v5514 = vrot.slane %v5509, %v5513
      %v5516 = vshrl.u32 %v5497, 16
      %v5517 = vpack.i.b16 %v5516, %v5516
      %v5519 = vlaneseq
      %v5520 = vshrl.u32 %v5519, 7
      %v5521 = vsub.s32 2, %v5520
      %v5522 = vrot.slane %v5517, %v5521
      %v5524 = vshrl.u32 %v5498, 16
      %v5525 = vpack.i.b16 %v5524, %v5524
      %v5527 = vlaneseq
      %v5528 = vshrl.u32 %v5527, 7
      %v5529 = vsub.s32 2, %v5528
      %v5530 = vrot.slane %v5525, %v5529
      %v5535 = vunpack.c.l.b16 %v5506
      %v5536 = vunpack.c.l.b16 %v5514
      %v5537 = vunpack.c.l.b16 %v5522
      %v5538 = vunpack.c.l.b16 %v5530
      %v5539 = vpack.c.b16 %v5536, %v5535
      %v5540 = vpack.c.b16 %v5538, %v5537
      %5541 = vrot.lane.b32.xlu0 %v5539, 63
      %v5542 = vpop.permute.xlu0 %5541
      %5543 = vrot.lane.b32.xlu0 %v5540, 63
      %v5544 = vpop.permute.xlu0 %5543
      %v5545 = vrot.slane %v5542, 4
      %v5546 = vrot.slane %v5544, 4
      %v5547 = vsel %vm658, %v5545, %v5542
      %v5548 = vsel %vm345, %v5545, %v5546
      %v5549 = vsel %vm658, %v5548, %v5544
      %v5553 = vmul.bf16 %v5484, %v5547
      %v5554 = vmul.bf16 %v5485, %v5549
      %v5555 = vmul.bf16 %v5486, %v5546
      %5559 = vrot.lane.b32.xlu0 %v5553, 65
      %v5560 = vpop.permute.xlu0 %5559
      %5561 = vrot.lane.b32.xlu0 %v5554, 65
      %v5562 = vpop.permute.xlu0 %5561
      %5563 = vrot.lane.b32.xlu0 %v5555, 65
      %v5564 = vpop.permute.xlu0 %5563
      %v5565 = vrot.slane %v5560, 4
      %v5566 = vrot.slane %v5562, 4
      %v5567 = vrot.slane %v5564, 4
      %v5568 = vsel %vm345, %v5565, %v5566
      %v5569 = vsel %vm699, %v5560, %v5568
      %v5570 = vsel %vm345, %v5566, %v5567
      %v5571 = vsel %vm699, %v5562, %v5570
      %5574 = vst [vmem:[#allocation2 + $0x150] sm:$0xff] %v5569
      %5575 = vst [vmem:[#allocation2 + $0x158] sm:$0xff] %v5571
      %v5576 = vld [vmem:[#allocation4 + $0x4] sm:$0xff]
      %v5577 = vld [vmem:[#allocation4 + $0xc] sm:$0xff]
      %v5578 = vld [vmem:[#allocation4 + $0x14] sm:$0xf]
      %v5579 = vld [vmem:[%s0 + $0x20] sm:$0x88]
      %v5580 = vld [vmem:[%s0 + $0x28] sm:$0x88]
      %v5583 = vunpack.c.l.b16 %v5579
      %v5584 = vunpack.c.h.b16 %v5579
      %v5585 = vunpack.c.l.b16 %v5580
      %v5586 = vunpack.c.h.b16 %v5580
      %v5587 = vpack.c.b16 %v5583, %v5583
      %v5588 = vpack.c.b16 %v5584, %v5584
      %v5589 = vpack.c.b16 %v5585, %v5585
      %v5590 = vpack.c.b16 %v5586, %v5586
      %v5592 = vpack.i.b16 %v5587, %v5587
      %v5594 = vlaneseq
      %v5595 = vshrl.u32 %v5594, 7
      %v5596 = vsub.s32 3, %v5595
      %v5597 = vrot.slane %v5592, %v5596
      %v5599 = vpack.i.b16 %v5588, %v5588
      %v5601 = vlaneseq
      %v5602 = vshrl.u32 %v5601, 7
      %v5603 = vsub.s32 3, %v5602
      %v5604 = vrot.slane %v5599, %v5603
      %v5606 = vpack.i.b16 %v5589, %v5589
      %v5608 = vlaneseq
      %v5609 = vshrl.u32 %v5608, 7
      %v5610 = vsub.s32 3, %v5609
      %v5611 = vrot.slane %v5606, %v5610
      %v5613 = vpack.i.b16 %v5590, %v5590
      %v5615 = vlaneseq
      %v5616 = vshrl.u32 %v5615, 7
      %v5617 = vsub.s32 3, %v5616
      %v5618 = vrot.slane %v5613, %v5617
      %v5623 = vunpack.c.l.b16 %v5597
      %v5624 = vunpack.c.l.b16 %v5604
      %v5625 = vunpack.c.l.b16 %v5611
      %v5626 = vunpack.c.l.b16 %v5618
      %v5627 = vpack.c.b16 %v5624, %v5623
      %v5628 = vpack.c.b16 %v5626, %v5625
      %5629 = vrot.lane.b32.xlu0 %v5627, 64
      %v5630 = vpop.permute.xlu0 %5629
      %5631 = vrot.lane.b32.xlu0 %v5628, 64
      %v5632 = vpop.permute.xlu0 %5631
      %v5633 = vrot.slane %v5630, 4
      %v5634 = vrot.slane %v5632, 4
      %v5635 = vsel %vm773, %v5633, %v5630
      %v5636 = vsel %vm345, %v5633, %v5634
      %v5637 = vsel %vm773, %v5636, %v5632
      %v5641 = vmul.bf16 %v5576, %v5635
      %v5642 = vmul.bf16 %v5577, %v5637
      %v5643 = vmul.bf16 %v5578, %v5634
      %5647 = vrot.lane.b32.xlu0 %v5641, 64
      %v5648 = vpop.permute.xlu0 %5647
      %5649 = vrot.lane.b32.xlu0 %v5642, 64
      %v5650 = vpop.permute.xlu0 %5649
      %5651 = vrot.lane.b32.xlu0 %v5643, 64
      %v5652 = vpop.permute.xlu0 %5651
      %v5653 = vrot.slane %v5648, 4
      %v5654 = vrot.slane %v5650, 4
      %v5655 = vrot.slane %v5652, 4
      %v5656 = vsel %vm345, %v5653, %v5654
      %v5657 = vsel %vm773, %v5648, %v5656
      %v5658 = vsel %vm345, %v5654, %v5655
      %v5659 = vsel %vm773, %v5650, %v5658
      %5662 = vst [vmem:[#allocation2 + $0x160] sm:$0xff] %v5657
      %5663 = vst [vmem:[#allocation2 + $0x168] sm:$0xff] %v5659
      %v5664 = vld [vmem:[#allocation4 + $0x4] sm:$0xff]
      %v5665 = vld [vmem:[#allocation4 + $0xc] sm:$0xff]
      %v5666 = vld [vmem:[#allocation4 + $0x14] sm:$0xf]
      %v5667 = vld [vmem:[%s0 + $0x20] sm:$0x88]
      %v5668 = vld [vmem:[%s0 + $0x28] sm:$0x88]
      %v5671 = vunpack.c.l.b16 %v5667
      %v5672 = vunpack.c.h.b16 %v5667
      %v5673 = vunpack.c.l.b16 %v5668
      %v5674 = vunpack.c.h.b16 %v5668
      %v5675 = vpack.c.b16 %v5671, %v5671
      %v5676 = vpack.c.b16 %v5672, %v5672
      %v5677 = vpack.c.b16 %v5673, %v5673
      %v5678 = vpack.c.b16 %v5674, %v5674
      %v5680 = vshrl.u32 %v5675, 16
      %v5681 = vpack.i.b16 %v5680, %v5680
      %v5683 = vlaneseq
      %v5684 = vshrl.u32 %v5683, 7
      %v5685 = vsub.s32 3, %v5684
      %v5686 = vrot.slane %v5681, %v5685
      %v5688 = vshrl.u32 %v5676, 16
      %v5689 = vpack.i.b16 %v5688, %v5688
      %v5691 = vlaneseq
      %v5692 = vshrl.u32 %v5691, 7
      %v5693 = vsub.s32 3, %v5692
      %v5694 = vrot.slane %v5689, %v5693
      %v5696 = vshrl.u32 %v5677, 16
      %v5697 = vpack.i.b16 %v5696, %v5696
      %v5699 = vlaneseq
      %v5700 = vshrl.u32 %v5699, 7
      %v5701 = vsub.s32 3, %v5700
      %v5702 = vrot.slane %v5697, %v5701
      %v5704 = vshrl.u32 %v5678, 16
      %v5705 = vpack.i.b16 %v5704, %v5704
      %v5707 = vlaneseq
      %v5708 = vshrl.u32 %v5707, 7
      %v5709 = vsub.s32 3, %v5708
      %v5710 = vrot.slane %v5705, %v5709
      %v5715 = vunpack.c.l.b16 %v5686
      %v5716 = vunpack.c.l.b16 %v5694
      %v5717 = vunpack.c.l.b16 %v5702
      %v5718 = vunpack.c.l.b16 %v5710
      %v5719 = vpack.c.b16 %v5716, %v5715
      %v5720 = vpack.c.b16 %v5718, %v5717
      %5721 = vrot.lane.b32.xlu0 %v5719, 65
      %v5722 = vpop.permute.xlu0 %5721
      %5723 = vrot.lane.b32.xlu0 %v5720, 65
      %v5724 = vpop.permute.xlu0 %5723
      %v5725 = vrot.slane %v5722, 4
      %v5726 = vrot.slane %v5724, 4
      %v5727 = vsel %vm699, %v5725, %v5722
      %v5728 = vsel %vm345, %v5725, %v5726
      %v5729 = vsel %vm699, %v5728, %v5724
      %v5733 = vmul.bf16 %v5664, %v5727
      %v5734 = vmul.bf16 %v5665, %v5729
      %v5735 = vmul.bf16 %v5666, %v5726
      %5739 = vrot.lane.b32.xlu0 %v5733, 63
      %v5740 = vpop.permute.xlu0 %5739
      %5741 = vrot.lane.b32.xlu0 %v5734, 63
      %v5742 = vpop.permute.xlu0 %5741
      %5743 = vrot.lane.b32.xlu0 %v5735, 63
      %v5744 = vpop.permute.xlu0 %5743
      %v5745 = vrot.slane %v5740, 4
      %v5746 = vrot.slane %v5742, 4
      %v5747 = vrot.slane %v5744, 4
      %v5748 = vsel %vm345, %v5745, %v5746
      %v5749 = vsel %vm658, %v5740, %v5748
      %v5750 = vsel %vm345, %v5746, %v5747
      %v5751 = vsel %vm658, %v5742, %v5750
      %5754 = vst [vmem:[#allocation2 + $0x170] sm:$0xff] %v5749
      %5755 = vst [vmem:[#allocation2 + $0x178] sm:$0xff] %v5751
      %v5756 = vld [vmem:[#allocation4 + $0x4] sm:$0xff]
      %v5757 = vld [vmem:[#allocation4 + $0xc] sm:$0xff]
      %v5758 = vld [vmem:[#allocation4 + $0x14] sm:$0xf]
      %v5759 = vld [vmem:[%s0 + $0x30] sm:$0x11]
      %v5760 = vld [vmem:[%s0 + $0x38] sm:$0x11]
      %v5763 = vunpack.c.l.b16 %v5759
      %v5764 = vunpack.c.h.b16 %v5759
      %v5765 = vunpack.c.l.b16 %v5760
      %v5766 = vunpack.c.h.b16 %v5760
      %v5767 = vpack.c.b16 %v5763, %v5763
      %v5768 = vpack.c.b16 %v5764, %v5764
      %v5769 = vpack.c.b16 %v5765, %v5765
      %v5770 = vpack.c.b16 %v5766, %v5766
      %v5772 = vpack.i.b16 %v5767, %v5767
      %v5774 = vlaneseq
      %v5775 = vshrl.u32 %v5774, 7
      %v5776 = vsub.s32 0, %v5775
      %v5777 = vrot.slane %v5772, %v5776
      %v5779 = vpack.i.b16 %v5768, %v5768
      %v5781 = vlaneseq
      %v5782 = vshrl.u32 %v5781, 7
      %v5783 = vsub.s32 0, %v5782
      %v5784 = vrot.slane %v5779, %v5783
      %v5786 = vpack.i.b16 %v5769, %v5769
      %v5788 = vlaneseq
      %v5789 = vshrl.u32 %v5788, 7
      %v5790 = vsub.s32 0, %v5789
      %v5791 = vrot.slane %v5786, %v5790
      %v5793 = vpack.i.b16 %v5770, %v5770
      %v5795 = vlaneseq
      %v5796 = vshrl.u32 %v5795, 7
      %v5797 = vsub.s32 0, %v5796
      %v5798 = vrot.slane %v5793, %v5797
      %v5803 = vunpack.c.l.b16 %v5777
      %v5804 = vunpack.c.l.b16 %v5784
      %v5805 = vunpack.c.l.b16 %v5791
      %v5806 = vunpack.c.l.b16 %v5798
      %v5807 = vpack.c.b16 %v5804, %v5803
      %v5808 = vpack.c.b16 %v5806, %v5805
      %5809 = vrot.lane.b32.xlu0 %v5807, 71
      %v5810 = vpop.permute.xlu0 %5809
      %5811 = vrot.lane.b32.xlu0 %v5808, 71
      %v5812 = vpop.permute.xlu0 %5811
      %v5813 = vrot.slane %v5810, 4
      %v5814 = vrot.slane %v5812, 4
      %v5815 = vsel %vm580, %v5813, %v5810
      %v5816 = vsel %vm345, %v5813, %v5814
      %v5817 = vsel %vm580, %v5816, %v5812
      %v5821 = vmul.bf16 %v5756, %v5815
      %v5822 = vmul.bf16 %v5757, %v5817
      %v5823 = vmul.bf16 %v5758, %v5814
      %5827 = vrot.lane.b32.xlu0 %v5821, 57
      %v5828 = vpop.permute.xlu0 %5827
      %5829 = vrot.lane.b32.xlu0 %v5822, 57
      %v5830 = vpop.permute.xlu0 %5829
      %5831 = vrot.lane.b32.xlu0 %v5823, 57
      %v5832 = vpop.permute.xlu0 %5831
      %v5833 = vrot.slane %v5828, 4
      %v5834 = vrot.slane %v5830, 4
      %v5835 = vrot.slane %v5832, 4
      %v5836 = vsel %vm345, %v5833, %v5834
      %v5837 = vsel %vm540, %v5828, %v5836
      %v5838 = vsel %vm345, %v5834, %v5835
      %v5839 = vsel %vm540, %v5830, %v5838
      %5842 = vst [vmem:[#allocation2 + $0x180] sm:$0xff] %v5837
      %5843 = vst [vmem:[#allocation2 + $0x188] sm:$0xff] %v5839
      %v5844 = vld [vmem:[#allocation4 + $0x4] sm:$0xff]
      %v5845 = vld [vmem:[#allocation4 + $0xc] sm:$0xff]
      %v5846 = vld [vmem:[#allocation4 + $0x14] sm:$0xf]
      %v5847 = vld [vmem:[%s0 + $0x30] sm:$0x11]
      %v5848 = vld [vmem:[%s0 + $0x38] sm:$0x11]
      %v5851 = vunpack.c.l.b16 %v5847
      %v5852 = vunpack.c.h.b16 %v5847
      %v5853 = vunpack.c.l.b16 %v5848
      %v5854 = vunpack.c.h.b16 %v5848
      %v5855 = vpack.c.b16 %v5851, %v5851
      %v5856 = vpack.c.b16 %v5852, %v5852
      %v5857 = vpack.c.b16 %v5853, %v5853
      %v5858 = vpack.c.b16 %v5854, %v5854
      %v5860 = vshrl.u32 %v5855, 16
      %v5861 = vpack.i.b16 %v5860, %v5860
      %v5863 = vlaneseq
      %v5864 = vshrl.u32 %v5863, 7
      %v5865 = vsub.s32 0, %v5864
      %v5866 = vrot.slane %v5861, %v5865
      %v5868 = vshrl.u32 %v5856, 16
      %v5869 = vpack.i.b16 %v5868, %v5868
      %v5871 = vlaneseq
      %v5872 = vshrl.u32 %v5871, 7
      %v5873 = vsub.s32 0, %v5872
      %v5874 = vrot.slane %v5869, %v5873
      %v5876 = vshrl.u32 %v5857, 16
      %v5877 = vpack.i.b16 %v5876, %v5876
      %v5879 = vlaneseq
      %v5880 = vshrl.u32 %v5879, 7
      %v5881 = vsub.s32 0, %v5880
      %v5882 = vrot.slane %v5877, %v5881
      %v5884 = vshrl.u32 %v5858, 16
      %v5885 = vpack.i.b16 %v5884, %v5884
      %v5887 = vlaneseq
      %v5888 = vshrl.u32 %v5887, 7
      %v5889 = vsub.s32 0, %v5888
      %v5890 = vrot.slane %v5885, %v5889
      %v5895 = vunpack.c.l.b16 %v5866
      %v5896 = vunpack.c.l.b16 %v5874
      %v5897 = vunpack.c.l.b16 %v5882
      %v5898 = vunpack.c.l.b16 %v5890
      %v5899 = vpack.c.b16 %v5896, %v5895
      %v5900 = vpack.c.b16 %v5898, %v5897
      %5901 = vrot.lane.b32.xlu0 %v5899, 72
      %v5902 = vpop.permute.xlu0 %5901
      %5903 = vrot.lane.b32.xlu0 %v5900, 72
      %v5904 = vpop.permute.xlu0 %5903
      %v5905 = vrot.slane %v5902, 4
      %v5906 = vrot.slane %v5904, 4
      %v5907 = vsel %vm466, %v5905, %v5902
      %v5908 = vsel %vm345, %v5905, %v5906
      %v5909 = vsel %vm466, %v5908, %v5904
      %v5913 = vmul.bf16 %v5844, %v5907
      %v5914 = vmul.bf16 %v5845, %v5909
      %v5915 = vmul.bf16 %v5846, %v5906
      %5919 = vrot.lane.b32.xlu0 %v5913, 56
      %v5920 = vpop.permute.xlu0 %5919
      %5921 = vrot.lane.b32.xlu0 %v5914, 56
      %v5922 = vpop.permute.xlu0 %5921
      %5923 = vrot.lane.b32.xlu0 %v5915, 56
      %v5924 = vpop.permute.xlu0 %5923
      %v5925 = vrot.slane %v5920, 4
      %v5926 = vrot.slane %v5922, 4
      %v5927 = vrot.slane %v5924, 4
      %v5928 = vsel %vm345, %v5925, %v5926
      %v5929 = vsel %vm425, %v5920, %v5928
      %v5930 = vsel %vm345, %v5926, %v5927
      %v5931 = vsel %vm425, %v5922, %v5930
      %5934 = vst [vmem:[#allocation2 + $0x190] sm:$0xff] %v5929
      %5935 = vst [vmem:[#allocation2 + $0x198] sm:$0xff] %v5931
      %v5936 = vld [vmem:[#allocation4 + $0x4] sm:$0xff]
      %v5937 = vld [vmem:[#allocation4 + $0xc] sm:$0xff]
      %v5938 = vld [vmem:[#allocation4 + $0x14] sm:$0xf]
      %v5939 = vld [vmem:[%s0 + $0x30] sm:$0x22]
      %v5940 = vld [vmem:[%s0 + $0x38] sm:$0x22]
      %v5943 = vunpack.c.l.b16 %v5939
      %v5944 = vunpack.c.h.b16 %v5939
      %v5945 = vunpack.c.l.b16 %v5940
      %v5946 = vunpack.c.h.b16 %v5940
      %v5947 = vpack.c.b16 %v5943, %v5943
      %v5948 = vpack.c.b16 %v5944, %v5944
      %v5949 = vpack.c.b16 %v5945, %v5945
      %v5950 = vpack.c.b16 %v5946, %v5946
      %v5952 = vpack.i.b16 %v5947, %v5947
      %v5954 = vlaneseq
      %v5955 = vshrl.u32 %v5954, 7
      %v5956 = vsub.s32 1, %v5955
      %v5957 = vrot.slane %v5952, %v5956
      %v5959 = vpack.i.b16 %v5948, %v5948
      %v5961 = vlaneseq
      %v5962 = vshrl.u32 %v5961, 7
      %v5963 = vsub.s32 1, %v5962
      %v5964 = vrot.slane %v5959, %v5963
      %v5966 = vpack.i.b16 %v5949, %v5949
      %v5968 = vlaneseq
      %v5969 = vshrl.u32 %v5968, 7
      %v5970 = vsub.s32 1, %v5969
      %v5971 = vrot.slane %v5966, %v5970
      %v5973 = vpack.i.b16 %v5950, %v5950
      %v5975 = vlaneseq
      %v5976 = vshrl.u32 %v5975, 7
      %v5977 = vsub.s32 1, %v5976
      %v5978 = vrot.slane %v5973, %v5977
      %v5983 = vunpack.c.l.b16 %v5957
      %v5984 = vunpack.c.l.b16 %v5964
      %v5985 = vunpack.c.l.b16 %v5971
      %v5986 = vunpack.c.l.b16 %v5978
      %v5987 = vpack.c.b16 %v5984, %v5983
      %v5988 = vpack.c.b16 %v5986, %v5985
      %5989 = vrot.lane.b32.xlu0 %v5987, 73
      %v5990 = vpop.permute.xlu0 %5989
      %5991 = vrot.lane.b32.xlu0 %v5988, 73
      %v5992 = vpop.permute.xlu0 %5991
      %v5993 = vrot.slane %v5990, 4
      %v5994 = vrot.slane %v5992, 4
      %v5995 = vsel %vm347, %v5993, %v5990
      %v5996 = vsel %vm345, %v5993, %v5994
      %v5997 = vsel %vm347, %v5996, %v5992
      %v6001 = vmul.bf16 %v5936, %v5995
      %v6002 = vmul.bf16 %v5937, %v5997
      %v6003 = vmul.bf16 %v5938, %v5994
      %6007 = vrot.lane.b32.xlu0 %v6001, 55
      %v6008 = vpop.permute.xlu0 %6007
      %6009 = vrot.lane.b32.xlu0 %v6002, 55
      %v6010 = vpop.permute.xlu0 %6009
      %6011 = vrot.lane.b32.xlu0 %v6003, 55
      %v6012 = vpop.permute.xlu0 %6011
      %v6013 = vrot.slane %v6008, 4
      %v6014 = vrot.slane %v6010, 4
      %v6015 = vrot.slane %v6012, 4
      %v6016 = vsel %vm345, %v6013, %v6014
      %v6017 = vsel %vm306, %v6008, %v6016
      %v6018 = vsel %vm345, %v6014, %v6015
      %v6019 = vsel %vm306, %v6010, %v6018
      %6022 = vst [vmem:[#allocation2 + $0x1a0] sm:$0xff] %v6017
      %6023 = vst [vmem:[#allocation2 + $0x1a8] sm:$0xff] %v6019
      %v6024 = vld [vmem:[%s3] sm:$0xff]
      %v6025 = vld [vmem:[#allocation2] sm:$0xff]
      %v6026 = vld [vmem:[#allocation2 + $0x8] sm:$0xff]
      %v6027 = vld [vmem:[#allocation2 + $0x10] sm:$0xff]
      %v6028 = vld [vmem:[#allocation2 + $0x18] sm:$0xff]
      %v6029 = vld [vmem:[#allocation2 + $0x20] sm:$0xff]
      %v6030 = vld [vmem:[#allocation2 + $0x28] sm:$0xff]
      %v6031 = vld [vmem:[#allocation2 + $0x30] sm:$0xff]
      %v6032 = vld [vmem:[#allocation2 + $0x38] sm:$0xff]
      %v6033 = vld [vmem:[#allocation2 + $0x40] sm:$0xff]
      %v6034 = vld [vmem:[#allocation2 + $0x48] sm:$0xff]
      %v6035 = vld [vmem:[#allocation2 + $0x50] sm:$0xff]
      %v6036 = vld [vmem:[#allocation2 + $0x58] sm:$0xff]
      %v6037 = vld [vmem:[#allocation2 + $0x60] sm:$0xff]
      %v6038 = vld [vmem:[#allocation2 + $0x68] sm:$0xff]
      %v6039 = vld [vmem:[#allocation2 + $0x70] sm:$0xff]
      %v6040 = vld [vmem:[#allocation2 + $0x78] sm:$0xff]
      %v6041 = vld [vmem:[#allocation2 + $0x80] sm:$0xff]
      %v6042 = vld [vmem:[#allocation2 + $0x88] sm:$0xff]
      %v6043 = vld [vmem:[#allocation2 + $0x90] sm:$0xff]
      %v6044 = vld [vmem:[#allocation2 + $0x98] sm:$0xff]
      %v6045 = vld [vmem:[#allocation2 + $0xa0] sm:$0xff]
      %v6046 = vld [vmem:[#allocation2 + $0xa8] sm:$0xff]
      %v6047 = vld [vmem:[#allocation2 + $0xb0] sm:$0xff]
      %v6048 = vld [vmem:[#allocation2 + $0xb8] sm:$0xff]
      %v6049 = vld [vmem:[#allocation2 + $0xc0] sm:$0xff]
      %v6050 = vld [vmem:[#allocation2 + $0xc8] sm:$0xff]
      %v6051 = vld [vmem:[#allocation2 + $0xd0] sm:$0xff]
      %v6052 = vld [vmem:[#allocation2 + $0xd8] sm:$0xff]
      %v6053 = vld [vmem:[#allocation2 + $0xe0] sm:$0xff]
      %v6054 = vld [vmem:[#allocation2 + $0xe8] sm:$0xff]
      %v6055 = vld [vmem:[#allocation2 + $0xf0] sm:$0xff]
      %v6056 = vld [vmem:[#allocation2 + $0xf8] sm:$0xff]
      %v6057 = vld [vmem:[#allocation2 + $0x100] sm:$0xff]
      %v6058 = vld [vmem:[#allocation2 + $0x108] sm:$0xff]
      %v6059 = vld [vmem:[#allocation2 + $0x110] sm:$0xff]
      %v6060 = vld [vmem:[#allocation2 + $0x118] sm:$0xff]
      %v6061 = vld [vmem:[#allocation2 + $0x120] sm:$0xff]
      %v6062 = vld [vmem:[#allocation2 + $0x128] sm:$0xff]
      %v6063 = vld [vmem:[#allocation2 + $0x130] sm:$0xff]
      %v6064 = vld [vmem:[#allocation2 + $0x138] sm:$0xff]
      %v6065 = vld [vmem:[#allocation2 + $0x140] sm:$0xff]
      %v6066 = vld [vmem:[#allocation2 + $0x148] sm:$0xff]
      %v6067 = vld [vmem:[#allocation2 + $0x150] sm:$0xff]
      %v6068 = vld [vmem:[#allocation2 + $0x158] sm:$0xff]
      %v6069 = vld [vmem:[#allocation2 + $0x160] sm:$0xff]
      %v6070 = vld [vmem:[#allocation2 + $0x168] sm:$0xff]
      %v6071 = vld [vmem:[#allocation2 + $0x170] sm:$0xff]
      %v6072 = vld [vmem:[#allocation2 + $0x178] sm:$0xff]
      %v6073 = vld [vmem:[#allocation2 + $0x180] sm:$0xff]
      %v6074 = vld [vmem:[#allocation2 + $0x188] sm:$0xff]
      %v6075 = vld [vmem:[#allocation2 + $0x190] sm:$0xff]
      %v6076 = vld [vmem:[#allocation2 + $0x198] sm:$0xff]
      %v6077 = vld [vmem:[#allocation2 + $0x1a0] sm:$0xff]
      %v6078 = vld [vmem:[#allocation2 + $0x1a8] sm:$0xff]
      %v6079 = vld [vmem:[#allocation2 + $0x1b0] sm:$0xff]
      %v6080 = vld [vmem:[#allocation2 + $0x1b8] sm:$0xff]
      %v6082 = vunpack.c.l.b16 %v6024
      %v6083 = vunpack.c.h.b16 %v6024
      %v6084 = vpack.c.b16 %v6082, %v6082
      %v6085 = vpack.c.b16 %v6083, %v6083
      %v6143 = vunpack.c.l.b16 %v6025
      %v6144 = vunpack.c.h.b16 %v6025
      %v6145 = vunpack.c.l.b16 %v6026
      %v6146 = vunpack.c.h.b16 %v6026
      %v6147 = vunpack.c.l.b16 %v6027
      %v6148 = vunpack.c.h.b16 %v6027
      %v6149 = vunpack.c.l.b16 %v6028
      %v6150 = vunpack.c.h.b16 %v6028
      %v6151 = vunpack.c.l.b16 %v6029
      %v6152 = vunpack.c.h.b16 %v6029
      %v6153 = vunpack.c.l.b16 %v6030
      %v6154 = vunpack.c.h.b16 %v6030
      %v6155 = vunpack.c.l.b16 %v6031
      %v6156 = vunpack.c.h.b16 %v6031
      %v6157 = vunpack.c.l.b16 %v6032
      %v6158 = vunpack.c.h.b16 %v6032
      %v6159 = vunpack.c.l.b16 %v6033
      %v6160 = vunpack.c.h.b16 %v6033
      %v6161 = vunpack.c.l.b16 %v6034
      %v6162 = vunpack.c.h.b16 %v6034
      %v6163 = vunpack.c.l.b16 %v6035
      %v6164 = vunpack.c.h.b16 %v6035
      %v6165 = vunpack.c.l.b16 %v6036
      %v6166 = vunpack.c.h.b16 %v6036
      %v6167 = vunpack.c.l.b16 %v6037
      %v6168 = vunpack.c.h.b16 %v6037
      %v6169 = vunpack.c.l.b16 %v6038
      %v6170 = vunpack.c.h.b16 %v6038
      %v6171 = vunpack.c.l.b16 %v6039
      %v6172 = vunpack.c.h.b16 %v6039
      %v6173 = vunpack.c.l.b16 %v6040
      %v6174 = vunpack.c.h.b16 %v6040
      %v6175 = vunpack.c.l.b16 %v6041
      %v6176 = vunpack.c.h.b16 %v6041
      %v6177 = vunpack.c.l.b16 %v6042
      %v6178 = vunpack.c.h.b16 %v6042
      %v6179 = vunpack.c.l.b16 %v6043
      %v6180 = vunpack.c.h.b16 %v6043
      %v6181 = vunpack.c.l.b16 %v6044
      %v6182 = vunpack.c.h.b16 %v6044
      %v6183 = vunpack.c.l.b16 %v6045
      %v6184 = vunpack.c.h.b16 %v6045
      %v6185 = vunpack.c.l.b16 %v6046
      %v6186 = vunpack.c.h.b16 %v6046
      %v6187 = vunpack.c.l.b16 %v6047
      %v6188 = vunpack.c.h.b16 %v6047
      %v6189 = vunpack.c.l.b16 %v6048
      %v6190 = vunpack.c.h.b16 %v6048
      %v6191 = vunpack.c.l.b16 %v6049
      %v6192 = vunpack.c.h.b16 %v6049
      %v6193 = vunpack.c.l.b16 %v6050
      %v6194 = vunpack.c.h.b16 %v6050
      %v6195 = vunpack.c.l.b16 %v6051
      %v6196 = vunpack.c.h.b16 %v6051
      %v6197 = vunpack.c.l.b16 %v6052
      %v6198 = vunpack.c.h.b16 %v6052
      %v6199 = vunpack.c.l.b16 %v6053
      %v6200 = vunpack.c.h.b16 %v6053
      %v6201 = vunpack.c.l.b16 %v6054
      %v6202 = vunpack.c.h.b16 %v6054
      %v6203 = vunpack.c.l.b16 %v6055
      %v6204 = vunpack.c.h.b16 %v6055
      %v6205 = vunpack.c.l.b16 %v6056
      %v6206 = vunpack.c.h.b16 %v6056
      %v6207 = vunpack.c.l.b16 %v6057
      %v6208 = vunpack.c.h.b16 %v6057
      %v6209 = vunpack.c.l.b16 %v6058
      %v6210 = vunpack.c.h.b16 %v6058
      %v6211 = vunpack.c.l.b16 %v6059
      %v6212 = vunpack.c.h.b16 %v6059
      %v6213 = vunpack.c.l.b16 %v6060
      %v6214 = vunpack.c.h.b16 %v6060
      %v6215 = vunpack.c.l.b16 %v6061
      %v6216 = vunpack.c.h.b16 %v6061
      %v6217 = vunpack.c.l.b16 %v6062
      %v6218 = vunpack.c.h.b16 %v6062
      %v6219 = vunpack.c.l.b16 %v6063
      %v6220 = vunpack.c.h.b16 %v6063
      %v6221 = vunpack.c.l.b16 %v6064
      %v6222 = vunpack.c.h.b16 %v6064
      %v6223 = vunpack.c.l.b16 %v6065
      %v6224 = vunpack.c.h.b16 %v6065
      %v6225 = vunpack.c.l.b16 %v6066
      %v6226 = vunpack.c.h.b16 %v6066
      %v6227 = vunpack.c.l.b16 %v6067
      %v6228 = vunpack.c.h.b16 %v6067
      %v6229 = vunpack.c.l.b16 %v6068
      %v6230 = vunpack.c.h.b16 %v6068
      %v6231 = vunpack.c.l.b16 %v6069
      %v6232 = vunpack.c.h.b16 %v6069
      %v6233 = vunpack.c.l.b16 %v6070
      %v6234 = vunpack.c.h.b16 %v6070
      %v6235 = vunpack.c.l.b16 %v6071
      %v6236 = vunpack.c.h.b16 %v6071
      %v6237 = vunpack.c.l.b16 %v6072
      %v6238 = vunpack.c.h.b16 %v6072
      %v6239 = vunpack.c.l.b16 %v6073
      %v6240 = vunpack.c.h.b16 %v6073
      %v6241 = vunpack.c.l.b16 %v6074
      %v6242 = vunpack.c.h.b16 %v6074
      %v6243 = vunpack.c.l.b16 %v6075
      %v6244 = vunpack.c.h.b16 %v6075
      %v6245 = vunpack.c.l.b16 %v6076
      %v6246 = vunpack.c.h.b16 %v6076
      %v6247 = vunpack.c.l.b16 %v6077
      %v6248 = vunpack.c.h.b16 %v6077
      %v6249 = vunpack.c.l.b16 %v6078
      %v6250 = vunpack.c.h.b16 %v6078
      %v6251 = vunpack.c.l.b16 %v6079
      %v6252 = vunpack.c.h.b16 %v6079
      %v6253 = vunpack.c.l.b16 %v6080
      %v6254 = vunpack.c.h.b16 %v6080
      %v6255 = vpack.c.b16 %v6147, %v6143
      %v6256 = vpack.c.b16 %v6148, %v6144
      %v6257 = vpack.c.b16 %v6149, %v6145
      %v6258 = vpack.c.b16 %v6150, %v6146
      %v6259 = vpack.c.b16 %v6155, %v6151
      %v6260 = vpack.c.b16 %v6156, %v6152
      %v6261 = vpack.c.b16 %v6157, %v6153
      %v6262 = vpack.c.b16 %v6158, %v6154
      %v6263 = vpack.c.b16 %v6163, %v6159
      %v6264 = vpack.c.b16 %v6164, %v6160
      %v6265 = vpack.c.b16 %v6165, %v6161
      %v6266 = vpack.c.b16 %v6166, %v6162
      %v6267 = vpack.c.b16 %v6171, %v6167
      %v6268 = vpack.c.b16 %v6172, %v6168
      %v6269 = vpack.c.b16 %v6173, %v6169
      %v6270 = vpack.c.b16 %v6174, %v6170
      %v6271 = vpack.c.b16 %v6179, %v6175
      %v6272 = vpack.c.b16 %v6180, %v6176
      %v6273 = vpack.c.b16 %v6181, %v6177
      %v6274 = vpack.c.b16 %v6182, %v6178
      %v6275 = vpack.c.b16 %v6187, %v6183
      %v6276 = vpack.c.b16 %v6188, %v6184
      %v6277 = vpack.c.b16 %v6189, %v6185
      %v6278 = vpack.c.b16 %v6190, %v6186
      %v6279 = vpack.c.b16 %v6195, %v6191
      %v6280 = vpack.c.b16 %v6196, %v6192
      %v6281 = vpack.c.b16 %v6197, %v6193
      %v6282 = vpack.c.b16 %v6198, %v6194
      %v6283 = vpack.c.b16 %v6203, %v6199
      %v6284 = vpack.c.b16 %v6204, %v6200
      %v6285 = vpack.c.b16 %v6205, %v6201
      %v6286 = vpack.c.b16 %v6206, %v6202
      %v6287 = vpack.c.b16 %v6211, %v6207
      %v6288 = vpack.c.b16 %v6212, %v6208
      %v6289 = vpack.c.b16 %v6213, %v6209
      %v6290 = vpack.c.b16 %v6214, %v6210
      %v6291 = vpack.c.b16 %v6219, %v6215
      %v6292 = vpack.c.b16 %v6220, %v6216
      %v6293 = vpack.c.b16 %v6221, %v6217
      %v6294 = vpack.c.b16 %v6222, %v6218
      %v6295 = vpack.c.b16 %v6227, %v6223
      %v6296 = vpack.c.b16 %v6228, %v6224
      %v6297 = vpack.c.b16 %v6229, %v6225
      %v6298 = vpack.c.b16 %v6230, %v6226
      %v6299 = vpack.c.b16 %v6235, %v6231
      %v6300 = vpack.c.b16 %v6236, %v6232
      %v6301 = vpack.c.b16 %v6237, %v6233
      %v6302 = vpack.c.b16 %v6238, %v6234
      %v6303 = vpack.c.b16 %v6243, %v6239
      %v6304 = vpack.c.b16 %v6244, %v6240
      %v6305 = vpack.c.b16 %v6245, %v6241
      %v6306 = vpack.c.b16 %v6246, %v6242
      %v6307 = vpack.c.b16 %v6251, %v6247
      %v6308 = vpack.c.b16 %v6252, %v6248
      %v6309 = vpack.c.b16 %v6253, %v6249
      %v6310 = vpack.c.b16 %v6254, %v6250
      %vm6367 = vcmask 785408
      %v6369 = vsel %vm6367, %v6085, 0
      %6371 = vmatprep.subr.bf16.mxu0 %v6284
      %6372 = vmatpush1.bf16.msra.mxu0 %v6283
      %6373 = vmatprep.subr.bf16.mxu0 %v6280
      %6374 = vmatpush1.bf16.msra.mxu0 %v6279
      %6375 = vmatprep.subr.bf16.mxu0 %v6276
      %6376 = vmatpush1.bf16.msra.mxu0 %v6275
      %6377 = vmatprep.subr.bf16.mxu0 %v6272
      %6378 = vmatpush1.bf16.msra.mxu0 %v6271
      %6379 = vmatprep.subr.bf16.mxu0 %v6268
      %6380 = vmatpush1.bf16.msra.mxu0 %v6267
      %6381 = vmatprep.subr.bf16.mxu0 %v6264
      %6382 = vmatpush1.bf16.msra.mxu0 %v6263
      %6383 = vmatprep.subr.bf16.mxu0 %v6260
      %6384 = vmatpush1.bf16.msra.mxu0 %v6259
      %6385 = vmatprep.subr.bf16.mxu0 %v6256
      %6386 = vmatpush1.bf16.msra.mxu0 %v6255
      %6387 = vmatprep.subr.bf16.mxu0 0
      %6388 = vmatpush2.bf16.msra.mxu0 0
      %6389 = vmatprep.subr.bf16.mxu0 0
      %6390 = vmatpush2.bf16.msra.mxu0 0
      %6391 = vmatprep.subr.bf16.mxu0 %v6308
      %6392 = vmatpush2.bf16.msra.mxu0 %v6307
      %6393 = vmatprep.subr.bf16.mxu0 %v6304
      %6394 = vmatpush2.bf16.msra.mxu0 %v6303
      %6395 = vmatprep.subr.bf16.mxu0 %v6300
      %6396 = vmatpush2.bf16.msra.mxu0 %v6299
      %6397 = vmatprep.subr.bf16.mxu0 %v6296
      %6398 = vmatpush2.bf16.msra.mxu0 %v6295
      %6399 = vmatprep.subr.bf16.mxu0 %v6292
      %6400 = vmatpush2.bf16.msra.mxu0 %v6291
      %6401 = vmatprep.subr.bf16.mxu0 %v6288
      %6402 = vmatpush2.bf16.msra.mxu0 %v6287
      %6403 = vmatprep.mubr.bf16.mxu0 %v6369
      %6404 = vmatmul.mubr.bf16.gmra.mxu0 %v6084
      %v6405 = vpop.f32.mrf.mxu0
      %v6406 = vadd.f32 0.0, %v6405
      %v6407 = vpop.f32.mrf.mxu0
      %v6408 = vadd.f32 0.0, %v6407
      %v6409 = vpop.f32.mrf.mxu0
      %v6410 = vpop.f32.mrf.mxu0
      %6411 = vdwg.mxu0
      %6412 = vmatprep.subr.bf16.mxu0 %v6286
      %6413 = vmatpush1.bf16.msra.mxu0 %v6285
      %6414 = vmatprep.subr.bf16.mxu0 %v6282
      %6415 = vmatpush1.bf16.msra.mxu0 %v6281
      %6416 = vmatprep.subr.bf16.mxu0 %v6278
      %6417 = vmatpush1.bf16.msra.mxu0 %v6277
      %6418 = vmatprep.subr.bf16.mxu0 %v6274
      %6419 = vmatpush1.bf16.msra.mxu0 %v6273
      %6420 = vmatprep.subr.bf16.mxu0 %v6270
      %6421 = vmatpush1.bf16.msra.mxu0 %v6269
      %6422 = vmatprep.subr.bf16.mxu0 %v6266
      %6423 = vmatpush1.bf16.msra.mxu0 %v6265
      %6424 = vmatprep.subr.bf16.mxu0 %v6262
      %6425 = vmatpush1.bf16.msra.mxu0 %v6261
      %6426 = vmatprep.subr.bf16.mxu0 %v6258
      %6427 = vmatpush1.bf16.msra.mxu0 %v6257
      %6428 = vmatprep.subr.bf16.mxu0 0
      %6429 = vmatpush2.bf16.msra.mxu0 0
      %6430 = vmatprep.subr.bf16.mxu0 0
      %6431 = vmatpush2.bf16.msra.mxu0 0
      %6432 = vmatprep.subr.bf16.mxu0 %v6310
      %6433 = vmatpush2.bf16.msra.mxu0 %v6309
      %6434 = vmatprep.subr.bf16.mxu0 %v6306
      %6435 = vmatpush2.bf16.msra.mxu0 %v6305
      %6436 = vmatprep.subr.bf16.mxu0 %v6302
      %6437 = vmatpush2.bf16.msra.mxu0 %v6301
      %6438 = vmatprep.subr.bf16.mxu0 %v6298
      %6439 = vmatpush2.bf16.msra.mxu0 %v6297
      %6440 = vmatprep.subr.bf16.mxu0 %v6294
      %6441 = vmatpush2.bf16.msra.mxu0 %v6293
      %6442 = vmatprep.subr.bf16.mxu0 %v6290
      %6443 = vmatpush2.bf16.msra.mxu0 %v6289
      %6444 = vmatprep.mubr.bf16.mxu0 %v6369
      %6445 = vmatmul.mubr.bf16.gmra.mxu0 %v6084
      %v6446 = vpop.f32.mrf.mxu0
      %v6447 = vadd.f32 0.0, %v6446
      %v6448 = vpop.f32.mrf.mxu0
      %v6449 = vadd.f32 0.0, %v6448
      %v6450 = vpop.f32.mrf.mxu0
      %v6451 = vpop.f32.mrf.mxu0
      %6452 = vdwg.mxu0
      %v6453 = vadd.f32 %v6406, %v6408
      %v6454 = vadd.f32 %v6453, %v6447
      %v6455 = vadd.f32 %v6454, %v6449
      %6456 = vadd.xlane.f32.xlu0 %v6455
      %v6457 = vpop.xlane.xlu0 %6456
      %v6458 = vmul.f32 %v6406, %v6406
      %v6459 = vmul.f32 %v6408, %v6408
      %v6460 = vmul.f32 %v6447, %v6447
      %v6461 = vmul.f32 %v6449, %v6449
      %v6462 = vadd.f32 %v6458, %v6459
      %v6463 = vadd.f32 %v6462, %v6460
      %v6464 = vadd.f32 %v6463, %v6461
      %6465 = vadd.xlane.f32.xlu0 %v6464
      %v6466 = vpop.xlane.xlu0 %6465
      %v6467 = vmul.f32 %v6457, 0.001953125
      %v6468 = vmul.f32 %v6466, 0.001953125
      %v6469 = vmul.f32 %v6467, %v6467
      %v6470 = vsub.f32 %v6468, %v6469
      %v6471 = vmax.f32 %v6470, 0.0
      %v6472 = vsub.f32 %v6406, %v6467
      %v6473 = vsub.f32 %v6408, %v6467
      %v6474 = vsub.f32 %v6447, %v6467
      %v6475 = vsub.f32 %v6449, %v6467
      %v6476 = vadd.f32 %v6471, 1e-05
      %v6477 = vrsqrt.pop %v6476
      %v6478 = vmul.f32 %v6472, %v6477
      %v6479 = vmul.f32 %v6473, %v6477
      %v6480 = vmul.f32 %v6474, %v6477
      %v6481 = vmul.f32 %v6475, %v6477
      %v6482 = vmax.f32 %v6478, 0.0
      %v6483 = vmax.f32 %v6479, 0.0
      %v6484 = vmax.f32 %v6480, 0.0
      %v6485 = vmax.f32 %v6481, 0.0
      %6486 = vst [vmem:[%s197] sm:$0xff] %v6482
      %6487 = vst [vmem:[%s197 + $0x8] sm:$0xff] %v6483
      %6488 = vst [vmem:[%s197 + $0x10] sm:$0xff] %v6484
      %6489 = vst [vmem:[%s197 + $0x18] sm:$0xff] %v6485
      %p6490 = scmp.lt.s32.totalorder %s15, 1
      %s6491 = scalar_select %p6490, %s15, 1
      %s6492 = smul.addr %s6491, 4
      %s6493 = smul.addr %s6492, 8
      %s6494 = scalar_lea.vmem %s4, %s6493
      // Predicated region
      $region37: #{double_conv_block.1} parent=35 // pred_check
        %p6495 = pneg %p122
      $region38: #{double_conv_block.1} parent=35 // pred_check_branch
        %6497 = sbr.rel (%p6495) target = $region40
      $region39: #{double_conv_block.1} parent=35 // pred_region
        _
      $region40: #{double_conv_block.1} parent=35 // pred_fallthru
        _
    $region36: #{double_conv_block.1} parent=5 // pred_fallthru
      _
    %p6498 = scmp.le.s32.totalorder 2, %s10
    // Predicated region
    $region41: #{double_conv_block.1} parent=5 // pred_check
      %p6499 = pneg %p6498
    $region42: #{double_conv_block.1} parent=5 // pred_check_branch
      %6501 = sbr.rel (%p6499) target = $region44
    $region43: #{double_conv_block.1} parent=5 // pred_region
      %s6502 = ssub.s32 %s10, 2
      // Predicated region
      $region45: #{double_conv_block.1} parent=43 // pred_check
        %p6503 = pneg %p128
      $region46: #{double_conv_block.1} parent=43 // pred_check_branch
        %6505 = sbr.rel (%p6503) target = $region48
      $region47: #{double_conv_block.1} parent=43 // pred_region
        %p6506 = scmp.lt.s32.totalorder %s16, 1
        %s6507 = scalar_select %p6506, %s16, 1
        %s6508 = smul.addr %s6507, 4
        %s6509 = smul.addr %s6508, 8
        %s6510 = scalar_lea.vmem %s4, %s6509
      $region48: #{double_conv_block.1} parent=43 // pred_fallthru
        _
    $region44: #{double_conv_block.1} parent=5 // pred_fallthru
      _
  $region6: #{double_conv_block.1} parent=0 // loop_footer
    %s14 = sadd.s32 1, %s10
  $region7: #{double_conv_block.1} parent=0 // loop_footer_branch
    %9 = sbr.rel target = $region3
  $region8: #{double_conv_block.1} parent=0 // loop_exit
    _

</llo_original>
